<compile_context>
chip_gen: v5e
topology: v5e:2x2
jax: 0.10.0
libtpu: 0.0.40
codegen_flags: <defaults>
</compile_context>

<pallas_src>
from functools import partial

import jax
import jax.numpy as jnp
from jax.experimental import pallas as pl
from jax.experimental.pallas import tpu as pltpu


# ----------------------------- Pallas kernel -------------------------------- #
def me_attention_kernel(x_ref, wq_ref, bq_ref, w0_ref, b0_ref, s_ref, st2_ref,
                        w1_ref, b1_ref, wp_ref, bp_ref, o_ref, *, bt, n):
    f32 = jnp.float32
    bf16 = jnp.bfloat16
    m = bt * n

    x = x_ref[...]                                                     # (M, C) bf16

    # query_liner: (M, C) @ (C, 4C) + (1, 4C)   [bf16 in, f32 accumulate]
    q = jnp.dot(x, wq_ref[...], preferred_element_type=f32) + bq_ref[...]

    # linear_0 for all heads at once (block-diagonal bf16 weights): (M, H*k)
    logits = jnp.dot(q.astype(bf16), w0_ref[...],
                     preferred_element_type=f32) + b0_ref[...]

    # softmax over the sequence axis N, per batch element (torch dim=-2 of the
    # (B, H, N, k) view).  Done in f32 on a (Bt, N, H*k) view; no N padding is
    # ever introduced (the block covers the full N), so no masking is needed.
    hk = logits.shape[-1]
    l3 = logits.reshape(bt, n, hk)
    l3 = l3 - jnp.max(l3, axis=1, keepdims=True)
    e3 = jnp.exp(l3)
    inv = pl.reciprocal(jnp.sum(e3, axis=1, keepdims=True), approx=True)
    attn = (e3 * inv).reshape(m, hk)                                   # f32
    attn_bf = attn.astype(bf16)

    # attn = attn / (1e-9 + attn.sum(dim=-1, keepdim=True)), folded into the
    # linear_1 output:  out = (attn @ w1) * recip_per_head + b1.
    gsum = jnp.dot(attn_bf, s_ref[...], preferred_element_type=f32)    # (M, H)
    recip = pl.reciprocal(gsum + 1e-9, approx=True)                    # (M, H) f32

    raw = jnp.dot(attn_bf, w1_ref[...], preferred_element_type=f32)    # (M, 4C)
    scale = jnp.dot(recip, st2_ref[...], preferred_element_type=f32)   # (M, 4C)
    out = raw * scale + b1_ref[...]                                    # (M, 4C) f32

    # proj: (M, 4C) @ (4C, C) + (1, C)
    y = jnp.dot(out.astype(bf16), wp_ref[...],
                preferred_element_type=f32) + bp_ref[...]
    o_ref[...] = y.astype(o_ref.dtype)                                 # (M, C)


# ------------------------------ Wrapper ------------------------------------- #
def _block_diag(m, n_blocks):
    r, c = m.shape
    eye = jnp.eye(n_blocks, dtype=m.dtype)
    return jnp.einsum('ab,rc->arbc', eye, m).reshape(n_blocks * r, n_blocks * c)


def me_attention(x, params, *, num_heads, coef=4, k=64, target_rows=256):
    B, N, C = x.shape
    H = num_heads                      # coef * configs['head'] = 32
    C4 = C * coef
    hd = C4 // H                       # per-head dim
    Hk = H * k

    # Batch tile: largest divisor of B with Bt*N <= ~target_rows and a
    # sublane-aligned row count (fallback: the whole batch in one step).
    bt_cap = max(1, target_rows // max(N, 1))
    candidates = [d for d in range(1, B + 1)
                  if B % d == 0 and d <= bt_cap and (d == B or (d * N) % 8 == 0)]
    Bt = candidates[-1] if candidates else B
    M = Bt * N
    grid = (B // Bt,)

    bf16 = jnp.bfloat16
    f32 = jnp.float32

    # Parameter glue (plain JAX): block-diagonal per-head weights (bf16), tiled
    # f32 biases, indicator matrices for the per-head k-sum + its broadcast.
    wq = params['wq'].astype(bf16)                             # (C, 4C)
    bq = params['bq'].reshape(1, C4).astype(f32)               # (1, 4C)
    w0_bd = _block_diag(params['w0'], H).astype(bf16)          # (4C, H*k)
    b0_bd = jnp.tile(params['b0'], H).reshape(1, Hk).astype(f32)
    w1_bd = _block_diag(params['w1'], H).astype(bf16)          # (H*k, 4C)
    b1_bd = jnp.tile(params['b1'], H).reshape(1, C4).astype(f32)
    wp = params['wp'].astype(bf16)                             # (4C, C)
    bp = params['bp'].reshape(1, C).astype(f32)                # (1, C)
    S = jnp.repeat(jnp.eye(H, dtype=bf16), k, axis=0)          # (H*k, H)  per-head k-sum
    ST2 = jnp.repeat(jnp.eye(H, dtype=f32), hd, axis=1)        # (H, 4C)   broadcast recip

    x2 = x.reshape(B * N, C).astype(bf16)                      # row-collapsed input

    kernel = partial(me_attention_kernel, bt=Bt, n=N)

    y = pl.pallas_call(
        kernel,
        out_shape=jax.ShapeDtypeStruct((B * N, C), x.dtype),
        grid_spec=pltpu.PrefetchScalarGridSpec(
            num_scalar_prefetch=0,
            grid=grid,
            in_specs=[
                pl.BlockSpec((M, C), lambda i: (i, 0)),        # x rows (Bt*N, C)
                pl.BlockSpec((C, C4), lambda i: (0, 0)),       # wq
                pl.BlockSpec((1, C4), lambda i: (0, 0)),       # bq
                pl.BlockSpec((C4, Hk), lambda i: (0, 0)),      # w0 block-diag (bf16)
                pl.BlockSpec((1, Hk), lambda i: (0, 0)),       # b0 tiled
                pl.BlockSpec((Hk, H), lambda i: (0, 0)),       # S  (per-head k-sum)
                pl.BlockSpec((H, C4), lambda i: (0, 0)),       # ST2 (recip broadcast)
                pl.BlockSpec((Hk, C4), lambda i: (0, 0)),      # w1 block-diag (bf16)
                pl.BlockSpec((1, C4), lambda i: (0, 0)),       # b1 tiled
                pl.BlockSpec((C4, C), lambda i: (0, 0)),       # wp
                pl.BlockSpec((1, C), lambda i: (0, 0)),        # bp
            ],
            out_specs=pl.BlockSpec((M, C), lambda i: (i, 0)),  # contiguous (Bt*N, C)
        ),
        compiler_params=pltpu.CompilerParams(
            dimension_semantics=("parallel",)),                # batch-tile axis
    )(x2, wq, bq, w0_bd, b0_bd, S, ST2, w1_bd, b1_bd, wp, bp)

    return y.reshape(B, N, C)


# ------------------------- Pure-JAX reference (f32) -------------------------- #
def me_attention_ref(x, params, *, num_heads, coef=4, k=64):
    B, N, C = x.shape
    H = num_heads
    hd = (C * coef) // H
    q = x @ params['wq'] + params['bq']                       # (B, N, 4C)
    q = q.reshape(B, N, H, hd).transpose(0, 2, 1, 3)          # (B, H, N, hd)
    attn = q @ params['w0'] + params['b0']                    # (B, H, N, k)
    attn = jax.nn.softmax(attn, axis=-2)
    attn = attn / (1e-9 + attn.sum(axis=-1, keepdims=True))
    out = attn @ params['w1'] + params['b1']                  # (B, H, N, hd)
    out = out.transpose(0, 2, 1, 3).reshape(B, N, H * hd)     # (B, N, 4C)
    return out @ params['wp'] + params['bp']                  # (B, N, C)


# --------------------------------- Main -------------------------------------- #
if __name__ == "__main__":
    # configs: head=8, coef=4 -> num_heads=32, k=256//4=64
    HEAD_CFG = 8
    COEF = 4
    NUM_HEADS = COEF * HEAD_CFG        # 32
    K = 256 // COEF                    # 64

    B, N, C = 2, 8, 64                 # dim=C must be divisible by 8 (hd = C//8)
    C4 = C * COEF
    HD = C4 // NUM_HEADS

    key = jax.random.PRNGKey(0)
    keys = jax.random.split(key, 9)
    scale = 0.05
    params = {
        'wq': scale * jax.random.normal(keys[0], (C, C4), jnp.float32),
        'bq': scale * jax.random.normal(keys[1], (C4,), jnp.float32),
        'w0': scale * jax.random.normal(keys[2], (HD, K), jnp.float32),
        'b0': scale * jax.random.normal(keys[3], (K,), jnp.float32),
        'w1': scale * jax.random.normal(keys[4], (K, HD), jnp.float32),
        'b1': scale * jax.random.normal(keys[5], (HD,), jnp.float32),
        'wp': scale * jax.random.normal(keys[6], (C4, C), jnp.float32),
        'bp': scale * jax.random.normal(keys[7], (C,), jnp.float32),
    }
    x = jax.random.normal(keys[8], (B, N, C), jnp.float32)

    y = me_attention(x, params, num_heads=NUM_HEADS, coef=COEF, k=K)
    y = jax.block_until_ready(y)

    y_ref = me_attention_ref(x, params, num_heads=NUM_HEADS, coef=COEF, k=K)
    assert y.shape == (B, N, C)
    # bf16 MXU operands (f32 accumulation) + approx EUP reciprocals => slightly
    # looser tolerance than the pure-f32 reference.
    max_err = jnp.max(jnp.abs(y - y_ref))
    assert jnp.allclose(y, y_ref, rtol=2e-2, atol=2e-2), (
        f"max abs err = {max_err}")

    print("KERNEL_OK")
</pallas_src>

<mosaic_0001>
module attributes {stable_mosaic.version = 11 : i64} {
  func.func @me_attention_kernel(%arg0: i32, %arg1: memref<16x64xbf16, #tpu.memory_space<vmem>>, %arg2: memref<64x256xbf16, #tpu.memory_space<vmem>>, %arg3: memref<1x256xf32, #tpu.memory_space<vmem>>, %arg4: memref<256x2048xbf16, #tpu.memory_space<vmem>>, %arg5: memref<1x2048xf32, #tpu.memory_space<vmem>>, %arg6: memref<2048x32xbf16, #tpu.memory_space<vmem>>, %arg7: memref<32x256xf32, #tpu.memory_space<vmem>>, %arg8: memref<2048x256xbf16, #tpu.memory_space<vmem>>, %arg9: memref<1x256xf32, #tpu.memory_space<vmem>>, %arg10: memref<256x64xbf16, #tpu.memory_space<vmem>>, %arg11: memref<1x64xf32, #tpu.memory_space<vmem>>, %arg12: memref<16x64xf32, #tpu.memory_space<vmem>>) attributes {dimension_semantics = [#tpu.dimension_semantics<parallel>], iteration_bounds = array<i64: 1>, scalar_prefetch = 0 : i64, scratch_operands = 0 : i64, tpu.core_type = #tpu.core_type<tc>, window_params = [{transform_indices = @transform_0, window_bounds = array<i64: 16, 64>}, {pipeline_mode = #tpu.pipeline_mode<synchronous>, transform_indices = @transform_1, window_bounds = array<i64: 64, 256>}, {pipeline_mode = #tpu.pipeline_mode<synchronous>, transform_indices = @transform_2, window_bounds = array<i64: 1, 256>}, {pipeline_mode = #tpu.pipeline_mode<synchronous>, transform_indices = @transform_3, window_bounds = array<i64: 256, 2048>}, {pipeline_mode = #tpu.pipeline_mode<synchronous>, transform_indices = @transform_4, window_bounds = array<i64: 1, 2048>}, {pipeline_mode = #tpu.pipeline_mode<synchronous>, transform_indices = @transform_5, window_bounds = array<i64: 2048, 32>}, {pipeline_mode = #tpu.pipeline_mode<synchronous>, transform_indices = @transform_6, window_bounds = array<i64: 32, 256>}, {pipeline_mode = #tpu.pipeline_mode<synchronous>, transform_indices = @transform_7, window_bounds = array<i64: 2048, 256>}, {pipeline_mode = #tpu.pipeline_mode<synchronous>, transform_indices = @transform_8, window_bounds = array<i64: 1, 256>}, {pipeline_mode = #tpu.pipeline_mode<synchronous>, transform_indices = @transform_9, window_bounds = array<i64: 256, 64>}, {pipeline_mode = #tpu.pipeline_mode<synchronous>, transform_indices = @transform_10, window_bounds = array<i64: 1, 64>}, {transform_indices = @transform_11, window_bounds = array<i64: 16, 64>}]} {
    %c0 = arith.constant 0 : index
    %c0_0 = arith.constant 0 : index
    %0 = vector.load %arg1[%c0, %c0_0] : memref<16x64xbf16, #tpu.memory_space<vmem>>, vector<16x64xbf16>
    %c0_1 = arith.constant 0 : index
    %c0_2 = arith.constant 0 : index
    %1 = vector.load %arg2[%c0_1, %c0_2] : memref<64x256xbf16, #tpu.memory_space<vmem>>, vector<64x256xbf16>
    %cst = arith.constant dense<0.000000e+00> : vector<16x256xf32>
    %2 = tpu.matmul %0, %1, %cst {dimension_numbers = #tpu.dot_dimension_numbers<[1], [0], [0], [1], [0, 0, 1, 1], [], []>} : vector<16x64xbf16>, vector<64x256xbf16>, vector<16x256xf32> -> vector<16x256xf32>
    %c0_3 = arith.constant 0 : index
    %c0_4 = arith.constant 0 : index
    %3 = vector.load %arg3[%c0_3, %c0_4] : memref<1x256xf32, #tpu.memory_space<vmem>>, vector<1x256xf32>
    %4 = vector.broadcast %3 : vector<1x256xf32> to vector<16x256xf32>
    %5 = arith.addf %2, %4 : vector<16x256xf32>
    %6 = arith.truncf %5 : vector<16x256xf32> to vector<16x256xbf16>
    %c0_5 = arith.constant 0 : index
    %c0_6 = arith.constant 0 : index
    %7 = vector.load %arg4[%c0_5, %c0_6] : memref<256x2048xbf16, #tpu.memory_space<vmem>>, vector<256x2048xbf16>
    %cst_7 = arith.constant dense<0.000000e+00> : vector<16x2048xf32>
    %8 = tpu.matmul %6, %7, %cst_7 {dimension_numbers = #tpu.dot_dimension_numbers<[1], [0], [0], [1], [0, 0, 1, 1], [], []>} : vector<16x256xbf16>, vector<256x2048xbf16>, vector<16x2048xf32> -> vector<16x2048xf32>
    %c0_8 = arith.constant 0 : index
    %c0_9 = arith.constant 0 : index
    %9 = vector.load %arg5[%c0_8, %c0_9] : memref<1x2048xf32, #tpu.memory_space<vmem>>, vector<1x2048xf32>
    %10 = vector.broadcast %9 : vector<1x2048xf32> to vector<16x2048xf32>
    %11 = arith.addf %8, %10 : vector<16x2048xf32>
    %12 = vector.shape_cast %11 : vector<16x2048xf32> to vector<2x8x2048xf32>
    %cst_10 = arith.constant dense<0xFF800000> : vector<2x2048xf32>
    %13 = vector.multi_reduction <maximumf>, %12, %cst_10 [1] : vector<2x8x2048xf32> to vector<2x2048xf32>
    %14 = vector.shape_cast %13 : vector<2x2048xf32> to vector<2x1x2048xf32>
    %15 = vector.broadcast %14 : vector<2x1x2048xf32> to vector<2x8x2048xf32>
    %16 = arith.subf %12, %15 : vector<2x8x2048xf32>
    %17 = math.exp %16 : vector<2x8x2048xf32>
    %cst_11 = arith.constant dense<0.000000e+00> : vector<2x2048xf32>
    %18 = vector.multi_reduction <add>, %17, %cst_11 [1] : vector<2x8x2048xf32> to vector<2x2048xf32>
    %19 = vector.shape_cast %18 : vector<2x2048xf32> to vector<2x1x2048xf32>
    %20 = tpu.reciprocal %19 {approx = true} : vector<2x1x2048xf32> -> vector<2x1x2048xf32>
    %21 = vector.broadcast %20 : vector<2x1x2048xf32> to vector<2x8x2048xf32>
    %22 = arith.mulf %17, %21 : vector<2x8x2048xf32>
    %23 = vector.shape_cast %22 : vector<2x8x2048xf32> to vector<16x2048xf32>
    %24 = arith.truncf %23 : vector<16x2048xf32> to vector<16x2048xbf16>
    %c0_12 = arith.constant 0 : index
    %c0_13 = arith.constant 0 : index
    %25 = vector.load %arg6[%c0_12, %c0_13] : memref<2048x32xbf16, #tpu.memory_space<vmem>>, vector<2048x32xbf16>
    %cst_14 = arith.constant dense<0.000000e+00> : vector<16x32xf32>
    %26 = tpu.matmul %24, %25, %cst_14 {dimension_numbers = #tpu.dot_dimension_numbers<[1], [0], [0], [1], [0, 0, 1, 1], [], []>} : vector<16x2048xbf16>, vector<2048x32xbf16>, vector<16x32xf32> -> vector<16x32xf32>
    %cst_15 = arith.constant 9.99999971E-10 : f32
    %27 = vector.broadcast %cst_15 : f32 to vector<16x32xf32>
    %28 = arith.addf %26, %27 : vector<16x32xf32>
    %29 = tpu.reciprocal %28 {approx = true} : vector<16x32xf32> -> vector<16x32xf32>
    %c0_16 = arith.constant 0 : index
    %c0_17 = arith.constant 0 : index
    %30 = vector.load %arg8[%c0_16, %c0_17] : memref<2048x256xbf16, #tpu.memory_space<vmem>>, vector<2048x256xbf16>
    %cst_18 = arith.constant dense<0.000000e+00> : vector<16x256xf32>
    %31 = tpu.matmul %24, %30, %cst_18 {dimension_numbers = #tpu.dot_dimension_numbers<[1], [0], [0], [1], [0, 0, 1, 1], [], []>} : vector<16x2048xbf16>, vector<2048x256xbf16>, vector<16x256xf32> -> vector<16x256xf32>
    %c0_19 = arith.constant 0 : index
    %c0_20 = arith.constant 0 : index
    %32 = vector.load %arg7[%c0_19, %c0_20] : memref<32x256xf32, #tpu.memory_space<vmem>>, vector<32x256xf32>
    %cst_21 = arith.constant dense<0.000000e+00> : vector<16x256xf32>
    %33 = tpu.matmul %29, %32, %cst_21 {dimension_numbers = #tpu.dot_dimension_numbers<[1], [0], [0], [1], [0, 0, 1, 1], [], []>} : vector<16x32xf32>, vector<32x256xf32>, vector<16x256xf32> -> vector<16x256xf32>
    %34 = arith.mulf %31, %33 : vector<16x256xf32>
    %c0_22 = arith.constant 0 : index
    %c0_23 = arith.constant 0 : index
    %35 = vector.load %arg9[%c0_22, %c0_23] : memref<1x256xf32, #tpu.memory_space<vmem>>, vector<1x256xf32>
    %36 = vector.broadcast %35 : vector<1x256xf32> to vector<16x256xf32>
    %37 = arith.addf %34, %36 : vector<16x256xf32>
    %38 = arith.truncf %37 : vector<16x256xf32> to vector<16x256xbf16>
    %c0_24 = arith.constant 0 : index
    %c0_25 = arith.constant 0 : index
    %39 = vector.load %arg10[%c0_24, %c0_25] : memref<256x64xbf16, #tpu.memory_space<vmem>>, vector<256x64xbf16>
    %cst_26 = arith.constant dense<0.000000e+00> : vector<16x64xf32>
    %40 = tpu.matmul %38, %39, %cst_26 {dimension_numbers = #tpu.dot_dimension_numbers<[1], [0], [0], [1], [0, 0, 1, 1], [], []>} : vector<16x256xbf16>, vector<256x64xbf16>, vector<16x64xf32> -> vector<16x64xf32>
    %c0_27 = arith.constant 0 : index
    %c0_28 = arith.constant 0 : index
    %41 = vector.load %arg11[%c0_27, %c0_28] : memref<1x64xf32, #tpu.memory_space<vmem>>, vector<1x64xf32>
    %42 = vector.broadcast %41 : vector<1x64xf32> to vector<16x64xf32>
    %43 = arith.addf %40, %42 : vector<16x64xf32>
    %c0_29 = arith.constant 0 : index
    %c0_30 = arith.constant 0 : index
    %44 = vector.load %arg12[%c0_29, %c0_30] : memref<16x64xf32, #tpu.memory_space<vmem>>, vector<16x64xf32>
    tpu.vector_store %arg12[%c0_29, %c0_30], %43 {strides = array<i32>} : memref<16x64xf32, #tpu.memory_space<vmem>>, vector<16x64xf32>,
    return
  }
  func.func @transform_0(%arg0: i32) -> (i32, i32) {
    %c0_i32 = arith.constant 0 : i32
    %c0_i32_0 = arith.constant 0 : i32
    return %arg0, %c0_i32 : i32, i32
  }
  func.func @transform_1(%arg0: i32) -> (i32, i32) {
    %c0_i32 = arith.constant 0 : i32
    %c0_i32_0 = arith.constant 0 : i32
    %c0_i32_1 = arith.constant 0 : i32
    return %c0_i32, %c0_i32_0 : i32, i32
  }
  func.func @transform_2(%arg0: i32) -> (i32, i32) {
    %c0_i32 = arith.constant 0 : i32
    %c0_i32_0 = arith.constant 0 : i32
    %c0_i32_1 = arith.constant 0 : i32
    return %c0_i32, %c0_i32_0 : i32, i32
  }
  func.func @transform_3(%arg0: i32) -> (i32, i32) {
    %c0_i32 = arith.constant 0 : i32
    %c0_i32_0 = arith.constant 0 : i32
    %c0_i32_1 = arith.constant 0 : i32
    return %c0_i32, %c0_i32_0 : i32, i32
  }
  func.func @transform_4(%arg0: i32) -> (i32, i32) {
    %c0_i32 = arith.constant 0 : i32
    %c0_i32_0 = arith.constant 0 : i32
    %c0_i32_1 = arith.constant 0 : i32
    return %c0_i32, %c0_i32_0 : i32, i32
  }
  func.func @transform_5(%arg0: i32) -> (i32, i32) {
    %c0_i32 = arith.constant 0 : i32
    %c0_i32_0 = arith.constant 0 : i32
    %c0_i32_1 = arith.constant 0 : i32
    return %c0_i32, %c0_i32_0 : i32, i32
  }
  func.func @transform_6(%arg0: i32) -> (i32, i32) {
    %c0_i32 = arith.constant 0 : i32
    %c0_i32_0 = arith.constant 0 : i32
    %c0_i32_1 = arith.constant 0 : i32
    return %c0_i32, %c0_i32_0 : i32, i32
  }
  func.func @transform_7(%arg0: i32) -> (i32, i32) {
    %c0_i32 = arith.constant 0 : i32
    %c0_i32_0 = arith.constant 0 : i32
    %c0_i32_1 = arith.constant 0 : i32
    return %c0_i32, %c0_i32_0 : i32, i32
  }
  func.func @transform_8(%arg0: i32) -> (i32, i32) {
    %c0_i32 = arith.constant 0 : i32
    %c0_i32_0 = arith.constant 0 : i32
    %c0_i32_1 = arith.constant 0 : i32
    return %c0_i32, %c0_i32_0 : i32, i32
  }
  func.func @transform_9(%arg0: i32) -> (i32, i32) {
    %c0_i32 = arith.constant 0 : i32
    %c0_i32_0 = arith.constant 0 : i32
    %c0_i32_1 = arith.constant 0 : i32
    return %c0_i32, %c0_i32_0 : i32, i32
  }
  func.func @transform_10(%arg0: i32) -> (i32, i32) {
    %c0_i32 = arith.constant 0 : i32
    %c0_i32_0 = arith.constant 0 : i32
    %c0_i32_1 = arith.constant 0 : i32
    return %c0_i32, %c0_i32_0 : i32, i32
  }
  func.func @transform_11(%arg0: i32) -> (i32, i32) {
    %c0_i32 = arith.constant 0 : i32
    %c0_i32_0 = arith.constant 0 : i32
    return %arg0, %c0_i32 : i32, i32
  }
}

</mosaic_0001>

<llo_original>
// kernel: tpu_custom_call.1
$region0: #{tpu_custom_call.1}
  #allocation0 [shape = 'u32[]', space=smem, size = 0x4, offset = 0x4, fixed_abs, tag = 'smem constant byte address 0x4 - core index']
  #allocation1 [shape = 'u32[72,128]{1,0:T(1,128)}', space=vmem, size = 0x9000, scoped, tag = 'internal scratch']
  %s0 = inlined_call_operand.vmem [shape: bf16[16,64], index: 0, kind: input, shape index: {}]
  %s1 = inlined_call_operand.vmem [shape: bf16[64,256], index: 1, kind: input, shape index: {}]
  %s2 = inlined_call_operand.vmem [shape: f32[1,256], index: 2, kind: input, shape index: {}]
  %s3 = inlined_call_operand.hbm [shape: bf16[256,2048], index: 3, kind: input, shape index: {}]
  %s4 = inlined_call_operand.vmem [shape: f32[1,2048], index: 4, kind: input, shape index: {}]
  %s5 = inlined_call_operand.vmem [shape: bf16[2048,32], index: 5, kind: input, shape index: {}]
  %s6 = inlined_call_operand.vmem [shape: f32[32,256], index: 6, kind: input, shape index: {}]
  %s7 = inlined_call_operand.hbm [shape: bf16[2048,256], index: 7, kind: input, shape index: {}]
  %s8 = inlined_call_operand.vmem [shape: f32[1,256], index: 8, kind: input, shape index: {}]
  %s9 = inlined_call_operand.vmem [shape: bf16[256,64], index: 9, kind: input, shape index: {}]
  %s10 = inlined_call_operand.vmem [shape: f32[1,64], index: 10, kind: input, shape index: {}]
  %s11 = inlined_call_operand.hbm [shape: f32[16,64], index: 11, kind: output, shape index: {}]
  %s12 = sld [smem:[#allocation0]]
  $region62: #{tpu_custom_call.1} parent=0
    _
  %s14 = ssub.s32 1, %s12
  %s15 = scalar_select 0, %s14, %s12
  $region1: #{tpu_custom_call.1} parent=0
    #allocation2 [shape = 'u8[1048576]{0}', space=vmem, size = 0x100000, scoped, tag = 'input window, operand 3, single buffered']
    #allocation3 [shape = 's32[1]{0}', space=sflag, size = 0x4, scoped, tag = 'scoped memory for tpu_custom_call.1']
    #allocation4 [shape = 's32[1]{0}', space=sflag, size = 0x4, scoped, tag = 'scoped memory for tpu_custom_call.1']
    #allocation5 [shape = 'u8[1048576]{0}', space=vmem, size = 0x100000, scoped, tag = 'input window, operand 7, single buffered']
    #allocation6 [shape = 's32[1]{0}', space=sflag, size = 0x4, scoped, tag = 'scoped memory for tpu_custom_call.1']
    #allocation7 [shape = 'u8[8192]{0}', space=vmem, size = 0x2000, scoped, tag = 'output window, operand 0, single buffered']
    %16 = vsyncpa [#allocation3], 0
    %17 = vsyncpa [#allocation6], 0
    %18 = vsyncpa [#allocation4], 0
    // Predicated region
    $region2: #{tpu_custom_call.1} parent=1 // pred_check
      _
    $region3: #{tpu_custom_call.1} parent=1 // pred_check_branch
      %20 = sbr.rel (0) target = $region5
    $region4: #{tpu_custom_call.1} parent=1 // pred_region
      _
    $region5: #{tpu_custom_call.1} parent=1 // pred_fallthru
      _
    // Predicated region
    $region6: #{tpu_custom_call.1} parent=1 // pred_check
      _
    $region7: #{tpu_custom_call.1} parent=1 // pred_check_branch
      %22 = sbr.rel (0) target = $region9
    $region8: #{tpu_custom_call.1} parent=1 // pred_region
      _
    $region9: #{tpu_custom_call.1} parent=1 // pred_fallthru
      _
    // Predicated region
    $region10: #{tpu_custom_call.1} parent=1 // pred_check
      _
    $region11: #{tpu_custom_call.1} parent=1 // pred_check_branch
      %24 = sbr.rel (0) target = $region13
    $region12: #{tpu_custom_call.1} parent=1 // pred_region
      _
    $region13: #{tpu_custom_call.1} parent=1 // pred_fallthru
      _
    // Predicated region
    $region14: #{tpu_custom_call.1} parent=1 // pred_check
      _
    $region15: #{tpu_custom_call.1} parent=1 // pred_check_branch
      %26 = sbr.rel (0) target = $region17
    $region16: #{tpu_custom_call.1} parent=1 // pred_region
      %28 = vsyncadd [#allocation3], 0
      %s29 = sshll.u32 %s3, 4
      %s30 = int_to_ptr.hbm [resolvable:$true] %s29
      %s31 = sshll.u32 [#allocation2], 4
      %s32 = int_to_ptr.vmem [resolvable:$true] %s31
      %37 = dma.hbm_to_vmem [thread:$0]  %s30, 32768, %s32, [#allocation3], 1024, 1024, 64
    $region17: #{tpu_custom_call.1} parent=1 // pred_fallthru
      _
    // Predicated region
    $region18: #{tpu_custom_call.1} parent=1 // pred_check
      _
    $region19: #{tpu_custom_call.1} parent=1 // pred_check_branch
      %39 = sbr.rel (0) target = $region21
    $region20: #{tpu_custom_call.1} parent=1 // pred_region
      _
    $region21: #{tpu_custom_call.1} parent=1 // pred_fallthru
      _
    // Predicated region
    $region22: #{tpu_custom_call.1} parent=1 // pred_check
      _
    $region23: #{tpu_custom_call.1} parent=1 // pred_check_branch
      %41 = sbr.rel (0) target = $region25
    $region24: #{tpu_custom_call.1} parent=1 // pred_region
      _
    $region25: #{tpu_custom_call.1} parent=1 // pred_fallthru
      _
    // Predicated region
    $region26: #{tpu_custom_call.1} parent=1 // pred_check
      _
    $region27: #{tpu_custom_call.1} parent=1 // pred_check_branch
      %43 = sbr.rel (0) target = $region29
    $region28: #{tpu_custom_call.1} parent=1 // pred_region
      _
    $region29: #{tpu_custom_call.1} parent=1 // pred_fallthru
      _
    // Predicated region
    $region30: #{tpu_custom_call.1} parent=1 // pred_check
      _
    $region31: #{tpu_custom_call.1} parent=1 // pred_check_branch
      %45 = sbr.rel (0) target = $region33
    $region32: #{tpu_custom_call.1} parent=1 // pred_region
      %47 = vsyncadd [#allocation6], 0
      %s48 = sshll.u32 %s7, 4
      %s49 = int_to_ptr.hbm [resolvable:$true] %s48
      %s50 = sshll.u32 [#allocation5], 4
      %s51 = int_to_ptr.vmem [resolvable:$true] %s50
      %56 = dma.hbm_to_vmem [thread:$0]  %s49, 32768, %s51, [#allocation6], 128, 128, 8
    $region33: #{tpu_custom_call.1} parent=1 // pred_fallthru
      _
    // Predicated region
    $region34: #{tpu_custom_call.1} parent=1 // pred_check
      _
    $region35: #{tpu_custom_call.1} parent=1 // pred_check_branch
      %58 = sbr.rel (0) target = $region37
    $region36: #{tpu_custom_call.1} parent=1 // pred_region
      _
    $region37: #{tpu_custom_call.1} parent=1 // pred_fallthru
      _
    // Predicated region
    $region38: #{tpu_custom_call.1} parent=1 // pred_check
      _
    $region39: #{tpu_custom_call.1} parent=1 // pred_check_branch
      %60 = sbr.rel (0) target = $region41
    $region40: #{tpu_custom_call.1} parent=1 // pred_region
      _
    $region41: #{tpu_custom_call.1} parent=1 // pred_fallthru
      _
    // Predicated region
    $region42: #{tpu_custom_call.1} parent=1 // pred_check
      _
    $region43: #{tpu_custom_call.1} parent=1 // pred_check_branch
      %62 = sbr.rel (0) target = $region45
    $region44: #{tpu_custom_call.1} parent=1 // pred_region
      _
    $region45: #{tpu_custom_call.1} parent=1 // pred_fallthru
      _
    // Predicated region
    $region46: #{tpu_custom_call.1} parent=1 // pred_check
      _
    $region47: #{tpu_custom_call.1} parent=1 // pred_check_branch
      %64 = sbr.rel (0) target = $region49
    $region48: #{tpu_custom_call.1} parent=1 // pred_region
      %66 = dma.done [#allocation3], 32768
    $region49: #{tpu_custom_call.1} parent=1 // pred_fallthru
      _
    // Predicated region
    $region50: #{tpu_custom_call.1} parent=1 // pred_check
      _
    $region51: #{tpu_custom_call.1} parent=1 // pred_check_branch
      %68 = sbr.rel (0) target = $region53
    $region52: #{tpu_custom_call.1} parent=1 // pred_region
      %70 = dma.done [#allocation6], 32768
    $region53: #{tpu_custom_call.1} parent=1 // pred_fallthru
      _
    %v72 = vld [vmem:[%s0] sm:$0xf]
    %v73 = vld [vmem:[%s0 + $0x4] sm:$0xf]
    %v74 = vld [vmem:[%s1] sm:$0xff]
    %v75 = vld [vmem:[%s1 + $0x8] sm:$0xff]
    %v76 = vld [vmem:[%s1 + $0x10] sm:$0xff]
    %v77 = vld [vmem:[%s1 + $0x18] sm:$0xff]
    %v78 = vld [vmem:[%s1 + $0x20] sm:$0xff]
    %v79 = vld [vmem:[%s1 + $0x28] sm:$0xff]
    %v80 = vld [vmem:[%s1 + $0x30] sm:$0xff]
    %v81 = vld [vmem:[%s1 + $0x38] sm:$0xff]
    %v82 = vld [vmem:[%s2] sm:$0x3]
    %v84 = vperm.slane %v82, 0
    %v85 = vperm.slane %v82, 1
    %v90 = vunpack.c.l.b16 %v72
    %v91 = vunpack.c.l.b16 %v73
    %v92 = vpack.c.b16 %v91, %v90
    %v101 = vunpack.c.l.b16 %v74
    %v102 = vunpack.c.h.b16 %v74
    %v103 = vunpack.c.l.b16 %v75
    %v104 = vunpack.c.h.b16 %v75
    %v105 = vunpack.c.l.b16 %v76
    %v106 = vunpack.c.h.b16 %v76
    %v107 = vunpack.c.l.b16 %v77
    %v108 = vunpack.c.h.b16 %v77
    %v109 = vunpack.c.l.b16 %v78
    %v110 = vunpack.c.h.b16 %v78
    %v111 = vunpack.c.l.b16 %v79
    %v112 = vunpack.c.h.b16 %v79
    %v113 = vunpack.c.l.b16 %v80
    %v114 = vunpack.c.h.b16 %v80
    %v115 = vunpack.c.l.b16 %v81
    %v116 = vunpack.c.h.b16 %v81
    %v117 = vpack.c.b16 %v103, %v101
    %v118 = vpack.c.b16 %v104, %v102
    %v119 = vpack.c.b16 %v107, %v105
    %v120 = vpack.c.b16 %v108, %v106
    %v121 = vpack.c.b16 %v111, %v109
    %v122 = vpack.c.b16 %v112, %v110
    %v123 = vpack.c.b16 %v115, %v113
    %v124 = vpack.c.b16 %v116, %v114
    %vm133 = vcmask 523264
    %v135 = vsel %vm133, %v92, 0
    %137 = vmatpush.bf16.msra.mxu0 0
    %138 = vmatpush.bf16.msra.mxu0 0
    %139 = vmatpush.bf16.msra.mxu0 0
    %140 = vmatpush.bf16.msra.mxu0 0
    %141 = vmatpush.bf16.msra.mxu0 %v123
    %142 = vmatpush.bf16.msra.mxu0 %v121
    %143 = vmatpush.bf16.msra.mxu0 %v119
    %144 = vmatpush.bf16.msra.mxu0 %v117
    %145 = vmatmul.bf16.gmra.mxu0 %v135
    %v146 = vpop.f32.mrf.mxu0
    %v147 = vadd.f32 %v84, %v146
    %v148 = vpop.f32.mrf.mxu0
    %v149 = vadd.f32 %v84, %v148
    %150 = vdwg.mxu0
    %151 = vmatpush.bf16.msra.mxu0 0
    %152 = vmatpush.bf16.msra.mxu0 0
    %153 = vmatpush.bf16.msra.mxu0 0
    %154 = vmatpush.bf16.msra.mxu0 0
    %155 = vmatpush.bf16.msra.mxu0 %v124
    %156 = vmatpush.bf16.msra.mxu0 %v122
    %157 = vmatpush.bf16.msra.mxu0 %v120
    %158 = vmatpush.bf16.msra.mxu0 %v118
    %159 = vmatmul.bf16.gmra.mxu0 %v135
    %v160 = vpop.f32.mrf.mxu0
    %v161 = vadd.f32 %v85, %v160
    %v162 = vpop.f32.mrf.mxu0
    %v163 = vadd.f32 %v85, %v162
    %164 = vdwg.mxu0
    %v165 = vpack.c.bf16 %v149, %v147
    %v166 = vpack.c.bf16 %v163, %v161
    %v167 = vld [vmem:[#allocation2] sm:$0xff]
    %v168 = vld [vmem:[#allocation2 + $0x8] sm:$0xff]
    %v169 = vld [vmem:[#allocation2 + $0x10] sm:$0xff]
    %v170 = vld [vmem:[#allocation2 + $0x18] sm:$0xff]
    %v171 = vld [vmem:[#allocation2 + $0x20] sm:$0xff]
    %v172 = vld [vmem:[#allocation2 + $0x28] sm:$0xff]
    %v173 = vld [vmem:[#allocation2 + $0x30] sm:$0xff]
    %v174 = vld [vmem:[#allocation2 + $0x38] sm:$0xff]
    %v175 = vld [vmem:[#allocation2 + $0x40] sm:$0xff]
    %v176 = vld [vmem:[#allocation2 + $0x48] sm:$0xff]
    %v177 = vld [vmem:[#allocation2 + $0x50] sm:$0xff]
    %v178 = vld [vmem:[#allocation2 + $0x58] sm:$0xff]
    %v179 = vld [vmem:[#allocation2 + $0x60] sm:$0xff]
    %v180 = vld [vmem:[#allocation2 + $0x68] sm:$0xff]
    %v181 = vld [vmem:[#allocation2 + $0x70] sm:$0xff]
    %v182 = vld [vmem:[#allocation2 + $0x78] sm:$0xff]
    %v183 = vld [vmem:[#allocation2 + $0x80] sm:$0xff]
    %v184 = vld [vmem:[#allocation2 + $0x88] sm:$0xff]
    %v185 = vld [vmem:[#allocation2 + $0x90] sm:$0xff]
    %v186 = vld [vmem:[#allocation2 + $0x98] sm:$0xff]
    %v187 = vld [vmem:[#allocation2 + $0xa0] sm:$0xff]
    %v188 = vld [vmem:[#allocation2 + $0xa8] sm:$0xff]
    %v189 = vld [vmem:[#allocation2 + $0xb0] sm:$0xff]
    %v190 = vld [vmem:[#allocation2 + $0xb8] sm:$0xff]
    %v191 = vld [vmem:[#allocation2 + $0xc0] sm:$0xff]
    %v192 = vld [vmem:[#allocation2 + $0xc8] sm:$0xff]
    %v193 = vld [vmem:[#allocation2 + $0xd0] sm:$0xff]
    %v194 = vld [vmem:[#allocation2 + $0xd8] sm:$0xff]
    %v195 = vld [vmem:[#allocation2 + $0xe0] sm:$0xff]
    %v196 = vld [vmem:[#allocation2 + $0xe8] sm:$0xff]
    %v197 = vld [vmem:[#allocation2 + $0xf0] sm:$0xff]
    %v198 = vld [vmem:[#allocation2 + $0xf8] sm:$0xff]
    %v199 = vld [vmem:[#allocation2 + $0x100] sm:$0xff]
    %v200 = vld [vmem:[#allocation2 + $0x108] sm:$0xff]
    %v201 = vld [vmem:[#allocation2 + $0x110] sm:$0xff]
    %v202 = vld [vmem:[#allocation2 + $0x118] sm:$0xff]
    %v203 = vld [vmem:[#allocation2 + $0x120] sm:$0xff]
    %v204 = vld [vmem:[#allocation2 + $0x128] sm:$0xff]
    %v205 = vld [vmem:[#allocation2 + $0x130] sm:$0xff]
    %v206 = vld [vmem:[#allocation2 + $0x138] sm:$0xff]
    %v207 = vld [vmem:[#allocation2 + $0x140] sm:$0xff]
    %v208 = vld [vmem:[#allocation2 + $0x148] sm:$0xff]
    %v209 = vld [vmem:[#allocation2 + $0x150] sm:$0xff]
    %v210 = vld [vmem:[#allocation2 + $0x158] sm:$0xff]
    %v211 = vld [vmem:[#allocation2 + $0x160] sm:$0xff]
    %v212 = vld [vmem:[#allocation2 + $0x168] sm:$0xff]
    %v213 = vld [vmem:[#allocation2 + $0x170] sm:$0xff]
    %v214 = vld [vmem:[#allocation2 + $0x178] sm:$0xff]
    %v215 = vld [vmem:[#allocation2 + $0x180] sm:$0xff]
    %v216 = vld [vmem:[#allocation2 + $0x188] sm:$0xff]
    %v217 = vld [vmem:[#allocation2 + $0x190] sm:$0xff]
    %v218 = vld [vmem:[#allocation2 + $0x198] sm:$0xff]
    %v219 = vld [vmem:[#allocation2 + $0x1a0] sm:$0xff]
    %v220 = vld [vmem:[#allocation2 + $0x1a8] sm:$0xff]
    %v221 = vld [vmem:[#allocation2 + $0x1b0] sm:$0xff]
    %v222 = vld [vmem:[#allocation2 + $0x1b8] sm:$0xff]
    %v223 = vld [vmem:[#allocation2 + $0x1c0] sm:$0xff]
    %v224 = vld [vmem:[#allocation2 + $0x1c8] sm:$0xff]
    %v225 = vld [vmem:[#allocation2 + $0x1d0] sm:$0xff]
    %v226 = vld [vmem:[#allocation2 + $0x1d8] sm:$0xff]
    %v227 = vld [vmem:[#allocation2 + $0x1e0] sm:$0xff]
    %v228 = vld [vmem:[#allocation2 + $0x1e8] sm:$0xff]
    %v229 = vld [vmem:[#allocation2 + $0x1f0] sm:$0xff]
    %v230 = vld [vmem:[#allocation2 + $0x1f8] sm:$0xff]
    %v231 = vld [vmem:[#allocation2 + $0x200] sm:$0xff]
    %v232 = vld [vmem:[#allocation2 + $0x208] sm:$0xff]
    %v233 = vld [vmem:[#allocation2 + $0x210] sm:$0xff]
    %v234 = vld [vmem:[#allocation2 + $0x218] sm:$0xff]
    %v235 = vld [vmem:[#allocation2 + $0x220] sm:$0xff]
    %v236 = vld [vmem:[#allocation2 + $0x228] sm:$0xff]
    %v237 = vld [vmem:[#allocation2 + $0x230] sm:$0xff]
    %v238 = vld [vmem:[#allocation2 + $0x238] sm:$0xff]
    %v239 = vld [vmem:[#allocation2 + $0x240] sm:$0xff]
    %v240 = vld [vmem:[#allocation2 + $0x248] sm:$0xff]
    %v241 = vld [vmem:[#allocation2 + $0x250] sm:$0xff]
    %v242 = vld [vmem:[#allocation2 + $0x258] sm:$0xff]
    %v243 = vld [vmem:[#allocation2 + $0x260] sm:$0xff]
    %v244 = vld [vmem:[#allocation2 + $0x268] sm:$0xff]
    %v245 = vld [vmem:[#allocation2 + $0x270] sm:$0xff]
    %v246 = vld [vmem:[#allocation2 + $0x278] sm:$0xff]
    %v247 = vld [vmem:[#allocation2 + $0x280] sm:$0xff]
    %v248 = vld [vmem:[#allocation2 + $0x288] sm:$0xff]
    %v249 = vld [vmem:[#allocation2 + $0x290] sm:$0xff]
    %v250 = vld [vmem:[#allocation2 + $0x298] sm:$0xff]
    %v251 = vld [vmem:[#allocation2 + $0x2a0] sm:$0xff]
    %v252 = vld [vmem:[#allocation2 + $0x2a8] sm:$0xff]
    %v253 = vld [vmem:[#allocation2 + $0x2b0] sm:$0xff]
    %v254 = vld [vmem:[#allocation2 + $0x2b8] sm:$0xff]
    %v255 = vld [vmem:[#allocation2 + $0x2c0] sm:$0xff]
    %v256 = vld [vmem:[#allocation2 + $0x2c8] sm:$0xff]
    %v257 = vld [vmem:[#allocation2 + $0x2d0] sm:$0xff]
    %v258 = vld [vmem:[#allocation2 + $0x2d8] sm:$0xff]
    %v259 = vld [vmem:[#allocation2 + $0x2e0] sm:$0xff]
    %v260 = vld [vmem:[#allocation2 + $0x2e8] sm:$0xff]
    %v261 = vld [vmem:[#allocation2 + $0x2f0] sm:$0xff]
    %v262 = vld [vmem:[#allocation2 + $0x2f8] sm:$0xff]
    %v263 = vld [vmem:[#allocation2 + $0x300] sm:$0xff]
    %v264 = vld [vmem:[#allocation2 + $0x308] sm:$0xff]
    %v265 = vld [vmem:[#allocation2 + $0x310] sm:$0xff]
    %v266 = vld [vmem:[#allocation2 + $0x318] sm:$0xff]
    %v267 = vld [vmem:[#allocation2 + $0x320] sm:$0xff]
    %v268 = vld [vmem:[#allocation2 + $0x328] sm:$0xff]
    %v269 = vld [vmem:[#allocation2 + $0x330] sm:$0xff]
    %v270 = vld [vmem:[#allocation2 + $0x338] sm:$0xff]
    %v271 = vld [vmem:[#allocation2 + $0x340] sm:$0xff]
    %v272 = vld [vmem:[#allocation2 + $0x348] sm:$0xff]
    %v273 = vld [vmem:[#allocation2 + $0x350] sm:$0xff]
    %v274 = vld [vmem:[#allocation2 + $0x358] sm:$0xff]
    %v275 = vld [vmem:[#allocation2 + $0x360] sm:$0xff]
    %v276 = vld [vmem:[#allocation2 + $0x368] sm:$0xff]
    %v277 = vld [vmem:[#allocation2 + $0x370] sm:$0xff]
    %v278 = vld [vmem:[#allocation2 + $0x378] sm:$0xff]
    %v279 = vld [vmem:[#allocation2 + $0x380] sm:$0xff]
    %v280 = vld [vmem:[#allocation2 + $0x388] sm:$0xff]
    %v281 = vld [vmem:[#allocation2 + $0x390] sm:$0xff]
    %v282 = vld [vmem:[#allocation2 + $0x398] sm:$0xff]
    %v283 = vld [vmem:[#allocation2 + $0x3a0] sm:$0xff]
    %v284 = vld [vmem:[#allocation2 + $0x3a8] sm:$0xff]
    %v285 = vld [vmem:[#allocation2 + $0x3b0] sm:$0xff]
    %v286 = vld [vmem:[#allocation2 + $0x3b8] sm:$0xff]
    %v287 = vld [vmem:[#allocation2 + $0x3c0] sm:$0xff]
    %v288 = vld [vmem:[#allocation2 + $0x3c8] sm:$0xff]
    %v289 = vld [vmem:[#allocation2 + $0x3d0] sm:$0xff]
    %v290 = vld [vmem:[#allocation2 + $0x3d8] sm:$0xff]
    %v291 = vld [vmem:[#allocation2 + $0x3e0] sm:$0xff]
    %v292 = vld [vmem:[#allocation2 + $0x3e8] sm:$0xff]
    %v293 = vld [vmem:[#allocation2 + $0x3f0] sm:$0xff]
    %v294 = vld [vmem:[#allocation2 + $0x3f8] sm:$0xff]
    %v295 = vld [vmem:[#allocation2 + $0x400] sm:$0xff]
    %v296 = vld [vmem:[#allocation2 + $0x408] sm:$0xff]
    %v297 = vld [vmem:[#allocation2 + $0x410] sm:$0xff]
    %v298 = vld [vmem:[#allocation2 + $0x418] sm:$0xff]
    %v299 = vld [vmem:[#allocation2 + $0x420] sm:$0xff]
    %v300 = vld [vmem:[#allocation2 + $0x428] sm:$0xff]
    %v301 = vld [vmem:[#allocation2 + $0x430] sm:$0xff]
    %v302 = vld [vmem:[#allocation2 + $0x438] sm:$0xff]
    %v303 = vld [vmem:[#allocation2 + $0x440] sm:$0xff]
    %v304 = vld [vmem:[#allocation2 + $0x448] sm:$0xff]
    %v305 = vld [vmem:[#allocation2 + $0x450] sm:$0xff]
    %v306 = vld [vmem:[#allocation2 + $0x458] sm:$0xff]
    %v307 = vld [vmem:[#allocation2 + $0x460] sm:$0xff]
    %v308 = vld [vmem:[#allocation2 + $0x468] sm:$0xff]
    %v309 = vld [vmem:[#allocation2 + $0x470] sm:$0xff]
    %v310 = vld [vmem:[#allocation2 + $0x478] sm:$0xff]
    %v311 = vld [vmem:[#allocation2 + $0x480] sm:$0xff]
    %v312 = vld [vmem:[#allocation2 + $0x488] sm:$0xff]
    %v313 = vld [vmem:[#allocation2 + $0x490] sm:$0xff]
    %v314 = vld [vmem:[#allocation2 + $0x498] sm:$0xff]
    %v315 = vld [vmem:[#allocation2 + $0x4a0] sm:$0xff]
    %v316 = vld [vmem:[#allocation2 + $0x4a8] sm:$0xff]
    %v317 = vld [vmem:[#allocation2 + $0x4b0] sm:$0xff]
    %v318 = vld [vmem:[#allocation2 + $0x4b8] sm:$0xff]
    %v319 = vld [vmem:[#allocation2 + $0x4c0] sm:$0xff]
    %v320 = vld [vmem:[#allocation2 + $0x4c8] sm:$0xff]
    %v321 = vld [vmem:[#allocation2 + $0x4d0] sm:$0xff]
    %v322 = vld [vmem:[#allocation2 + $0x4d8] sm:$0xff]
    %v323 = vld [vmem:[#allocation2 + $0x4e0] sm:$0xff]
    %v324 = vld [vmem:[#allocation2 + $0x4e8] sm:$0xff]
    %v325 = vld [vmem:[#allocation2 + $0x4f0] sm:$0xff]
    %v326 = vld [vmem:[#allocation2 + $0x4f8] sm:$0xff]
    %v327 = vld [vmem:[#allocation2 + $0x500] sm:$0xff]
    %v328 = vld [vmem:[#allocation2 + $0x508] sm:$0xff]
    %v329 = vld [vmem:[#allocation2 + $0x510] sm:$0xff]
    %v330 = vld [vmem:[#allocation2 + $0x518] sm:$0xff]
    %v331 = vld [vmem:[#allocation2 + $0x520] sm:$0xff]
    %v332 = vld [vmem:[#allocation2 + $0x528] sm:$0xff]
    %v333 = vld [vmem:[#allocation2 + $0x530] sm:$0xff]
    %v334 = vld [vmem:[#allocation2 + $0x538] sm:$0xff]
    %v335 = vld [vmem:[#allocation2 + $0x540] sm:$0xff]
    %v336 = vld [vmem:[#allocation2 + $0x548] sm:$0xff]
    %v337 = vld [vmem:[#allocation2 + $0x550] sm:$0xff]
    %v338 = vld [vmem:[#allocation2 + $0x558] sm:$0xff]
    %v339 = vld [vmem:[#allocation2 + $0x560] sm:$0xff]
    %v340 = vld [vmem:[#allocation2 + $0x568] sm:$0xff]
    %v341 = vld [vmem:[#allocation2 + $0x570] sm:$0xff]
    %v342 = vld [vmem:[#allocation2 + $0x578] sm:$0xff]
    %v343 = vld [vmem:[#allocation2 + $0x580] sm:$0xff]
    %v344 = vld [vmem:[#allocation2 + $0x588] sm:$0xff]
    %v345 = vld [vmem:[#allocation2 + $0x590] sm:$0xff]
    %v346 = vld [vmem:[#allocation2 + $0x598] sm:$0xff]
    %v347 = vld [vmem:[#allocation2 + $0x5a0] sm:$0xff]
    %v348 = vld [vmem:[#allocation2 + $0x5a8] sm:$0xff]
    %v349 = vld [vmem:[#allocation2 + $0x5b0] sm:$0xff]
    %v350 = vld [vmem:[#allocation2 + $0x5b8] sm:$0xff]
    %v351 = vld [vmem:[#allocation2 + $0x5c0] sm:$0xff]
    %v352 = vld [vmem:[#allocation2 + $0x5c8] sm:$0xff]
    %v353 = vld [vmem:[#allocation2 + $0x5d0] sm:$0xff]
    %v354 = vld [vmem:[#allocation2 + $0x5d8] sm:$0xff]
    %v355 = vld [vmem:[#allocation2 + $0x5e0] sm:$0xff]
    %v356 = vld [vmem:[#allocation2 + $0x5e8] sm:$0xff]
    %v357 = vld [vmem:[#allocation2 + $0x5f0] sm:$0xff]
    %v358 = vld [vmem:[#allocation2 + $0x5f8] sm:$0xff]
    %v359 = vld [vmem:[#allocation2 + $0x600] sm:$0xff]
    %v360 = vld [vmem:[#allocation2 + $0x608] sm:$0xff]
    %v361 = vld [vmem:[#allocation2 + $0x610] sm:$0xff]
    %v362 = vld [vmem:[#allocation2 + $0x618] sm:$0xff]
    %v363 = vld [vmem:[#allocation2 + $0x620] sm:$0xff]
    %v364 = vld [vmem:[#allocation2 + $0x628] sm:$0xff]
    %v365 = vld [vmem:[#allocation2 + $0x630] sm:$0xff]
    %v366 = vld [vmem:[#allocation2 + $0x638] sm:$0xff]
    %v367 = vld [vmem:[#allocation2 + $0x640] sm:$0xff]
    %v368 = vld [vmem:[#allocation2 + $0x648] sm:$0xff]
    %v369 = vld [vmem:[#allocation2 + $0x650] sm:$0xff]
    %v370 = vld [vmem:[#allocation2 + $0x658] sm:$0xff]
    %v371 = vld [vmem:[#allocation2 + $0x660] sm:$0xff]
    %v372 = vld [vmem:[#allocation2 + $0x668] sm:$0xff]
    %v373 = vld [vmem:[#allocation2 + $0x670] sm:$0xff]
    %v374 = vld [vmem:[#allocation2 + $0x678] sm:$0xff]
    %v375 = vld [vmem:[#allocation2 + $0x680] sm:$0xff]
    %v376 = vld [vmem:[#allocation2 + $0x688] sm:$0xff]
    %v377 = vld [vmem:[#allocation2 + $0x690] sm:$0xff]
    %v378 = vld [vmem:[#allocation2 + $0x698] sm:$0xff]
    %v379 = vld [vmem:[#allocation2 + $0x6a0] sm:$0xff]
    %v380 = vld [vmem:[#allocation2 + $0x6a8] sm:$0xff]
    %v381 = vld [vmem:[#allocation2 + $0x6b0] sm:$0xff]
    %v382 = vld [vmem:[#allocation2 + $0x6b8] sm:$0xff]
    %v383 = vld [vmem:[#allocation2 + $0x6c0] sm:$0xff]
    %v384 = vld [vmem:[#allocation2 + $0x6c8] sm:$0xff]
    %v385 = vld [vmem:[#allocation2 + $0x6d0] sm:$0xff]
    %v386 = vld [vmem:[#allocation2 + $0x6d8] sm:$0xff]
    %v387 = vld [vmem:[#allocation2 + $0x6e0] sm:$0xff]
    %v388 = vld [vmem:[#allocation2 + $0x6e8] sm:$0xff]
    %v389 = vld [vmem:[#allocation2 + $0x6f0] sm:$0xff]
    %v390 = vld [vmem:[#allocation2 + $0x6f8] sm:$0xff]
    %v391 = vld [vmem:[#allocation2 + $0x700] sm:$0xff]
    %v392 = vld [vmem:[#allocation2 + $0x708] sm:$0xff]
    %v393 = vld [vmem:[#allocation2 + $0x710] sm:$0xff]
    %v394 = vld [vmem:[#allocation2 + $0x718] sm:$0xff]
    %v395 = vld [vmem:[#allocation2 + $0x720] sm:$0xff]
    %v396 = vld [vmem:[#allocation2 + $0x728] sm:$0xff]
    %v397 = vld [vmem:[#allocation2 + $0x730] sm:$0xff]
    %v398 = vld [vmem:[#allocation2 + $0x738] sm:$0xff]
    %v399 = vld [vmem:[#allocation2 + $0x740] sm:$0xff]
    %v400 = vld [vmem:[#allocation2 + $0x748] sm:$0xff]
    %v401 = vld [vmem:[#allocation2 + $0x750] sm:$0xff]
    %v402 = vld [vmem:[#allocation2 + $0x758] sm:$0xff]
    %v403 = vld [vmem:[#allocation2 + $0x760] sm:$0xff]
    %v404 = vld [vmem:[#allocation2 + $0x768] sm:$0xff]
    %v405 = vld [vmem:[#allocation2 + $0x770] sm:$0xff]
    %v406 = vld [vmem:[#allocation2 + $0x778] sm:$0xff]
    %v407 = vld [vmem:[#allocation2 + $0x780] sm:$0xff]
    %v408 = vld [vmem:[#allocation2 + $0x788] sm:$0xff]
    %v409 = vld [vmem:[#allocation2 + $0x790] sm:$0xff]
    %v410 = vld [vmem:[#allocation2 + $0x798] sm:$0xff]
    %v411 = vld [vmem:[#allocation2 + $0x7a0] sm:$0xff]
    %v412 = vld [vmem:[#allocation2 + $0x7a8] sm:$0xff]
    %v413 = vld [vmem:[#allocation2 + $0x7b0] sm:$0xff]
    %v414 = vld [vmem:[#allocation2 + $0x7b8] sm:$0xff]
    %v415 = vld [vmem:[#allocation2 + $0x7c0] sm:$0xff]
    %v416 = vld [vmem:[#allocation2 + $0x7c8] sm:$0xff]
    %v417 = vld [vmem:[#allocation2 + $0x7d0] sm:$0xff]
    %v418 = vld [vmem:[#allocation2 + $0x7d8] sm:$0xff]
    %v419 = vld [vmem:[#allocation2 + $0x7e0] sm:$0xff]
    %v420 = vld [vmem:[#allocation2 + $0x7e8] sm:$0xff]
    %v421 = vld [vmem:[#allocation2 + $0x7f0] sm:$0xff]
    %v422 = vld [vmem:[#allocation2 + $0x7f8] sm:$0xff]
    %v423 = vld [vmem:[%s4] sm:$0xff]
    %v424 = vld [vmem:[%s4 + $0x8] sm:$0xff]
    %v427 = vperm.slane %v423, 0
    %v428 = vperm.slane %v423, 1
    %v429 = vperm.slane %v423, 2
    %v430 = vperm.slane %v423, 3
    %v431 = vperm.slane %v423, 4
    %v432 = vperm.slane %v423, 5
    %v433 = vperm.slane %v423, 6
    %v434 = vperm.slane %v423, 7
    %v435 = vperm.slane %v424, 0
    %v436 = vperm.slane %v424, 1
    %v437 = vperm.slane %v424, 2
    %v438 = vperm.slane %v424, 3
    %v439 = vperm.slane %v424, 4
    %v440 = vperm.slane %v424, 5
    %v441 = vperm.slane %v424, 6
    %v442 = vperm.slane %v424, 7
    %v715 = vunpack.c.l.b16 %v167
    %v716 = vunpack.c.h.b16 %v167
    %v717 = vunpack.c.l.b16 %v168
    %v718 = vunpack.c.h.b16 %v168
    %v719 = vunpack.c.l.b16 %v169
    %v720 = vunpack.c.h.b16 %v169
    %v721 = vunpack.c.l.b16 %v170
    %v722 = vunpack.c.h.b16 %v170
    %v723 = vunpack.c.l.b16 %v171
    %v724 = vunpack.c.h.b16 %v171
    %v725 = vunpack.c.l.b16 %v172
    %v726 = vunpack.c.h.b16 %v172
    %v727 = vunpack.c.l.b16 %v173
    %v728 = vunpack.c.h.b16 %v173
    %v729 = vunpack.c.l.b16 %v174
    %v730 = vunpack.c.h.b16 %v174
    %v731 = vunpack.c.l.b16 %v175
    %v732 = vunpack.c.h.b16 %v175
    %v733 = vunpack.c.l.b16 %v176
    %v734 = vunpack.c.h.b16 %v176
    %v735 = vunpack.c.l.b16 %v177
    %v736 = vunpack.c.h.b16 %v177
    %v737 = vunpack.c.l.b16 %v178
    %v738 = vunpack.c.h.b16 %v178
    %v739 = vunpack.c.l.b16 %v179
    %v740 = vunpack.c.h.b16 %v179
    %v741 = vunpack.c.l.b16 %v180
    %v742 = vunpack.c.h.b16 %v180
    %v743 = vunpack.c.l.b16 %v181
    %v744 = vunpack.c.h.b16 %v181
    %v745 = vunpack.c.l.b16 %v182
    %v746 = vunpack.c.h.b16 %v182
    %v747 = vunpack.c.l.b16 %v183
    %v748 = vunpack.c.h.b16 %v183
    %v749 = vunpack.c.l.b16 %v184
    %v750 = vunpack.c.h.b16 %v184
    %v751 = vunpack.c.l.b16 %v185
    %v752 = vunpack.c.h.b16 %v185
    %v753 = vunpack.c.l.b16 %v186
    %v754 = vunpack.c.h.b16 %v186
    %v755 = vunpack.c.l.b16 %v187
    %v756 = vunpack.c.h.b16 %v187
    %v757 = vunpack.c.l.b16 %v188
    %v758 = vunpack.c.h.b16 %v188
    %v759 = vunpack.c.l.b16 %v189
    %v760 = vunpack.c.h.b16 %v189
    %v761 = vunpack.c.l.b16 %v190
    %v762 = vunpack.c.h.b16 %v190
    %v763 = vunpack.c.l.b16 %v191
    %v764 = vunpack.c.h.b16 %v191
    %v765 = vunpack.c.l.b16 %v192
    %v766 = vunpack.c.h.b16 %v192
    %v767 = vunpack.c.l.b16 %v193
    %v768 = vunpack.c.h.b16 %v193
    %v769 = vunpack.c.l.b16 %v194
    %v770 = vunpack.c.h.b16 %v194
    %v771 = vunpack.c.l.b16 %v195
    %v772 = vunpack.c.h.b16 %v195
    %v773 = vunpack.c.l.b16 %v196
    %v774 = vunpack.c.h.b16 %v196
    %v775 = vunpack.c.l.b16 %v197
    %v776 = vunpack.c.h.b16 %v197
    %v777 = vunpack.c.l.b16 %v198
    %v778 = vunpack.c.h.b16 %v198
    %v779 = vunpack.c.l.b16 %v199
    %v780 = vunpack.c.h.b16 %v199
    %v781 = vunpack.c.l.b16 %v200
    %v782 = vunpack.c.h.b16 %v200
    %v783 = vunpack.c.l.b16 %v201
    %v784 = vunpack.c.h.b16 %v201
    %v785 = vunpack.c.l.b16 %v202
    %v786 = vunpack.c.h.b16 %v202
    %v787 = vunpack.c.l.b16 %v203
    %v788 = vunpack.c.h.b16 %v203
    %v789 = vunpack.c.l.b16 %v204
    %v790 = vunpack.c.h.b16 %v204
    %v791 = vunpack.c.l.b16 %v205
    %v792 = vunpack.c.h.b16 %v205
    %v793 = vunpack.c.l.b16 %v206
    %v794 = vunpack.c.h.b16 %v206
    %v795 = vunpack.c.l.b16 %v207
    %v796 = vunpack.c.h.b16 %v207
    %v797 = vunpack.c.l.b16 %v208
    %v798 = vunpack.c.h.b16 %v208
    %v799 = vunpack.c.l.b16 %v209
    %v800 = vunpack.c.h.b16 %v209
    %v801 = vunpack.c.l.b16 %v210
    %v802 = vunpack.c.h.b16 %v210
    %v803 = vunpack.c.l.b16 %v211
    %v804 = vunpack.c.h.b16 %v211
    %v805 = vunpack.c.l.b16 %v212
    %v806 = vunpack.c.h.b16 %v212
    %v807 = vunpack.c.l.b16 %v213
    %v808 = vunpack.c.h.b16 %v213
    %v809 = vunpack.c.l.b16 %v214
    %v810 = vunpack.c.h.b16 %v214
    %v811 = vunpack.c.l.b16 %v215
    %v812 = vunpack.c.h.b16 %v215
    %v813 = vunpack.c.l.b16 %v216
    %v814 = vunpack.c.h.b16 %v216
    %v815 = vunpack.c.l.b16 %v217
    %v816 = vunpack.c.h.b16 %v217
    %v817 = vunpack.c.l.b16 %v218
    %v818 = vunpack.c.h.b16 %v218
    %v819 = vunpack.c.l.b16 %v219
    %v820 = vunpack.c.h.b16 %v219
    %v821 = vunpack.c.l.b16 %v220
    %v822 = vunpack.c.h.b16 %v220
    %v823 = vunpack.c.l.b16 %v221
    %v824 = vunpack.c.h.b16 %v221
    %v825 = vunpack.c.l.b16 %v222
    %v826 = vunpack.c.h.b16 %v222
    %v827 = vunpack.c.l.b16 %v223
    %v828 = vunpack.c.h.b16 %v223
    %v829 = vunpack.c.l.b16 %v224
    %v830 = vunpack.c.h.b16 %v224
    %v831 = vunpack.c.l.b16 %v225
    %v832 = vunpack.c.h.b16 %v225
    %v833 = vunpack.c.l.b16 %v226
    %v834 = vunpack.c.h.b16 %v226
    %v835 = vunpack.c.l.b16 %v227
    %v836 = vunpack.c.h.b16 %v227
    %v837 = vunpack.c.l.b16 %v228
    %v838 = vunpack.c.h.b16 %v228
    %v839 = vunpack.c.l.b16 %v229
    %v840 = vunpack.c.h.b16 %v229
    %v841 = vunpack.c.l.b16 %v230
    %v842 = vunpack.c.h.b16 %v230
    %v843 = vunpack.c.l.b16 %v231
    %v844 = vunpack.c.h.b16 %v231
    %v845 = vunpack.c.l.b16 %v232
    %v846 = vunpack.c.h.b16 %v232
    %v847 = vunpack.c.l.b16 %v233
    %v848 = vunpack.c.h.b16 %v233
    %v849 = vunpack.c.l.b16 %v234
    %v850 = vunpack.c.h.b16 %v234
    %v851 = vunpack.c.l.b16 %v235
    %v852 = vunpack.c.h.b16 %v235
    %v853 = vunpack.c.l.b16 %v236
    %v854 = vunpack.c.h.b16 %v236
    %v855 = vunpack.c.l.b16 %v237
    %v856 = vunpack.c.h.b16 %v237
    %v857 = vunpack.c.l.b16 %v238
    %v858 = vunpack.c.h.b16 %v238
    %v859 = vunpack.c.l.b16 %v239
    %v860 = vunpack.c.h.b16 %v239
    %v861 = vunpack.c.l.b16 %v240
    %v862 = vunpack.c.h.b16 %v240
    %v863 = vunpack.c.l.b16 %v241
    %v864 = vunpack.c.h.b16 %v241
    %v865 = vunpack.c.l.b16 %v242
    %v866 = vunpack.c.h.b16 %v242
    %v867 = vunpack.c.l.b16 %v243
    %v868 = vunpack.c.h.b16 %v243
    %v869 = vunpack.c.l.b16 %v244
    %v870 = vunpack.c.h.b16 %v244
    %v871 = vunpack.c.l.b16 %v245
    %v872 = vunpack.c.h.b16 %v245
    %v873 = vunpack.c.l.b16 %v246
    %v874 = vunpack.c.h.b16 %v246
    %v875 = vunpack.c.l.b16 %v247
    %v876 = vunpack.c.h.b16 %v247
    %v877 = vunpack.c.l.b16 %v248
    %v878 = vunpack.c.h.b16 %v248
    %v879 = vunpack.c.l.b16 %v249
    %v880 = vunpack.c.h.b16 %v249
    %v881 = vunpack.c.l.b16 %v250
    %v882 = vunpack.c.h.b16 %v250
    %v883 = vunpack.c.l.b16 %v251
    %v884 = vunpack.c.h.b16 %v251
    %v885 = vunpack.c.l.b16 %v252
    %v886 = vunpack.c.h.b16 %v252
    %v887 = vunpack.c.l.b16 %v253
    %v888 = vunpack.c.h.b16 %v253
    %v889 = vunpack.c.l.b16 %v254
    %v890 = vunpack.c.h.b16 %v254
    %v891 = vunpack.c.l.b16 %v255
    %v892 = vunpack.c.h.b16 %v255
    %v893 = vunpack.c.l.b16 %v256
    %v894 = vunpack.c.h.b16 %v256
    %v895 = vunpack.c.l.b16 %v257
    %v896 = vunpack.c.h.b16 %v257
    %v897 = vunpack.c.l.b16 %v258
    %v898 = vunpack.c.h.b16 %v258
    %v899 = vunpack.c.l.b16 %v259
    %v900 = vunpack.c.h.b16 %v259
    %v901 = vunpack.c.l.b16 %v260
    %v902 = vunpack.c.h.b16 %v260
    %v903 = vunpack.c.l.b16 %v261
    %v904 = vunpack.c.h.b16 %v261
    %v905 = vunpack.c.l.b16 %v262
    %v906 = vunpack.c.h.b16 %v262
    %v907 = vunpack.c.l.b16 %v263
    %v908 = vunpack.c.h.b16 %v263
    %v909 = vunpack.c.l.b16 %v264
    %v910 = vunpack.c.h.b16 %v264
    %v911 = vunpack.c.l.b16 %v265
    %v912 = vunpack.c.h.b16 %v265
    %v913 = vunpack.c.l.b16 %v266
    %v914 = vunpack.c.h.b16 %v266
    %v915 = vunpack.c.l.b16 %v267
    %v916 = vunpack.c.h.b16 %v267
    %v917 = vunpack.c.l.b16 %v268
    %v918 = vunpack.c.h.b16 %v268
    %v919 = vunpack.c.l.b16 %v269
    %v920 = vunpack.c.h.b16 %v269
    %v921 = vunpack.c.l.b16 %v270
    %v922 = vunpack.c.h.b16 %v270
    %v923 = vunpack.c.l.b16 %v271
    %v924 = vunpack.c.h.b16 %v271
    %v925 = vunpack.c.l.b16 %v272
    %v926 = vunpack.c.h.b16 %v272
    %v927 = vunpack.c.l.b16 %v273
    %v928 = vunpack.c.h.b16 %v273
    %v929 = vunpack.c.l.b16 %v274
    %v930 = vunpack.c.h.b16 %v274
    %v931 = vunpack.c.l.b16 %v275
    %v932 = vunpack.c.h.b16 %v275
    %v933 = vunpack.c.l.b16 %v276
    %v934 = vunpack.c.h.b16 %v276
    %v935 = vunpack.c.l.b16 %v277
    %v936 = vunpack.c.h.b16 %v277
    %v937 = vunpack.c.l.b16 %v278
    %v938 = vunpack.c.h.b16 %v278
    %v939 = vunpack.c.l.b16 %v279
    %v940 = vunpack.c.h.b16 %v279
    %v941 = vunpack.c.l.b16 %v280
    %v942 = vunpack.c.h.b16 %v280
    %v943 = vunpack.c.l.b16 %v281
    %v944 = vunpack.c.h.b16 %v281
    %v945 = vunpack.c.l.b16 %v282
    %v946 = vunpack.c.h.b16 %v282
    %v947 = vunpack.c.l.b16 %v283
    %v948 = vunpack.c.h.b16 %v283
    %v949 = vunpack.c.l.b16 %v284
    %v950 = vunpack.c.h.b16 %v284
    %v951 = vunpack.c.l.b16 %v285
    %v952 = vunpack.c.h.b16 %v285
    %v953 = vunpack.c.l.b16 %v286
    %v954 = vunpack.c.h.b16 %v286
    %v955 = vunpack.c.l.b16 %v287
    %v956 = vunpack.c.h.b16 %v287
    %v957 = vunpack.c.l.b16 %v288
    %v958 = vunpack.c.h.b16 %v288
    %v959 = vunpack.c.l.b16 %v289
    %v960 = vunpack.c.h.b16 %v289
    %v961 = vunpack.c.l.b16 %v290
    %v962 = vunpack.c.h.b16 %v290
    %v963 = vunpack.c.l.b16 %v291
    %v964 = vunpack.c.h.b16 %v291
    %v965 = vunpack.c.l.b16 %v292
    %v966 = vunpack.c.h.b16 %v292
    %v967 = vunpack.c.l.b16 %v293
    %v968 = vunpack.c.h.b16 %v293
    %v969 = vunpack.c.l.b16 %v294
    %v970 = vunpack.c.h.b16 %v294
    %v971 = vunpack.c.l.b16 %v295
    %v972 = vunpack.c.h.b16 %v295
    %v973 = vunpack.c.l.b16 %v296
    %v974 = vunpack.c.h.b16 %v296
    %v975 = vunpack.c.l.b16 %v297
    %v976 = vunpack.c.h.b16 %v297
    %v977 = vunpack.c.l.b16 %v298
    %v978 = vunpack.c.h.b16 %v298
    %v979 = vunpack.c.l.b16 %v299
    %v980 = vunpack.c.h.b16 %v299
    %v981 = vunpack.c.l.b16 %v300
    %v982 = vunpack.c.h.b16 %v300
    %v983 = vunpack.c.l.b16 %v301
    %v984 = vunpack.c.h.b16 %v301
    %v985 = vunpack.c.l.b16 %v302
    %v986 = vunpack.c.h.b16 %v302
    %v987 = vunpack.c.l.b16 %v303
    %v988 = vunpack.c.h.b16 %v303
    %v989 = vunpack.c.l.b16 %v304
    %v990 = vunpack.c.h.b16 %v304
    %v991 = vunpack.c.l.b16 %v305
    %v992 = vunpack.c.h.b16 %v305
    %v993 = vunpack.c.l.b16 %v306
    %v994 = vunpack.c.h.b16 %v306
    %v995 = vunpack.c.l.b16 %v307
    %v996 = vunpack.c.h.b16 %v307
    %v997 = vunpack.c.l.b16 %v308
    %v998 = vunpack.c.h.b16 %v308
    %v999 = vunpack.c.l.b16 %v309
    %v1000 = vunpack.c.h.b16 %v309
    %v1001 = vunpack.c.l.b16 %v310
    %v1002 = vunpack.c.h.b16 %v310
    %v1003 = vunpack.c.l.b16 %v311
    %v1004 = vunpack.c.h.b16 %v311
    %v1005 = vunpack.c.l.b16 %v312
    %v1006 = vunpack.c.h.b16 %v312
    %v1007 = vunpack.c.l.b16 %v313
    %v1008 = vunpack.c.h.b16 %v313
    %v1009 = vunpack.c.l.b16 %v314
    %v1010 = vunpack.c.h.b16 %v314
    %v1011 = vunpack.c.l.b16 %v315
    %v1012 = vunpack.c.h.b16 %v315
    %v1013 = vunpack.c.l.b16 %v316
    %v1014 = vunpack.c.h.b16 %v316
    %v1015 = vunpack.c.l.b16 %v317
    %v1016 = vunpack.c.h.b16 %v317
    %v1017 = vunpack.c.l.b16 %v318
    %v1018 = vunpack.c.h.b16 %v318
    %v1019 = vunpack.c.l.b16 %v319
    %v1020 = vunpack.c.h.b16 %v319
    %v1021 = vunpack.c.l.b16 %v320
    %v1022 = vunpack.c.h.b16 %v320
    %v1023 = vunpack.c.l.b16 %v321
    %v1024 = vunpack.c.h.b16 %v321
    %v1025 = vunpack.c.l.b16 %v322
    %v1026 = vunpack.c.h.b16 %v322
    %v1027 = vunpack.c.l.b16 %v323
    %v1028 = vunpack.c.h.b16 %v323
    %v1029 = vunpack.c.l.b16 %v324
    %v1030 = vunpack.c.h.b16 %v324
    %v1031 = vunpack.c.l.b16 %v325
    %v1032 = vunpack.c.h.b16 %v325
    %v1033 = vunpack.c.l.b16 %v326
    %v1034 = vunpack.c.h.b16 %v326
    %v1035 = vunpack.c.l.b16 %v327
    %v1036 = vunpack.c.h.b16 %v327
    %v1037 = vunpack.c.l.b16 %v328
    %v1038 = vunpack.c.h.b16 %v328
    %v1039 = vunpack.c.l.b16 %v329
    %v1040 = vunpack.c.h.b16 %v329
    %v1041 = vunpack.c.l.b16 %v330
    %v1042 = vunpack.c.h.b16 %v330
    %v1043 = vunpack.c.l.b16 %v331
    %v1044 = vunpack.c.h.b16 %v331
    %v1045 = vunpack.c.l.b16 %v332
    %v1046 = vunpack.c.h.b16 %v332
    %v1047 = vunpack.c.l.b16 %v333
    %v1048 = vunpack.c.h.b16 %v333
    %v1049 = vunpack.c.l.b16 %v334
    %v1050 = vunpack.c.h.b16 %v334
    %v1051 = vunpack.c.l.b16 %v335
    %v1052 = vunpack.c.h.b16 %v335
    %v1053 = vunpack.c.l.b16 %v336
    %v1054 = vunpack.c.h.b16 %v336
    %v1055 = vunpack.c.l.b16 %v337
    %v1056 = vunpack.c.h.b16 %v337
    %v1057 = vunpack.c.l.b16 %v338
    %v1058 = vunpack.c.h.b16 %v338
    %v1059 = vunpack.c.l.b16 %v339
    %v1060 = vunpack.c.h.b16 %v339
    %v1061 = vunpack.c.l.b16 %v340
    %v1062 = vunpack.c.h.b16 %v340
    %v1063 = vunpack.c.l.b16 %v341
    %v1064 = vunpack.c.h.b16 %v341
    %v1065 = vunpack.c.l.b16 %v342
    %v1066 = vunpack.c.h.b16 %v342
    %v1067 = vunpack.c.l.b16 %v343
    %v1068 = vunpack.c.h.b16 %v343
    %v1069 = vunpack.c.l.b16 %v344
    %v1070 = vunpack.c.h.b16 %v344
    %v1071 = vunpack.c.l.b16 %v345
    %v1072 = vunpack.c.h.b16 %v345
    %v1073 = vunpack.c.l.b16 %v346
    %v1074 = vunpack.c.h.b16 %v346
    %v1075 = vunpack.c.l.b16 %v347
    %v1076 = vunpack.c.h.b16 %v347
    %v1077 = vunpack.c.l.b16 %v348
    %v1078 = vunpack.c.h.b16 %v348
    %v1079 = vunpack.c.l.b16 %v349
    %v1080 = vunpack.c.h.b16 %v349
    %v1081 = vunpack.c.l.b16 %v350
    %v1082 = vunpack.c.h.b16 %v350
    %v1083 = vunpack.c.l.b16 %v351
    %v1084 = vunpack.c.h.b16 %v351
    %v1085 = vunpack.c.l.b16 %v352
    %v1086 = vunpack.c.h.b16 %v352
    %v1087 = vunpack.c.l.b16 %v353
    %v1088 = vunpack.c.h.b16 %v353
    %v1089 = vunpack.c.l.b16 %v354
    %v1090 = vunpack.c.h.b16 %v354
    %v1091 = vunpack.c.l.b16 %v355
    %v1092 = vunpack.c.h.b16 %v355
    %v1093 = vunpack.c.l.b16 %v356
    %v1094 = vunpack.c.h.b16 %v356
    %v1095 = vunpack.c.l.b16 %v357
    %v1096 = vunpack.c.h.b16 %v357
    %v1097 = vunpack.c.l.b16 %v358
    %v1098 = vunpack.c.h.b16 %v358
    %v1099 = vunpack.c.l.b16 %v359
    %v1100 = vunpack.c.h.b16 %v359
    %v1101 = vunpack.c.l.b16 %v360
    %v1102 = vunpack.c.h.b16 %v360
    %v1103 = vunpack.c.l.b16 %v361
    %v1104 = vunpack.c.h.b16 %v361
    %v1105 = vunpack.c.l.b16 %v362
    %v1106 = vunpack.c.h.b16 %v362
    %v1107 = vunpack.c.l.b16 %v363
    %v1108 = vunpack.c.h.b16 %v363
    %v1109 = vunpack.c.l.b16 %v364
    %v1110 = vunpack.c.h.b16 %v364
    %v1111 = vunpack.c.l.b16 %v365
    %v1112 = vunpack.c.h.b16 %v365
    %v1113 = vunpack.c.l.b16 %v366
    %v1114 = vunpack.c.h.b16 %v366
    %v1115 = vunpack.c.l.b16 %v367
    %v1116 = vunpack.c.h.b16 %v367
    %v1117 = vunpack.c.l.b16 %v368
    %v1118 = vunpack.c.h.b16 %v368
    %v1119 = vunpack.c.l.b16 %v369
    %v1120 = vunpack.c.h.b16 %v369
    %v1121 = vunpack.c.l.b16 %v370
    %v1122 = vunpack.c.h.b16 %v370
    %v1123 = vunpack.c.l.b16 %v371
    %v1124 = vunpack.c.h.b16 %v371
    %v1125 = vunpack.c.l.b16 %v372
    %v1126 = vunpack.c.h.b16 %v372
    %v1127 = vunpack.c.l.b16 %v373
    %v1128 = vunpack.c.h.b16 %v373
    %v1129 = vunpack.c.l.b16 %v374
    %v1130 = vunpack.c.h.b16 %v374
    %v1131 = vunpack.c.l.b16 %v375
    %v1132 = vunpack.c.h.b16 %v375
    %v1133 = vunpack.c.l.b16 %v376
    %v1134 = vunpack.c.h.b16 %v376
    %v1135 = vunpack.c.l.b16 %v377
    %v1136 = vunpack.c.h.b16 %v377
    %v1137 = vunpack.c.l.b16 %v378
    %v1138 = vunpack.c.h.b16 %v378
    %v1139 = vunpack.c.l.b16 %v379
    %v1140 = vunpack.c.h.b16 %v379
    %v1141 = vunpack.c.l.b16 %v380
    %v1142 = vunpack.c.h.b16 %v380
    %v1143 = vunpack.c.l.b16 %v381
    %v1144 = vunpack.c.h.b16 %v381
    %v1145 = vunpack.c.l.b16 %v382
    %v1146 = vunpack.c.h.b16 %v382
    %v1147 = vunpack.c.l.b16 %v383
    %v1148 = vunpack.c.h.b16 %v383
    %v1149 = vunpack.c.l.b16 %v384
    %v1150 = vunpack.c.h.b16 %v384
    %v1151 = vunpack.c.l.b16 %v385
    %v1152 = vunpack.c.h.b16 %v385
    %v1153 = vunpack.c.l.b16 %v386
    %v1154 = vunpack.c.h.b16 %v386
    %v1155 = vunpack.c.l.b16 %v387
    %v1156 = vunpack.c.h.b16 %v387
    %v1157 = vunpack.c.l.b16 %v388
    %v1158 = vunpack.c.h.b16 %v388
    %v1159 = vunpack.c.l.b16 %v389
    %v1160 = vunpack.c.h.b16 %v389
    %v1161 = vunpack.c.l.b16 %v390
    %v1162 = vunpack.c.h.b16 %v390
    %v1163 = vunpack.c.l.b16 %v391
    %v1164 = vunpack.c.h.b16 %v391
    %v1165 = vunpack.c.l.b16 %v392
    %v1166 = vunpack.c.h.b16 %v392
    %v1167 = vunpack.c.l.b16 %v393
    %v1168 = vunpack.c.h.b16 %v393
    %v1169 = vunpack.c.l.b16 %v394
    %v1170 = vunpack.c.h.b16 %v394
    %v1171 = vunpack.c.l.b16 %v395
    %v1172 = vunpack.c.h.b16 %v395
    %v1173 = vunpack.c.l.b16 %v396
    %v1174 = vunpack.c.h.b16 %v396
    %v1175 = vunpack.c.l.b16 %v397
    %v1176 = vunpack.c.h.b16 %v397
    %v1177 = vunpack.c.l.b16 %v398
    %v1178 = vunpack.c.h.b16 %v398
    %v1179 = vunpack.c.l.b16 %v399
    %v1180 = vunpack.c.h.b16 %v399
    %v1181 = vunpack.c.l.b16 %v400
    %v1182 = vunpack.c.h.b16 %v400
    %v1183 = vunpack.c.l.b16 %v401
    %v1184 = vunpack.c.h.b16 %v401
    %v1185 = vunpack.c.l.b16 %v402
    %v1186 = vunpack.c.h.b16 %v402
    %v1187 = vunpack.c.l.b16 %v403
    %v1188 = vunpack.c.h.b16 %v403
    %v1189 = vunpack.c.l.b16 %v404
    %v1190 = vunpack.c.h.b16 %v404
    %v1191 = vunpack.c.l.b16 %v405
    %v1192 = vunpack.c.h.b16 %v405
    %v1193 = vunpack.c.l.b16 %v406
    %v1194 = vunpack.c.h.b16 %v406
    %v1195 = vunpack.c.l.b16 %v407
    %v1196 = vunpack.c.h.b16 %v407
    %v1197 = vunpack.c.l.b16 %v408
    %v1198 = vunpack.c.h.b16 %v408
    %v1199 = vunpack.c.l.b16 %v409
    %v1200 = vunpack.c.h.b16 %v409
    %v1201 = vunpack.c.l.b16 %v410
    %v1202 = vunpack.c.h.b16 %v410
    %v1203 = vunpack.c.l.b16 %v411
    %v1204 = vunpack.c.h.b16 %v411
    %v1205 = vunpack.c.l.b16 %v412
    %v1206 = vunpack.c.h.b16 %v412
    %v1207 = vunpack.c.l.b16 %v413
    %v1208 = vunpack.c.h.b16 %v413
    %v1209 = vunpack.c.l.b16 %v414
    %v1210 = vunpack.c.h.b16 %v414
    %v1211 = vunpack.c.l.b16 %v415
    %v1212 = vunpack.c.h.b16 %v415
    %v1213 = vunpack.c.l.b16 %v416
    %v1214 = vunpack.c.h.b16 %v416
    %v1215 = vunpack.c.l.b16 %v417
    %v1216 = vunpack.c.h.b16 %v417
    %v1217 = vunpack.c.l.b16 %v418
    %v1218 = vunpack.c.h.b16 %v418
    %v1219 = vunpack.c.l.b16 %v419
    %v1220 = vunpack.c.h.b16 %v419
    %v1221 = vunpack.c.l.b16 %v420
    %v1222 = vunpack.c.h.b16 %v420
    %v1223 = vunpack.c.l.b16 %v421
    %v1224 = vunpack.c.h.b16 %v421
    %v1225 = vunpack.c.l.b16 %v422
    %v1226 = vunpack.c.h.b16 %v422
    %v1227 = vpack.c.b16 %v731, %v715
    %v1228 = vpack.c.b16 %v732, %v716
    %v1229 = vpack.c.b16 %v733, %v717
    %v1230 = vpack.c.b16 %v734, %v718
    %v1231 = vpack.c.b16 %v735, %v719
    %v1232 = vpack.c.b16 %v736, %v720
    %v1233 = vpack.c.b16 %v737, %v721
    %v1234 = vpack.c.b16 %v738, %v722
    %v1235 = vpack.c.b16 %v739, %v723
    %v1236 = vpack.c.b16 %v740, %v724
    %v1237 = vpack.c.b16 %v741, %v725
    %v1238 = vpack.c.b16 %v742, %v726
    %v1239 = vpack.c.b16 %v743, %v727
    %v1240 = vpack.c.b16 %v744, %v728
    %v1241 = vpack.c.b16 %v745, %v729
    %v1242 = vpack.c.b16 %v746, %v730
    %v1243 = vpack.c.b16 %v763, %v747
    %v1244 = vpack.c.b16 %v764, %v748
    %v1245 = vpack.c.b16 %v765, %v749
    %v1246 = vpack.c.b16 %v766, %v750
    %v1247 = vpack.c.b16 %v767, %v751
    %v1248 = vpack.c.b16 %v768, %v752
    %v1249 = vpack.c.b16 %v769, %v753
    %v1250 = vpack.c.b16 %v770, %v754
    %v1251 = vpack.c.b16 %v771, %v755
    %v1252 = vpack.c.b16 %v772, %v756
    %v1253 = vpack.c.b16 %v773, %v757
    %v1254 = vpack.c.b16 %v774, %v758
    %v1255 = vpack.c.b16 %v775, %v759
    %v1256 = vpack.c.b16 %v776, %v760
    %v1257 = vpack.c.b16 %v777, %v761
    %v1258 = vpack.c.b16 %v778, %v762
    %v1259 = vpack.c.b16 %v795, %v779
    %v1260 = vpack.c.b16 %v796, %v780
    %v1261 = vpack.c.b16 %v797, %v781
    %v1262 = vpack.c.b16 %v798, %v782
    %v1263 = vpack.c.b16 %v799, %v783
    %v1264 = vpack.c.b16 %v800, %v784
    %v1265 = vpack.c.b16 %v801, %v785
    %v1266 = vpack.c.b16 %v802, %v786
    %v1267 = vpack.c.b16 %v803, %v787
    %v1268 = vpack.c.b16 %v804, %v788
    %v1269 = vpack.c.b16 %v805, %v789
    %v1270 = vpack.c.b16 %v806, %v790
    %v1271 = vpack.c.b16 %v807, %v791
    %v1272 = vpack.c.b16 %v808, %v792
    %v1273 = vpack.c.b16 %v809, %v793
    %v1274 = vpack.c.b16 %v810, %v794
    %v1275 = vpack.c.b16 %v827, %v811
    %v1276 = vpack.c.b16 %v828, %v812
    %v1277 = vpack.c.b16 %v829, %v813
    %v1278 = vpack.c.b16 %v830, %v814
    %v1279 = vpack.c.b16 %v831, %v815
    %v1280 = vpack.c.b16 %v832, %v816
    %v1281 = vpack.c.b16 %v833, %v817
    %v1282 = vpack.c.b16 %v834, %v818
    %v1283 = vpack.c.b16 %v835, %v819
    %v1284 = vpack.c.b16 %v836, %v820
    %v1285 = vpack.c.b16 %v837, %v821
    %v1286 = vpack.c.b16 %v838, %v822
    %v1287 = vpack.c.b16 %v839, %v823
    %v1288 = vpack.c.b16 %v840, %v824
    %v1289 = vpack.c.b16 %v841, %v825
    %v1290 = vpack.c.b16 %v842, %v826
    %v1291 = vpack.c.b16 %v859, %v843
    %v1292 = vpack.c.b16 %v860, %v844
    %v1293 = vpack.c.b16 %v861, %v845
    %v1294 = vpack.c.b16 %v862, %v846
    %v1295 = vpack.c.b16 %v863, %v847
    %v1296 = vpack.c.b16 %v864, %v848
    %v1297 = vpack.c.b16 %v865, %v849
    %v1298 = vpack.c.b16 %v866, %v850
    %v1299 = vpack.c.b16 %v867, %v851
    %v1300 = vpack.c.b16 %v868, %v852
    %v1301 = vpack.c.b16 %v869, %v853
    %v1302 = vpack.c.b16 %v870, %v854
    %v1303 = vpack.c.b16 %v871, %v855
    %v1304 = vpack.c.b16 %v872, %v856
    %v1305 = vpack.c.b16 %v873, %v857
    %v1306 = vpack.c.b16 %v874, %v858
    %v1307 = vpack.c.b16 %v891, %v875
    %v1308 = vpack.c.b16 %v892, %v876
    %v1309 = vpack.c.b16 %v893, %v877
    %v1310 = vpack.c.b16 %v894, %v878
    %v1311 = vpack.c.b16 %v895, %v879
    %v1312 = vpack.c.b16 %v896, %v880
    %v1313 = vpack.c.b16 %v897, %v881
    %v1314 = vpack.c.b16 %v898, %v882
    %v1315 = vpack.c.b16 %v899, %v883
    %v1316 = vpack.c.b16 %v900, %v884
    %v1317 = vpack.c.b16 %v901, %v885
    %v1318 = vpack.c.b16 %v902, %v886
    %v1319 = vpack.c.b16 %v903, %v887
    %v1320 = vpack.c.b16 %v904, %v888
    %v1321 = vpack.c.b16 %v905, %v889
    %v1322 = vpack.c.b16 %v906, %v890
    %v1323 = vpack.c.b16 %v923, %v907
    %v1324 = vpack.c.b16 %v924, %v908
    %v1325 = vpack.c.b16 %v925, %v909
    %v1326 = vpack.c.b16 %v926, %v910
    %v1327 = vpack.c.b16 %v927, %v911
    %v1328 = vpack.c.b16 %v928, %v912
    %v1329 = vpack.c.b16 %v929, %v913
    %v1330 = vpack.c.b16 %v930, %v914
    %v1331 = vpack.c.b16 %v931, %v915
    %v1332 = vpack.c.b16 %v932, %v916
    %v1333 = vpack.c.b16 %v933, %v917
    %v1334 = vpack.c.b16 %v934, %v918
    %v1335 = vpack.c.b16 %v935, %v919
    %v1336 = vpack.c.b16 %v936, %v920
    %v1337 = vpack.c.b16 %v937, %v921
    %v1338 = vpack.c.b16 %v938, %v922
    %v1339 = vpack.c.b16 %v955, %v939
    %v1340 = vpack.c.b16 %v956, %v940
    %v1341 = vpack.c.b16 %v957, %v941
    %v1342 = vpack.c.b16 %v958, %v942
    %v1343 = vpack.c.b16 %v959, %v943
    %v1344 = vpack.c.b16 %v960, %v944
    %v1345 = vpack.c.b16 %v961, %v945
    %v1346 = vpack.c.b16 %v962, %v946
    %v1347 = vpack.c.b16 %v963, %v947
    %v1348 = vpack.c.b16 %v964, %v948
    %v1349 = vpack.c.b16 %v965, %v949
    %v1350 = vpack.c.b16 %v966, %v950
    %v1351 = vpack.c.b16 %v967, %v951
    %v1352 = vpack.c.b16 %v968, %v952
    %v1353 = vpack.c.b16 %v969, %v953
    %v1354 = vpack.c.b16 %v970, %v954
    %v1355 = vpack.c.b16 %v987, %v971
    %v1356 = vpack.c.b16 %v988, %v972
    %v1357 = vpack.c.b16 %v989, %v973
    %v1358 = vpack.c.b16 %v990, %v974
    %v1359 = vpack.c.b16 %v991, %v975
    %v1360 = vpack.c.b16 %v992, %v976
    %v1361 = vpack.c.b16 %v993, %v977
    %v1362 = vpack.c.b16 %v994, %v978
    %v1363 = vpack.c.b16 %v995, %v979
    %v1364 = vpack.c.b16 %v996, %v980
    %v1365 = vpack.c.b16 %v997, %v981
    %v1366 = vpack.c.b16 %v998, %v982
    %v1367 = vpack.c.b16 %v999, %v983
    %v1368 = vpack.c.b16 %v1000, %v984
    %v1369 = vpack.c.b16 %v1001, %v985
    %v1370 = vpack.c.b16 %v1002, %v986
    %v1371 = vpack.c.b16 %v1019, %v1003
    %v1372 = vpack.c.b16 %v1020, %v1004
    %v1373 = vpack.c.b16 %v1021, %v1005
    %v1374 = vpack.c.b16 %v1022, %v1006
    %v1375 = vpack.c.b16 %v1023, %v1007
    %v1376 = vpack.c.b16 %v1024, %v1008
    %v1377 = vpack.c.b16 %v1025, %v1009
    %v1378 = vpack.c.b16 %v1026, %v1010
    %v1379 = vpack.c.b16 %v1027, %v1011
    %v1380 = vpack.c.b16 %v1028, %v1012
    %v1381 = vpack.c.b16 %v1029, %v1013
    %v1382 = vpack.c.b16 %v1030, %v1014
    %v1383 = vpack.c.b16 %v1031, %v1015
    %v1384 = vpack.c.b16 %v1032, %v1016
    %v1385 = vpack.c.b16 %v1033, %v1017
    %v1386 = vpack.c.b16 %v1034, %v1018
    %v1387 = vpack.c.b16 %v1051, %v1035
    %v1388 = vpack.c.b16 %v1052, %v1036
    %v1389 = vpack.c.b16 %v1053, %v1037
    %v1390 = vpack.c.b16 %v1054, %v1038
    %v1391 = vpack.c.b16 %v1055, %v1039
    %v1392 = vpack.c.b16 %v1056, %v1040
    %v1393 = vpack.c.b16 %v1057, %v1041
    %v1394 = vpack.c.b16 %v1058, %v1042
    %v1395 = vpack.c.b16 %v1059, %v1043
    %v1396 = vpack.c.b16 %v1060, %v1044
    %v1397 = vpack.c.b16 %v1061, %v1045
    %v1398 = vpack.c.b16 %v1062, %v1046
    %v1399 = vpack.c.b16 %v1063, %v1047
    %v1400 = vpack.c.b16 %v1064, %v1048
    %v1401 = vpack.c.b16 %v1065, %v1049
    %v1402 = vpack.c.b16 %v1066, %v1050
    %v1403 = vpack.c.b16 %v1083, %v1067
    %v1404 = vpack.c.b16 %v1084, %v1068
    %v1405 = vpack.c.b16 %v1085, %v1069
    %v1406 = vpack.c.b16 %v1086, %v1070
    %v1407 = vpack.c.b16 %v1087, %v1071
    %v1408 = vpack.c.b16 %v1088, %v1072
    %v1409 = vpack.c.b16 %v1089, %v1073
    %v1410 = vpack.c.b16 %v1090, %v1074
    %v1411 = vpack.c.b16 %v1091, %v1075
    %v1412 = vpack.c.b16 %v1092, %v1076
    %v1413 = vpack.c.b16 %v1093, %v1077
    %v1414 = vpack.c.b16 %v1094, %v1078
    %v1415 = vpack.c.b16 %v1095, %v1079
    %v1416 = vpack.c.b16 %v1096, %v1080
    %v1417 = vpack.c.b16 %v1097, %v1081
    %v1418 = vpack.c.b16 %v1098, %v1082
    %v1419 = vpack.c.b16 %v1115, %v1099
    %v1420 = vpack.c.b16 %v1116, %v1100
    %v1421 = vpack.c.b16 %v1117, %v1101
    %v1422 = vpack.c.b16 %v1118, %v1102
    %v1423 = vpack.c.b16 %v1119, %v1103
    %v1424 = vpack.c.b16 %v1120, %v1104
    %v1425 = vpack.c.b16 %v1121, %v1105
    %v1426 = vpack.c.b16 %v1122, %v1106
    %v1427 = vpack.c.b16 %v1123, %v1107
    %v1428 = vpack.c.b16 %v1124, %v1108
    %v1429 = vpack.c.b16 %v1125, %v1109
    %v1430 = vpack.c.b16 %v1126, %v1110
    %v1431 = vpack.c.b16 %v1127, %v1111
    %v1432 = vpack.c.b16 %v1128, %v1112
    %v1433 = vpack.c.b16 %v1129, %v1113
    %v1434 = vpack.c.b16 %v1130, %v1114
    %v1435 = vpack.c.b16 %v1147, %v1131
    %v1436 = vpack.c.b16 %v1148, %v1132
    %v1437 = vpack.c.b16 %v1149, %v1133
    %v1438 = vpack.c.b16 %v1150, %v1134
    %v1439 = vpack.c.b16 %v1151, %v1135
    %v1440 = vpack.c.b16 %v1152, %v1136
    %v1441 = vpack.c.b16 %v1153, %v1137
    %v1442 = vpack.c.b16 %v1154, %v1138
    %v1443 = vpack.c.b16 %v1155, %v1139
    %v1444 = vpack.c.b16 %v1156, %v1140
    %v1445 = vpack.c.b16 %v1157, %v1141
    %v1446 = vpack.c.b16 %v1158, %v1142
    %v1447 = vpack.c.b16 %v1159, %v1143
    %v1448 = vpack.c.b16 %v1160, %v1144
    %v1449 = vpack.c.b16 %v1161, %v1145
    %v1450 = vpack.c.b16 %v1162, %v1146
    %v1451 = vpack.c.b16 %v1179, %v1163
    %v1452 = vpack.c.b16 %v1180, %v1164
    %v1453 = vpack.c.b16 %v1181, %v1165
    %v1454 = vpack.c.b16 %v1182, %v1166
    %v1455 = vpack.c.b16 %v1183, %v1167
    %v1456 = vpack.c.b16 %v1184, %v1168
    %v1457 = vpack.c.b16 %v1185, %v1169
    %v1458 = vpack.c.b16 %v1186, %v1170
    %v1459 = vpack.c.b16 %v1187, %v1171
    %v1460 = vpack.c.b16 %v1188, %v1172
    %v1461 = vpack.c.b16 %v1189, %v1173
    %v1462 = vpack.c.b16 %v1190, %v1174
    %v1463 = vpack.c.b16 %v1191, %v1175
    %v1464 = vpack.c.b16 %v1192, %v1176
    %v1465 = vpack.c.b16 %v1193, %v1177
    %v1466 = vpack.c.b16 %v1194, %v1178
    %v1467 = vpack.c.b16 %v1211, %v1195
    %v1468 = vpack.c.b16 %v1212, %v1196
    %v1469 = vpack.c.b16 %v1213, %v1197
    %v1470 = vpack.c.b16 %v1214, %v1198
    %v1471 = vpack.c.b16 %v1215, %v1199
    %v1472 = vpack.c.b16 %v1216, %v1200
    %v1473 = vpack.c.b16 %v1217, %v1201
    %v1474 = vpack.c.b16 %v1218, %v1202
    %v1475 = vpack.c.b16 %v1219, %v1203
    %v1476 = vpack.c.b16 %v1220, %v1204
    %v1477 = vpack.c.b16 %v1221, %v1205
    %v1478 = vpack.c.b16 %v1222, %v1206
    %v1479 = vpack.c.b16 %v1223, %v1207
    %v1480 = vpack.c.b16 %v1224, %v1208
    %v1481 = vpack.c.b16 %v1225, %v1209
    %v1482 = vpack.c.b16 %v1226, %v1210
    %1739 = vmatpush.bf16.msra.mxu0 %v1339
    %1740 = vmatpush.bf16.msra.mxu0 %v1323
    %1741 = vmatpush.bf16.msra.mxu0 %v1307
    %1742 = vmatpush.bf16.msra.mxu0 %v1291
    %1743 = vmatpush.bf16.msra.mxu0 %v1275
    %1744 = vmatpush.bf16.msra.mxu0 %v1259
    %1745 = vmatpush.bf16.msra.mxu0 %v1243
    %1746 = vmatpush.bf16.msra.mxu0 %v1227
    %1747 = vmatmul.bf16.gmra.mxu0 %v165
    %v1748 = vpop.f32.mrf.mxu0
    %v1749 = vadd.f32 %v427, %v1748
    %v1750 = vpop.f32.mrf.mxu0
    %v1751 = vadd.f32 %v427, %v1750
    %1752 = vdwg.mxu0
    %1753 = vmatpush.bf16.msra.mxu0 %v1467
    %1754 = vmatpush.bf16.msra.mxu0 %v1451
    %1755 = vmatpush.bf16.msra.mxu0 %v1435
    %1756 = vmatpush.bf16.msra.mxu0 %v1419
    %1757 = vmatpush.bf16.msra.mxu0 %v1403
    %1758 = vmatpush.bf16.msra.mxu0 %v1387
    %1759 = vmatpush.bf16.msra.mxu0 %v1371
    %1760 = vmatpush.bf16.msra.mxu0 %v1355
    %1761 = vmatmul.bf16.gmra.mxu0 %v166
    %v1762 = vpop.f32.mrf.mxu0
    %v1763 = vadd.f32 %v1749, %v1762
    %v1764 = vpop.f32.mrf.mxu0
    %v1765 = vadd.f32 %v1751, %v1764
    %1766 = vdwg.mxu0
    %1767 = vmatpush.bf16.msra.mxu0 %v1340
    %1768 = vmatpush.bf16.msra.mxu0 %v1324
    %1769 = vmatpush.bf16.msra.mxu0 %v1308
    %1770 = vmatpush.bf16.msra.mxu0 %v1292
    %1771 = vmatpush.bf16.msra.mxu0 %v1276
    %1772 = vmatpush.bf16.msra.mxu0 %v1260
    %1773 = vmatpush.bf16.msra.mxu0 %v1244
    %1774 = vmatpush.bf16.msra.mxu0 %v1228
    %1775 = vmatmul.bf16.gmra.mxu0 %v165
    %v1776 = vpop.f32.mrf.mxu0
    %v1777 = vadd.f32 %v428, %v1776
    %v1778 = vpop.f32.mrf.mxu0
    %v1779 = vadd.f32 %v428, %v1778
    %1780 = vdwg.mxu0
    %1781 = vmatpush.bf16.msra.mxu0 %v1468
    %1782 = vmatpush.bf16.msra.mxu0 %v1452
    %1783 = vmatpush.bf16.msra.mxu0 %v1436
    %1784 = vmatpush.bf16.msra.mxu0 %v1420
    %1785 = vmatpush.bf16.msra.mxu0 %v1404
    %1786 = vmatpush.bf16.msra.mxu0 %v1388
    %1787 = vmatpush.bf16.msra.mxu0 %v1372
    %1788 = vmatpush.bf16.msra.mxu0 %v1356
    %1789 = vmatmul.bf16.gmra.mxu0 %v166
    %v1790 = vpop.f32.mrf.mxu0
    %v1791 = vadd.f32 %v1777, %v1790
    %v1792 = vpop.f32.mrf.mxu0
    %v1793 = vadd.f32 %v1779, %v1792
    %1794 = vdwg.mxu0
    %1795 = vmatpush.bf16.msra.mxu0 %v1341
    %1796 = vmatpush.bf16.msra.mxu0 %v1325
    %1797 = vmatpush.bf16.msra.mxu0 %v1309
    %1798 = vmatpush.bf16.msra.mxu0 %v1293
    %1799 = vmatpush.bf16.msra.mxu0 %v1277
    %1800 = vmatpush.bf16.msra.mxu0 %v1261
    %1801 = vmatpush.bf16.msra.mxu0 %v1245
    %1802 = vmatpush.bf16.msra.mxu0 %v1229
    %1803 = vmatmul.bf16.gmra.mxu0 %v165
    %v1804 = vpop.f32.mrf.mxu0
    %v1805 = vadd.f32 %v429, %v1804
    %v1806 = vpop.f32.mrf.mxu0
    %v1807 = vadd.f32 %v429, %v1806
    %1808 = vdwg.mxu0
    %1809 = vmatpush.bf16.msra.mxu0 %v1469
    %1810 = vmatpush.bf16.msra.mxu0 %v1453
    %1811 = vmatpush.bf16.msra.mxu0 %v1437
    %1812 = vmatpush.bf16.msra.mxu0 %v1421
    %1813 = vmatpush.bf16.msra.mxu0 %v1405
    %1814 = vmatpush.bf16.msra.mxu0 %v1389
    %1815 = vmatpush.bf16.msra.mxu0 %v1373
    %1816 = vmatpush.bf16.msra.mxu0 %v1357
    %1817 = vmatmul.bf16.gmra.mxu0 %v166
    %v1818 = vpop.f32.mrf.mxu0
    %v1819 = vadd.f32 %v1805, %v1818
    %v1820 = vpop.f32.mrf.mxu0
    %v1821 = vadd.f32 %v1807, %v1820
    %1822 = vdwg.mxu0
    %1823 = vmatpush.bf16.msra.mxu0 %v1342
    %1824 = vmatpush.bf16.msra.mxu0 %v1326
    %1825 = vmatpush.bf16.msra.mxu0 %v1310
    %1826 = vmatpush.bf16.msra.mxu0 %v1294
    %1827 = vmatpush.bf16.msra.mxu0 %v1278
    %1828 = vmatpush.bf16.msra.mxu0 %v1262
    %1829 = vmatpush.bf16.msra.mxu0 %v1246
    %1830 = vmatpush.bf16.msra.mxu0 %v1230
    %1831 = vmatmul.bf16.gmra.mxu0 %v165
    %v1832 = vpop.f32.mrf.mxu0
    %v1833 = vadd.f32 %v430, %v1832
    %v1834 = vpop.f32.mrf.mxu0
    %v1835 = vadd.f32 %v430, %v1834
    %1836 = vdwg.mxu0
    %1837 = vmatpush.bf16.msra.mxu0 %v1470
    %1838 = vmatpush.bf16.msra.mxu0 %v1454
    %1839 = vmatpush.bf16.msra.mxu0 %v1438
    %1840 = vmatpush.bf16.msra.mxu0 %v1422
    %1841 = vmatpush.bf16.msra.mxu0 %v1406
    %1842 = vmatpush.bf16.msra.mxu0 %v1390
    %1843 = vmatpush.bf16.msra.mxu0 %v1374
    %1844 = vmatpush.bf16.msra.mxu0 %v1358
    %1845 = vmatmul.bf16.gmra.mxu0 %v166
    %v1846 = vpop.f32.mrf.mxu0
    %v1847 = vadd.f32 %v1833, %v1846
    %v1848 = vpop.f32.mrf.mxu0
    %v1849 = vadd.f32 %v1835, %v1848
    %1850 = vdwg.mxu0
    %1851 = vmatpush.bf16.msra.mxu0 %v1343
    %1852 = vmatpush.bf16.msra.mxu0 %v1327
    %1853 = vmatpush.bf16.msra.mxu0 %v1311
    %1854 = vmatpush.bf16.msra.mxu0 %v1295
    %1855 = vmatpush.bf16.msra.mxu0 %v1279
    %1856 = vmatpush.bf16.msra.mxu0 %v1263
    %1857 = vmatpush.bf16.msra.mxu0 %v1247
    %1858 = vmatpush.bf16.msra.mxu0 %v1231
    %1859 = vmatmul.bf16.gmra.mxu0 %v165
    %v1860 = vpop.f32.mrf.mxu0
    %v1861 = vadd.f32 %v431, %v1860
    %v1862 = vpop.f32.mrf.mxu0
    %v1863 = vadd.f32 %v431, %v1862
    %1864 = vdwg.mxu0
    %1865 = vmatpush.bf16.msra.mxu0 %v1471
    %1866 = vmatpush.bf16.msra.mxu0 %v1455
    %1867 = vmatpush.bf16.msra.mxu0 %v1439
    %1868 = vmatpush.bf16.msra.mxu0 %v1423
    %1869 = vmatpush.bf16.msra.mxu0 %v1407
    %1870 = vmatpush.bf16.msra.mxu0 %v1391
    %1871 = vmatpush.bf16.msra.mxu0 %v1375
    %1872 = vmatpush.bf16.msra.mxu0 %v1359
    %1873 = vmatmul.bf16.gmra.mxu0 %v166
    %v1874 = vpop.f32.mrf.mxu0
    %v1875 = vadd.f32 %v1861, %v1874
    %v1876 = vpop.f32.mrf.mxu0
    %v1877 = vadd.f32 %v1863, %v1876
    %1878 = vdwg.mxu0
    %1879 = vmatpush.bf16.msra.mxu0 %v1344
    %1880 = vmatpush.bf16.msra.mxu0 %v1328
    %1881 = vmatpush.bf16.msra.mxu0 %v1312
    %1882 = vmatpush.bf16.msra.mxu0 %v1296
    %1883 = vmatpush.bf16.msra.mxu0 %v1280
    %1884 = vmatpush.bf16.msra.mxu0 %v1264
    %1885 = vmatpush.bf16.msra.mxu0 %v1248
    %1886 = vmatpush.bf16.msra.mxu0 %v1232
    %1887 = vmatmul.bf16.gmra.mxu0 %v165
    %v1888 = vpop.f32.mrf.mxu0
    %v1889 = vadd.f32 %v432, %v1888
    %v1890 = vpop.f32.mrf.mxu0
    %v1891 = vadd.f32 %v432, %v1890
    %1892 = vdwg.mxu0
    %1893 = vmatpush.bf16.msra.mxu0 %v1472
    %1894 = vmatpush.bf16.msra.mxu0 %v1456
    %1895 = vmatpush.bf16.msra.mxu0 %v1440
    %1896 = vmatpush.bf16.msra.mxu0 %v1424
    %1897 = vmatpush.bf16.msra.mxu0 %v1408
    %1898 = vmatpush.bf16.msra.mxu0 %v1392
    %1899 = vmatpush.bf16.msra.mxu0 %v1376
    %1900 = vmatpush.bf16.msra.mxu0 %v1360
    %1901 = vmatmul.bf16.gmra.mxu0 %v166
    %v1902 = vpop.f32.mrf.mxu0
    %v1903 = vadd.f32 %v1889, %v1902
    %v1904 = vpop.f32.mrf.mxu0
    %v1905 = vadd.f32 %v1891, %v1904
    %1906 = vdwg.mxu0
    %1907 = vmatpush.bf16.msra.mxu0 %v1345
    %1908 = vmatpush.bf16.msra.mxu0 %v1329
    %1909 = vmatpush.bf16.msra.mxu0 %v1313
    %1910 = vmatpush.bf16.msra.mxu0 %v1297
    %1911 = vmatpush.bf16.msra.mxu0 %v1281
    %1912 = vmatpush.bf16.msra.mxu0 %v1265
    %1913 = vmatpush.bf16.msra.mxu0 %v1249
    %1914 = vmatpush.bf16.msra.mxu0 %v1233
    %1915 = vmatmul.bf16.gmra.mxu0 %v165
    %v1916 = vpop.f32.mrf.mxu0
    %v1917 = vadd.f32 %v433, %v1916
    %v1918 = vpop.f32.mrf.mxu0
    %v1919 = vadd.f32 %v433, %v1918
    %1920 = vdwg.mxu0
    %1921 = vmatpush.bf16.msra.mxu0 %v1473
    %1922 = vmatpush.bf16.msra.mxu0 %v1457
    %1923 = vmatpush.bf16.msra.mxu0 %v1441
    %1924 = vmatpush.bf16.msra.mxu0 %v1425
    %1925 = vmatpush.bf16.msra.mxu0 %v1409
    %1926 = vmatpush.bf16.msra.mxu0 %v1393
    %1927 = vmatpush.bf16.msra.mxu0 %v1377
    %1928 = vmatpush.bf16.msra.mxu0 %v1361
    %1929 = vmatmul.bf16.gmra.mxu0 %v166
    %v1930 = vpop.f32.mrf.mxu0
    %v1931 = vadd.f32 %v1917, %v1930
    %v1932 = vpop.f32.mrf.mxu0
    %v1933 = vadd.f32 %v1919, %v1932
    %1934 = vdwg.mxu0
    %1935 = vmatpush.bf16.msra.mxu0 %v1346
    %1936 = vmatpush.bf16.msra.mxu0 %v1330
    %1937 = vmatpush.bf16.msra.mxu0 %v1314
    %1938 = vmatpush.bf16.msra.mxu0 %v1298
    %1939 = vmatpush.bf16.msra.mxu0 %v1282
    %1940 = vmatpush.bf16.msra.mxu0 %v1266
    %1941 = vmatpush.bf16.msra.mxu0 %v1250
    %1942 = vmatpush.bf16.msra.mxu0 %v1234
    %1943 = vmatmul.bf16.gmra.mxu0 %v165
    %v1944 = vpop.f32.mrf.mxu0
    %v1945 = vadd.f32 %v434, %v1944
    %v1946 = vpop.f32.mrf.mxu0
    %v1947 = vadd.f32 %v434, %v1946
    %1948 = vdwg.mxu0
    %1949 = vmatpush.bf16.msra.mxu0 %v1474
    %1950 = vmatpush.bf16.msra.mxu0 %v1458
    %1951 = vmatpush.bf16.msra.mxu0 %v1442
    %1952 = vmatpush.bf16.msra.mxu0 %v1426
    %1953 = vmatpush.bf16.msra.mxu0 %v1410
    %1954 = vmatpush.bf16.msra.mxu0 %v1394
    %1955 = vmatpush.bf16.msra.mxu0 %v1378
    %1956 = vmatpush.bf16.msra.mxu0 %v1362
    %1957 = vmatmul.bf16.gmra.mxu0 %v166
    %v1958 = vpop.f32.mrf.mxu0
    %v1959 = vadd.f32 %v1945, %v1958
    %v1960 = vpop.f32.mrf.mxu0
    %v1961 = vadd.f32 %v1947, %v1960
    %1962 = vdwg.mxu0
    %1963 = vmatpush.bf16.msra.mxu0 %v1347
    %1964 = vmatpush.bf16.msra.mxu0 %v1331
    %1965 = vmatpush.bf16.msra.mxu0 %v1315
    %1966 = vmatpush.bf16.msra.mxu0 %v1299
    %1967 = vmatpush.bf16.msra.mxu0 %v1283
    %1968 = vmatpush.bf16.msra.mxu0 %v1267
    %1969 = vmatpush.bf16.msra.mxu0 %v1251
    %1970 = vmatpush.bf16.msra.mxu0 %v1235
    %1971 = vmatmul.bf16.gmra.mxu0 %v165
    %v1972 = vpop.f32.mrf.mxu0
    %v1973 = vadd.f32 %v435, %v1972
    %v1974 = vpop.f32.mrf.mxu0
    %v1975 = vadd.f32 %v435, %v1974
    %1976 = vdwg.mxu0
    %1977 = vmatpush.bf16.msra.mxu0 %v1475
    %1978 = vmatpush.bf16.msra.mxu0 %v1459
    %1979 = vmatpush.bf16.msra.mxu0 %v1443
    %1980 = vmatpush.bf16.msra.mxu0 %v1427
    %1981 = vmatpush.bf16.msra.mxu0 %v1411
    %1982 = vmatpush.bf16.msra.mxu0 %v1395
    %1983 = vmatpush.bf16.msra.mxu0 %v1379
    %1984 = vmatpush.bf16.msra.mxu0 %v1363
    %1985 = vmatmul.bf16.gmra.mxu0 %v166
    %v1986 = vpop.f32.mrf.mxu0
    %v1987 = vadd.f32 %v1973, %v1986
    %v1988 = vpop.f32.mrf.mxu0
    %v1989 = vadd.f32 %v1975, %v1988
    %1990 = vdwg.mxu0
    %1991 = vmatpush.bf16.msra.mxu0 %v1348
    %1992 = vmatpush.bf16.msra.mxu0 %v1332
    %1993 = vmatpush.bf16.msra.mxu0 %v1316
    %1994 = vmatpush.bf16.msra.mxu0 %v1300
    %1995 = vmatpush.bf16.msra.mxu0 %v1284
    %1996 = vmatpush.bf16.msra.mxu0 %v1268
    %1997 = vmatpush.bf16.msra.mxu0 %v1252
    %1998 = vmatpush.bf16.msra.mxu0 %v1236
    %1999 = vmatmul.bf16.gmra.mxu0 %v165
    %v2000 = vpop.f32.mrf.mxu0
    %v2001 = vadd.f32 %v436, %v2000
    %v2002 = vpop.f32.mrf.mxu0
    %v2003 = vadd.f32 %v436, %v2002
    %2004 = vdwg.mxu0
    %2005 = vmatpush.bf16.msra.mxu0 %v1476
    %2006 = vmatpush.bf16.msra.mxu0 %v1460
    %2007 = vmatpush.bf16.msra.mxu0 %v1444
    %2008 = vmatpush.bf16.msra.mxu0 %v1428
    %2009 = vmatpush.bf16.msra.mxu0 %v1412
    %2010 = vmatpush.bf16.msra.mxu0 %v1396
    %2011 = vmatpush.bf16.msra.mxu0 %v1380
    %2012 = vmatpush.bf16.msra.mxu0 %v1364
    %2013 = vmatmul.bf16.gmra.mxu0 %v166
    %v2014 = vpop.f32.mrf.mxu0
    %v2015 = vadd.f32 %v2001, %v2014
    %v2016 = vpop.f32.mrf.mxu0
    %v2017 = vadd.f32 %v2003, %v2016
    %2018 = vdwg.mxu0
    %2019 = vmatpush.bf16.msra.mxu0 %v1349
    %2020 = vmatpush.bf16.msra.mxu0 %v1333
    %2021 = vmatpush.bf16.msra.mxu0 %v1317
    %2022 = vmatpush.bf16.msra.mxu0 %v1301
    %2023 = vmatpush.bf16.msra.mxu0 %v1285
    %2024 = vmatpush.bf16.msra.mxu0 %v1269
    %2025 = vmatpush.bf16.msra.mxu0 %v1253
    %2026 = vmatpush.bf16.msra.mxu0 %v1237
    %2027 = vmatmul.bf16.gmra.mxu0 %v165
    %v2028 = vpop.f32.mrf.mxu0
    %v2029 = vadd.f32 %v437, %v2028
    %v2030 = vpop.f32.mrf.mxu0
    %v2031 = vadd.f32 %v437, %v2030
    %2032 = vdwg.mxu0
    %2033 = vmatpush.bf16.msra.mxu0 %v1477
    %2034 = vmatpush.bf16.msra.mxu0 %v1461
    %2035 = vmatpush.bf16.msra.mxu0 %v1445
    %2036 = vmatpush.bf16.msra.mxu0 %v1429
    %2037 = vmatpush.bf16.msra.mxu0 %v1413
    %2038 = vmatpush.bf16.msra.mxu0 %v1397
    %2039 = vmatpush.bf16.msra.mxu0 %v1381
    %2040 = vmatpush.bf16.msra.mxu0 %v1365
    %2041 = vmatmul.bf16.gmra.mxu0 %v166
    %v2042 = vpop.f32.mrf.mxu0
    %v2043 = vadd.f32 %v2029, %v2042
    %v2044 = vpop.f32.mrf.mxu0
    %v2045 = vadd.f32 %v2031, %v2044
    %2046 = vdwg.mxu0
    %2047 = vmatpush.bf16.msra.mxu0 %v1350
    %2048 = vmatpush.bf16.msra.mxu0 %v1334
    %2049 = vmatpush.bf16.msra.mxu0 %v1318
    %2050 = vmatpush.bf16.msra.mxu0 %v1302
    %2051 = vmatpush.bf16.msra.mxu0 %v1286
    %2052 = vmatpush.bf16.msra.mxu0 %v1270
    %2053 = vmatpush.bf16.msra.mxu0 %v1254
    %2054 = vmatpush.bf16.msra.mxu0 %v1238
    %2055 = vmatmul.bf16.gmra.mxu0 %v165
    %v2056 = vpop.f32.mrf.mxu0
    %v2057 = vadd.f32 %v438, %v2056
    %v2058 = vpop.f32.mrf.mxu0
    %v2059 = vadd.f32 %v438, %v2058
    %2060 = vdwg.mxu0
    %2061 = vmatpush.bf16.msra.mxu0 %v1478
    %2062 = vmatpush.bf16.msra.mxu0 %v1462
    %2063 = vmatpush.bf16.msra.mxu0 %v1446
    %2064 = vmatpush.bf16.msra.mxu0 %v1430
    %2065 = vmatpush.bf16.msra.mxu0 %v1414
    %2066 = vmatpush.bf16.msra.mxu0 %v1398
    %2067 = vmatpush.bf16.msra.mxu0 %v1382
    %2068 = vmatpush.bf16.msra.mxu0 %v1366
    %2069 = vmatmul.bf16.gmra.mxu0 %v166
    %v2070 = vpop.f32.mrf.mxu0
    %v2071 = vadd.f32 %v2057, %v2070
    %v2072 = vpop.f32.mrf.mxu0
    %v2073 = vadd.f32 %v2059, %v2072
    %2074 = vdwg.mxu0
    %2075 = vmatpush.bf16.msra.mxu0 %v1351
    %2076 = vmatpush.bf16.msra.mxu0 %v1335
    %2077 = vmatpush.bf16.msra.mxu0 %v1319
    %2078 = vmatpush.bf16.msra.mxu0 %v1303
    %2079 = vmatpush.bf16.msra.mxu0 %v1287
    %2080 = vmatpush.bf16.msra.mxu0 %v1271
    %2081 = vmatpush.bf16.msra.mxu0 %v1255
    %2082 = vmatpush.bf16.msra.mxu0 %v1239
    %2083 = vmatmul.bf16.gmra.mxu0 %v165
    %v2084 = vpop.f32.mrf.mxu0
    %v2085 = vadd.f32 %v439, %v2084
    %v2086 = vpop.f32.mrf.mxu0
    %v2087 = vadd.f32 %v439, %v2086
    %2088 = vdwg.mxu0
    %2089 = vmatpush.bf16.msra.mxu0 %v1479
    %2090 = vmatpush.bf16.msra.mxu0 %v1463
    %2091 = vmatpush.bf16.msra.mxu0 %v1447
    %2092 = vmatpush.bf16.msra.mxu0 %v1431
    %2093 = vmatpush.bf16.msra.mxu0 %v1415
    %2094 = vmatpush.bf16.msra.mxu0 %v1399
    %2095 = vmatpush.bf16.msra.mxu0 %v1383
    %2096 = vmatpush.bf16.msra.mxu0 %v1367
    %2097 = vmatmul.bf16.gmra.mxu0 %v166
    %v2098 = vpop.f32.mrf.mxu0
    %v2099 = vadd.f32 %v2085, %v2098
    %v2100 = vpop.f32.mrf.mxu0
    %v2101 = vadd.f32 %v2087, %v2100
    %2102 = vdwg.mxu0
    %2103 = vmatpush.bf16.msra.mxu0 %v1352
    %2104 = vmatpush.bf16.msra.mxu0 %v1336
    %2105 = vmatpush.bf16.msra.mxu0 %v1320
    %2106 = vmatpush.bf16.msra.mxu0 %v1304
    %2107 = vmatpush.bf16.msra.mxu0 %v1288
    %2108 = vmatpush.bf16.msra.mxu0 %v1272
    %2109 = vmatpush.bf16.msra.mxu0 %v1256
    %2110 = vmatpush.bf16.msra.mxu0 %v1240
    %2111 = vmatmul.bf16.gmra.mxu0 %v165
    %v2112 = vpop.f32.mrf.mxu0
    %v2113 = vadd.f32 %v440, %v2112
    %v2114 = vpop.f32.mrf.mxu0
    %v2115 = vadd.f32 %v440, %v2114
    %2116 = vdwg.mxu0
    %2117 = vmatpush.bf16.msra.mxu0 %v1480
    %2118 = vmatpush.bf16.msra.mxu0 %v1464
    %2119 = vmatpush.bf16.msra.mxu0 %v1448
    %2120 = vmatpush.bf16.msra.mxu0 %v1432
    %2121 = vmatpush.bf16.msra.mxu0 %v1416
    %2122 = vmatpush.bf16.msra.mxu0 %v1400
    %2123 = vmatpush.bf16.msra.mxu0 %v1384
    %2124 = vmatpush.bf16.msra.mxu0 %v1368
    %2125 = vmatmul.bf16.gmra.mxu0 %v166
    %v2126 = vpop.f32.mrf.mxu0
    %v2127 = vadd.f32 %v2113, %v2126
    %v2128 = vpop.f32.mrf.mxu0
    %v2129 = vadd.f32 %v2115, %v2128
    %2130 = vdwg.mxu0
    %2131 = vmatpush.bf16.msra.mxu0 %v1353
    %2132 = vmatpush.bf16.msra.mxu0 %v1337
    %2133 = vmatpush.bf16.msra.mxu0 %v1321
    %2134 = vmatpush.bf16.msra.mxu0 %v1305
    %2135 = vmatpush.bf16.msra.mxu0 %v1289
    %2136 = vmatpush.bf16.msra.mxu0 %v1273
    %2137 = vmatpush.bf16.msra.mxu0 %v1257
    %2138 = vmatpush.bf16.msra.mxu0 %v1241
    %2139 = vmatmul.bf16.gmra.mxu0 %v165
    %v2140 = vpop.f32.mrf.mxu0
    %v2141 = vadd.f32 %v441, %v2140
    %v2142 = vpop.f32.mrf.mxu0
    %v2143 = vadd.f32 %v441, %v2142
    %2144 = vdwg.mxu0
    %2145 = vmatpush.bf16.msra.mxu0 %v1481
    %2146 = vmatpush.bf16.msra.mxu0 %v1465
    %2147 = vmatpush.bf16.msra.mxu0 %v1449
    %2148 = vmatpush.bf16.msra.mxu0 %v1433
    %2149 = vmatpush.bf16.msra.mxu0 %v1417
    %2150 = vmatpush.bf16.msra.mxu0 %v1401
    %2151 = vmatpush.bf16.msra.mxu0 %v1385
    %2152 = vmatpush.bf16.msra.mxu0 %v1369
    %2153 = vmatmul.bf16.gmra.mxu0 %v166
    %v2154 = vpop.f32.mrf.mxu0
    %v2155 = vadd.f32 %v2141, %v2154
    %v2156 = vpop.f32.mrf.mxu0
    %v2157 = vadd.f32 %v2143, %v2156
    %2158 = vdwg.mxu0
    %2159 = vmatpush.bf16.msra.mxu0 %v1354
    %2160 = vmatpush.bf16.msra.mxu0 %v1338
    %2161 = vmatpush.bf16.msra.mxu0 %v1322
    %2162 = vmatpush.bf16.msra.mxu0 %v1306
    %2163 = vmatpush.bf16.msra.mxu0 %v1290
    %2164 = vmatpush.bf16.msra.mxu0 %v1274
    %2165 = vmatpush.bf16.msra.mxu0 %v1258
    %2166 = vmatpush.bf16.msra.mxu0 %v1242
    %2167 = vmatmul.bf16.gmra.mxu0 %v165
    %v2168 = vpop.f32.mrf.mxu0
    %v2169 = vadd.f32 %v442, %v2168
    %v2170 = vpop.f32.mrf.mxu0
    %v2171 = vadd.f32 %v442, %v2170
    %2172 = vdwg.mxu0
    %2173 = vmatpush.bf16.msra.mxu0 %v1482
    %2174 = vmatpush.bf16.msra.mxu0 %v1466
    %2175 = vmatpush.bf16.msra.mxu0 %v1450
    %2176 = vmatpush.bf16.msra.mxu0 %v1434
    %2177 = vmatpush.bf16.msra.mxu0 %v1418
    %2178 = vmatpush.bf16.msra.mxu0 %v1402
    %2179 = vmatpush.bf16.msra.mxu0 %v1386
    %2180 = vmatpush.bf16.msra.mxu0 %v1370
    %2181 = vmatmul.bf16.gmra.mxu0 %v166
    %v2182 = vpop.f32.mrf.mxu0
    %v2183 = vadd.f32 %v2169, %v2182
    %v2184 = vpop.f32.mrf.mxu0
    %v2185 = vadd.f32 %v2171, %v2184
    %2186 = vdwg.mxu0
    %v2187 = vrot.slane %v1763, 4
    %v2188 = vmax.f32 %v1763, %v2187
    %v2189 = vrot.slane %v2188, 2
    %v2190 = vmax.f32 %v2188, %v2189
    %v2191 = vrot.slane %v2190, 1
    %v2192 = vmax.f32 %v2190, %v2191
    %v2193 = vrot.slane %v1791, 4
    %v2194 = vmax.f32 %v1791, %v2193
    %v2195 = vrot.slane %v2194, 2
    %v2196 = vmax.f32 %v2194, %v2195
    %v2197 = vrot.slane %v2196, 1
    %v2198 = vmax.f32 %v2196, %v2197
    %v2199 = vrot.slane %v1819, 4
    %v2200 = vmax.f32 %v1819, %v2199
    %v2201 = vrot.slane %v2200, 2
    %v2202 = vmax.f32 %v2200, %v2201
    %v2203 = vrot.slane %v2202, 1
    %v2204 = vmax.f32 %v2202, %v2203
    %v2205 = vrot.slane %v1847, 4
    %v2206 = vmax.f32 %v1847, %v2205
    %v2207 = vrot.slane %v2206, 2
    %v2208 = vmax.f32 %v2206, %v2207
    %v2209 = vrot.slane %v2208, 1
    %v2210 = vmax.f32 %v2208, %v2209
    %v2211 = vrot.slane %v1875, 4
    %v2212 = vmax.f32 %v1875, %v2211
    %v2213 = vrot.slane %v2212, 2
    %v2214 = vmax.f32 %v2212, %v2213
    %v2215 = vrot.slane %v2214, 1
    %v2216 = vmax.f32 %v2214, %v2215
    %v2217 = vrot.slane %v1903, 4
    %v2218 = vmax.f32 %v1903, %v2217
    %v2219 = vrot.slane %v2218, 2
    %v2220 = vmax.f32 %v2218, %v2219
    %v2221 = vrot.slane %v2220, 1
    %v2222 = vmax.f32 %v2220, %v2221
    %v2223 = vrot.slane %v1931, 4
    %v2224 = vmax.f32 %v1931, %v2223
    %v2225 = vrot.slane %v2224, 2
    %v2226 = vmax.f32 %v2224, %v2225
    %v2227 = vrot.slane %v2226, 1
    %v2228 = vmax.f32 %v2226, %v2227
    %v2229 = vrot.slane %v1959, 4
    %v2230 = vmax.f32 %v1959, %v2229
    %v2231 = vrot.slane %v2230, 2
    %v2232 = vmax.f32 %v2230, %v2231
    %v2233 = vrot.slane %v2232, 1
    %v2234 = vmax.f32 %v2232, %v2233
    %v2235 = vrot.slane %v1987, 4
    %v2236 = vmax.f32 %v1987, %v2235
    %v2237 = vrot.slane %v2236, 2
    %v2238 = vmax.f32 %v2236, %v2237
    %v2239 = vrot.slane %v2238, 1
    %v2240 = vmax.f32 %v2238, %v2239
    %v2241 = vrot.slane %v2015, 4
    %v2242 = vmax.f32 %v2015, %v2241
    %v2243 = vrot.slane %v2242, 2
    %v2244 = vmax.f32 %v2242, %v2243
    %v2245 = vrot.slane %v2244, 1
    %v2246 = vmax.f32 %v2244, %v2245
    %v2247 = vrot.slane %v2043, 4
    %v2248 = vmax.f32 %v2043, %v2247
    %v2249 = vrot.slane %v2248, 2
    %v2250 = vmax.f32 %v2248, %v2249
    %v2251 = vrot.slane %v2250, 1
    %v2252 = vmax.f32 %v2250, %v2251
    %v2253 = vrot.slane %v2071, 4
    %v2254 = vmax.f32 %v2071, %v2253
    %v2255 = vrot.slane %v2254, 2
    %v2256 = vmax.f32 %v2254, %v2255
    %v2257 = vrot.slane %v2256, 1
    %v2258 = vmax.f32 %v2256, %v2257
    %v2259 = vrot.slane %v2099, 4
    %v2260 = vmax.f32 %v2099, %v2259
    %v2261 = vrot.slane %v2260, 2
    %v2262 = vmax.f32 %v2260, %v2261
    %v2263 = vrot.slane %v2262, 1
    %v2264 = vmax.f32 %v2262, %v2263
    %v2265 = vrot.slane %v2127, 4
    %v2266 = vmax.f32 %v2127, %v2265
    %v2267 = vrot.slane %v2266, 2
    %v2268 = vmax.f32 %v2266, %v2267
    %v2269 = vrot.slane %v2268, 1
    %v2270 = vmax.f32 %v2268, %v2269
    %v2271 = vrot.slane %v2155, 4
    %v2272 = vmax.f32 %v2155, %v2271
    %v2273 = vrot.slane %v2272, 2
    %v2274 = vmax.f32 %v2272, %v2273
    %v2275 = vrot.slane %v2274, 1
    %v2276 = vmax.f32 %v2274, %v2275
    %v2277 = vrot.slane %v2183, 4
    %v2278 = vmax.f32 %v2183, %v2277
    %v2279 = vrot.slane %v2278, 2
    %v2280 = vmax.f32 %v2278, %v2279
    %v2281 = vrot.slane %v2280, 1
    %v2282 = vmax.f32 %v2280, %v2281
    %v2283 = vrot.slane %v1765, 4
    %v2284 = vmax.f32 %v1765, %v2283
    %v2285 = vrot.slane %v2284, 2
    %v2286 = vmax.f32 %v2284, %v2285
    %v2287 = vrot.slane %v2286, 1
    %v2288 = vmax.f32 %v2286, %v2287
    %v2289 = vrot.slane %v1793, 4
    %v2290 = vmax.f32 %v1793, %v2289
    %v2291 = vrot.slane %v2290, 2
    %v2292 = vmax.f32 %v2290, %v2291
    %v2293 = vrot.slane %v2292, 1
    %v2294 = vmax.f32 %v2292, %v2293
    %v2295 = vrot.slane %v1821, 4
    %v2296 = vmax.f32 %v1821, %v2295
    %v2297 = vrot.slane %v2296, 2
    %v2298 = vmax.f32 %v2296, %v2297
    %v2299 = vrot.slane %v2298, 1
    %v2300 = vmax.f32 %v2298, %v2299
    %v2301 = vrot.slane %v1849, 4
    %v2302 = vmax.f32 %v1849, %v2301
    %v2303 = vrot.slane %v2302, 2
    %v2304 = vmax.f32 %v2302, %v2303
    %v2305 = vrot.slane %v2304, 1
    %v2306 = vmax.f32 %v2304, %v2305
    %v2307 = vrot.slane %v1877, 4
    %v2308 = vmax.f32 %v1877, %v2307
    %v2309 = vrot.slane %v2308, 2
    %v2310 = vmax.f32 %v2308, %v2309
    %v2311 = vrot.slane %v2310, 1
    %v2312 = vmax.f32 %v2310, %v2311
    %v2313 = vrot.slane %v1905, 4
    %v2314 = vmax.f32 %v1905, %v2313
    %v2315 = vrot.slane %v2314, 2
    %v2316 = vmax.f32 %v2314, %v2315
    %v2317 = vrot.slane %v2316, 1
    %v2318 = vmax.f32 %v2316, %v2317
    %v2319 = vrot.slane %v1933, 4
    %v2320 = vmax.f32 %v1933, %v2319
    %v2321 = vrot.slane %v2320, 2
    %v2322 = vmax.f32 %v2320, %v2321
    %v2323 = vrot.slane %v2322, 1
    %v2324 = vmax.f32 %v2322, %v2323
    %v2325 = vrot.slane %v1961, 4
    %v2326 = vmax.f32 %v1961, %v2325
    %v2327 = vrot.slane %v2326, 2
    %v2328 = vmax.f32 %v2326, %v2327
    %v2329 = vrot.slane %v2328, 1
    %v2330 = vmax.f32 %v2328, %v2329
    %v2331 = vrot.slane %v1989, 4
    %v2332 = vmax.f32 %v1989, %v2331
    %v2333 = vrot.slane %v2332, 2
    %v2334 = vmax.f32 %v2332, %v2333
    %v2335 = vrot.slane %v2334, 1
    %v2336 = vmax.f32 %v2334, %v2335
    %v2337 = vrot.slane %v2017, 4
    %v2338 = vmax.f32 %v2017, %v2337
    %v2339 = vrot.slane %v2338, 2
    %v2340 = vmax.f32 %v2338, %v2339
    %v2341 = vrot.slane %v2340, 1
    %v2342 = vmax.f32 %v2340, %v2341
    %v2343 = vrot.slane %v2045, 4
    %v2344 = vmax.f32 %v2045, %v2343
    %v2345 = vrot.slane %v2344, 2
    %v2346 = vmax.f32 %v2344, %v2345
    %v2347 = vrot.slane %v2346, 1
    %v2348 = vmax.f32 %v2346, %v2347
    %v2349 = vrot.slane %v2073, 4
    %v2350 = vmax.f32 %v2073, %v2349
    %v2351 = vrot.slane %v2350, 2
    %v2352 = vmax.f32 %v2350, %v2351
    %v2353 = vrot.slane %v2352, 1
    %v2354 = vmax.f32 %v2352, %v2353
    %v2355 = vrot.slane %v2101, 4
    %v2356 = vmax.f32 %v2101, %v2355
    %v2357 = vrot.slane %v2356, 2
    %v2358 = vmax.f32 %v2356, %v2357
    %v2359 = vrot.slane %v2358, 1
    %v2360 = vmax.f32 %v2358, %v2359
    %v2361 = vrot.slane %v2129, 4
    %v2362 = vmax.f32 %v2129, %v2361
    %v2363 = vrot.slane %v2362, 2
    %v2364 = vmax.f32 %v2362, %v2363
    %v2365 = vrot.slane %v2364, 1
    %v2366 = vmax.f32 %v2364, %v2365
    %v2367 = vrot.slane %v2157, 4
    %v2368 = vmax.f32 %v2157, %v2367
    %v2369 = vrot.slane %v2368, 2
    %v2370 = vmax.f32 %v2368, %v2369
    %v2371 = vrot.slane %v2370, 1
    %v2372 = vmax.f32 %v2370, %v2371
    %v2373 = vrot.slane %v2185, 4
    %v2374 = vmax.f32 %v2185, %v2373
    %v2375 = vrot.slane %v2374, 2
    %v2376 = vmax.f32 %v2374, %v2375
    %v2377 = vrot.slane %v2376, 1
    %v2378 = vmax.f32 %v2376, %v2377
    %v2379 = vsub.f32 %v1763, %v2192
    %v2380 = vsub.f32 %v1791, %v2198
    %v2381 = vsub.f32 %v1819, %v2204
    %v2382 = vsub.f32 %v1847, %v2210
    %v2383 = vsub.f32 %v1875, %v2216
    %v2384 = vsub.f32 %v1903, %v2222
    %v2385 = vsub.f32 %v1931, %v2228
    %v2386 = vsub.f32 %v1959, %v2234
    %v2387 = vsub.f32 %v1987, %v2240
    %v2388 = vsub.f32 %v2015, %v2246
    %v2389 = vsub.f32 %v2043, %v2252
    %v2390 = vsub.f32 %v2071, %v2258
    %v2391 = vsub.f32 %v2099, %v2264
    %v2392 = vsub.f32 %v2127, %v2270
    %v2393 = vsub.f32 %v2155, %v2276
    %v2394 = vsub.f32 %v2183, %v2282
    %v2395 = vsub.f32 %v1765, %v2288
    %v2396 = vsub.f32 %v1793, %v2294
    %v2397 = vsub.f32 %v1821, %v2300
    %v2398 = vsub.f32 %v1849, %v2306
    %v2399 = vsub.f32 %v1877, %v2312
    %v2400 = vsub.f32 %v1905, %v2318
    %v2401 = vsub.f32 %v1933, %v2324
    %v2402 = vsub.f32 %v1961, %v2330
    %v2403 = vsub.f32 %v1989, %v2336
    %v2404 = vsub.f32 %v2017, %v2342
    %v2405 = vsub.f32 %v2045, %v2348
    %v2406 = vsub.f32 %v2073, %v2354
    %v2407 = vsub.f32 %v2101, %v2360
    %v2408 = vsub.f32 %v2129, %v2366
    %v2409 = vsub.f32 %v2157, %v2372
    %v2410 = vsub.f32 %v2185, %v2378
    %v2411 = vmul.f32 %v2379, 1.442695
    %v2412 = vpow.pop %v2411
    %v2413 = vmul.f32 %v2380, 1.442695
    %v2414 = vpow.pop %v2413
    %v2415 = vmul.f32 %v2381, 1.442695
    %v2416 = vpow.pop %v2415
    %v2417 = vmul.f32 %v2382, 1.442695
    %v2418 = vpow.pop %v2417
    %v2419 = vmul.f32 %v2383, 1.442695
    %v2420 = vpow.pop %v2419
    %v2421 = vmul.f32 %v2384, 1.442695
    %v2422 = vpow.pop %v2421
    %v2423 = vmul.f32 %v2385, 1.442695
    %v2424 = vpow.pop %v2423
    %v2425 = vmul.f32 %v2386, 1.442695
    %v2426 = vpow.pop %v2425
    %v2427 = vmul.f32 %v2387, 1.442695
    %v2428 = vpow.pop %v2427
    %v2429 = vmul.f32 %v2388, 1.442695
    %v2430 = vpow.pop %v2429
    %v2431 = vmul.f32 %v2389, 1.442695
    %v2432 = vpow.pop %v2431
    %v2433 = vmul.f32 %v2390, 1.442695
    %v2434 = vpow.pop %v2433
    %v2435 = vmul.f32 %v2391, 1.442695
    %v2436 = vpow.pop %v2435
    %v2437 = vmul.f32 %v2392, 1.442695
    %v2438 = vpow.pop %v2437
    %v2439 = vmul.f32 %v2393, 1.442695
    %v2440 = vpow.pop %v2439
    %v2441 = vmul.f32 %v2394, 1.442695
    %v2442 = vpow.pop %v2441
    %v2443 = vmul.f32 %v2395, 1.442695
    %v2444 = vpow.pop %v2443
    %v2445 = vmul.f32 %v2396, 1.442695
    %v2446 = vpow.pop %v2445
    %v2447 = vmul.f32 %v2397, 1.442695
    %v2448 = vpow.pop %v2447
    %v2449 = vmul.f32 %v2398, 1.442695
    %v2450 = vpow.pop %v2449
    %v2451 = vmul.f32 %v2399, 1.442695
    %v2452 = vpow.pop %v2451
    %v2453 = vmul.f32 %v2400, 1.442695
    %v2454 = vpow.pop %v2453
    %v2455 = vmul.f32 %v2401, 1.442695
    %v2456 = vpow.pop %v2455
    %v2457 = vmul.f32 %v2402, 1.442695
    %v2458 = vpow.pop %v2457
    %v2459 = vmul.f32 %v2403, 1.442695
    %v2460 = vpow.pop %v2459
    %v2461 = vmul.f32 %v2404, 1.442695
    %v2462 = vpow.pop %v2461
    %v2463 = vmul.f32 %v2405, 1.442695
    %v2464 = vpow.pop %v2463
    %v2465 = vmul.f32 %v2406, 1.442695
    %v2466 = vpow.pop %v2465
    %v2467 = vmul.f32 %v2407, 1.442695
    %v2468 = vpow.pop %v2467
    %v2469 = vmul.f32 %v2408, 1.442695
    %v2470 = vpow.pop %v2469
    %v2471 = vmul.f32 %v2409, 1.442695
    %v2472 = vpow.pop %v2471
    %v2473 = vmul.f32 %v2410, 1.442695
    %v2474 = vpow.pop %v2473
    %v2475 = vrot.slane %v2412, 4
    %v2476 = vadd.f32 %v2412, %v2475
    %v2477 = vrot.slane %v2476, 2
    %v2478 = vadd.f32 %v2476, %v2477
    %v2479 = vrot.slane %v2478, 1
    %v2480 = vadd.f32 %v2478, %v2479
    %v2481 = vrot.slane %v2414, 4
    %v2482 = vadd.f32 %v2414, %v2481
    %v2483 = vrot.slane %v2482, 2
    %v2484 = vadd.f32 %v2482, %v2483
    %v2485 = vrot.slane %v2484, 1
    %v2486 = vadd.f32 %v2484, %v2485
    %v2487 = vrot.slane %v2416, 4
    %v2488 = vadd.f32 %v2416, %v2487
    %v2489 = vrot.slane %v2488, 2
    %v2490 = vadd.f32 %v2488, %v2489
    %v2491 = vrot.slane %v2490, 1
    %v2492 = vadd.f32 %v2490, %v2491
    %v2493 = vrot.slane %v2418, 4
    %v2494 = vadd.f32 %v2418, %v2493
    %v2495 = vrot.slane %v2494, 2
    %v2496 = vadd.f32 %v2494, %v2495
    %v2497 = vrot.slane %v2496, 1
    %v2498 = vadd.f32 %v2496, %v2497
    %v2499 = vrot.slane %v2420, 4
    %v2500 = vadd.f32 %v2420, %v2499
    %v2501 = vrot.slane %v2500, 2
    %v2502 = vadd.f32 %v2500, %v2501
    %v2503 = vrot.slane %v2502, 1
    %v2504 = vadd.f32 %v2502, %v2503
    %v2505 = vrot.slane %v2422, 4
    %v2506 = vadd.f32 %v2422, %v2505
    %v2507 = vrot.slane %v2506, 2
    %v2508 = vadd.f32 %v2506, %v2507
    %v2509 = vrot.slane %v2508, 1
    %v2510 = vadd.f32 %v2508, %v2509
    %v2511 = vrot.slane %v2424, 4
    %v2512 = vadd.f32 %v2424, %v2511
    %v2513 = vrot.slane %v2512, 2
    %v2514 = vadd.f32 %v2512, %v2513
    %v2515 = vrot.slane %v2514, 1
    %v2516 = vadd.f32 %v2514, %v2515
    %v2517 = vrot.slane %v2426, 4
    %v2518 = vadd.f32 %v2426, %v2517
    %v2519 = vrot.slane %v2518, 2
    %v2520 = vadd.f32 %v2518, %v2519
    %v2521 = vrot.slane %v2520, 1
    %v2522 = vadd.f32 %v2520, %v2521
    %v2523 = vrot.slane %v2428, 4
    %v2524 = vadd.f32 %v2428, %v2523
    %v2525 = vrot.slane %v2524, 2
    %v2526 = vadd.f32 %v2524, %v2525
    %v2527 = vrot.slane %v2526, 1
    %v2528 = vadd.f32 %v2526, %v2527
    %v2529 = vrot.slane %v2430, 4
    %v2530 = vadd.f32 %v2430, %v2529
    %v2531 = vrot.slane %v2530, 2
    %v2532 = vadd.f32 %v2530, %v2531
    %v2533 = vrot.slane %v2532, 1
    %v2534 = vadd.f32 %v2532, %v2533
    %v2535 = vrot.slane %v2432, 4
    %v2536 = vadd.f32 %v2432, %v2535
    %v2537 = vrot.slane %v2536, 2
    %v2538 = vadd.f32 %v2536, %v2537
    %v2539 = vrot.slane %v2538, 1
    %v2540 = vadd.f32 %v2538, %v2539
    %v2541 = vrot.slane %v2434, 4
    %v2542 = vadd.f32 %v2434, %v2541
    %v2543 = vrot.slane %v2542, 2
    %v2544 = vadd.f32 %v2542, %v2543
    %v2545 = vrot.slane %v2544, 1
    %v2546 = vadd.f32 %v2544, %v2545
    %v2547 = vrot.slane %v2436, 4
    %v2548 = vadd.f32 %v2436, %v2547
    %v2549 = vrot.slane %v2548, 2
    %v2550 = vadd.f32 %v2548, %v2549
    %v2551 = vrot.slane %v2550, 1
    %v2552 = vadd.f32 %v2550, %v2551
    %v2553 = vrot.slane %v2438, 4
    %v2554 = vadd.f32 %v2438, %v2553
    %v2555 = vrot.slane %v2554, 2
    %v2556 = vadd.f32 %v2554, %v2555
    %v2557 = vrot.slane %v2556, 1
    %v2558 = vadd.f32 %v2556, %v2557
    %v2559 = vrot.slane %v2440, 4
    %v2560 = vadd.f32 %v2440, %v2559
    %v2561 = vrot.slane %v2560, 2
    %v2562 = vadd.f32 %v2560, %v2561
    %v2563 = vrot.slane %v2562, 1
    %v2564 = vadd.f32 %v2562, %v2563
    %v2565 = vrot.slane %v2442, 4
    %v2566 = vadd.f32 %v2442, %v2565
    %v2567 = vrot.slane %v2566, 2
    %v2568 = vadd.f32 %v2566, %v2567
    %v2569 = vrot.slane %v2568, 1
    %v2570 = vadd.f32 %v2568, %v2569
    %v2571 = vrot.slane %v2444, 4
    %v2572 = vadd.f32 %v2444, %v2571
    %v2573 = vrot.slane %v2572, 2
    %v2574 = vadd.f32 %v2572, %v2573
    %v2575 = vrot.slane %v2574, 1
    %v2576 = vadd.f32 %v2574, %v2575
    %v2577 = vrot.slane %v2446, 4
    %v2578 = vadd.f32 %v2446, %v2577
    %v2579 = vrot.slane %v2578, 2
    %v2580 = vadd.f32 %v2578, %v2579
    %v2581 = vrot.slane %v2580, 1
    %v2582 = vadd.f32 %v2580, %v2581
    %v2583 = vrot.slane %v2448, 4
    %v2584 = vadd.f32 %v2448, %v2583
    %v2585 = vrot.slane %v2584, 2
    %v2586 = vadd.f32 %v2584, %v2585
    %v2587 = vrot.slane %v2586, 1
    %v2588 = vadd.f32 %v2586, %v2587
    %v2589 = vrot.slane %v2450, 4
    %v2590 = vadd.f32 %v2450, %v2589
    %v2591 = vrot.slane %v2590, 2
    %v2592 = vadd.f32 %v2590, %v2591
    %v2593 = vrot.slane %v2592, 1
    %v2594 = vadd.f32 %v2592, %v2593
    %v2595 = vrot.slane %v2452, 4
    %v2596 = vadd.f32 %v2452, %v2595
    %v2597 = vrot.slane %v2596, 2
    %v2598 = vadd.f32 %v2596, %v2597
    %v2599 = vrot.slane %v2598, 1
    %v2600 = vadd.f32 %v2598, %v2599
    %v2601 = vrot.slane %v2454, 4
    %v2602 = vadd.f32 %v2454, %v2601
    %v2603 = vrot.slane %v2602, 2
    %v2604 = vadd.f32 %v2602, %v2603
    %v2605 = vrot.slane %v2604, 1
    %v2606 = vadd.f32 %v2604, %v2605
    %v2607 = vrot.slane %v2456, 4
    %v2608 = vadd.f32 %v2456, %v2607
    %v2609 = vrot.slane %v2608, 2
    %v2610 = vadd.f32 %v2608, %v2609
    %v2611 = vrot.slane %v2610, 1
    %v2612 = vadd.f32 %v2610, %v2611
    %v2613 = vrot.slane %v2458, 4
    %v2614 = vadd.f32 %v2458, %v2613
    %v2615 = vrot.slane %v2614, 2
    %v2616 = vadd.f32 %v2614, %v2615
    %v2617 = vrot.slane %v2616, 1
    %v2618 = vadd.f32 %v2616, %v2617
    %v2619 = vrot.slane %v2460, 4
    %v2620 = vadd.f32 %v2460, %v2619
    %v2621 = vrot.slane %v2620, 2
    %v2622 = vadd.f32 %v2620, %v2621
    %v2623 = vrot.slane %v2622, 1
    %v2624 = vadd.f32 %v2622, %v2623
    %v2625 = vrot.slane %v2462, 4
    %v2626 = vadd.f32 %v2462, %v2625
    %v2627 = vrot.slane %v2626, 2
    %v2628 = vadd.f32 %v2626, %v2627
    %v2629 = vrot.slane %v2628, 1
    %v2630 = vadd.f32 %v2628, %v2629
    %v2631 = vrot.slane %v2464, 4
    %v2632 = vadd.f32 %v2464, %v2631
    %v2633 = vrot.slane %v2632, 2
    %v2634 = vadd.f32 %v2632, %v2633
    %v2635 = vrot.slane %v2634, 1
    %v2636 = vadd.f32 %v2634, %v2635
    %v2637 = vrot.slane %v2466, 4
    %v2638 = vadd.f32 %v2466, %v2637
    %v2639 = vrot.slane %v2638, 2
    %v2640 = vadd.f32 %v2638, %v2639
    %v2641 = vrot.slane %v2640, 1
    %v2642 = vadd.f32 %v2640, %v2641
    %v2643 = vrot.slane %v2468, 4
    %v2644 = vadd.f32 %v2468, %v2643
    %v2645 = vrot.slane %v2644, 2
    %v2646 = vadd.f32 %v2644, %v2645
    %v2647 = vrot.slane %v2646, 1
    %v2648 = vadd.f32 %v2646, %v2647
    %v2649 = vrot.slane %v2470, 4
    %v2650 = vadd.f32 %v2470, %v2649
    %v2651 = vrot.slane %v2650, 2
    %v2652 = vadd.f32 %v2650, %v2651
    %v2653 = vrot.slane %v2652, 1
    %v2654 = vadd.f32 %v2652, %v2653
    %v2655 = vrot.slane %v2472, 4
    %v2656 = vadd.f32 %v2472, %v2655
    %v2657 = vrot.slane %v2656, 2
    %v2658 = vadd.f32 %v2656, %v2657
    %v2659 = vrot.slane %v2658, 1
    %v2660 = vadd.f32 %v2658, %v2659
    %v2661 = vrot.slane %v2474, 4
    %v2662 = vadd.f32 %v2474, %v2661
    %v2663 = vrot.slane %v2662, 2
    %v2664 = vadd.f32 %v2662, %v2663
    %v2665 = vrot.slane %v2664, 1
    %v2666 = vadd.f32 %v2664, %v2665
    %v2667 = vrcp.pop %v2480
    %v2668 = vrcp.pop %v2486
    %v2669 = vrcp.pop %v2492
    %v2670 = vrcp.pop %v2498
    %v2671 = vrcp.pop %v2504
    %v2672 = vrcp.pop %v2510
    %v2673 = vrcp.pop %v2516
    %v2674 = vrcp.pop %v2522
    %v2675 = vrcp.pop %v2528
    %v2676 = vrcp.pop %v2534
    %v2677 = vrcp.pop %v2540
    %v2678 = vrcp.pop %v2546
    %v2679 = vrcp.pop %v2552
    %v2680 = vrcp.pop %v2558
    %v2681 = vrcp.pop %v2564
    %v2682 = vrcp.pop %v2570
    %v2683 = vrcp.pop %v2576
    %v2684 = vrcp.pop %v2582
    %v2685 = vrcp.pop %v2588
    %v2686 = vrcp.pop %v2594
    %v2687 = vrcp.pop %v2600
    %v2688 = vrcp.pop %v2606
    %v2689 = vrcp.pop %v2612
    %v2690 = vrcp.pop %v2618
    %v2691 = vrcp.pop %v2624
    %v2692 = vrcp.pop %v2630
    %v2693 = vrcp.pop %v2636
    %v2694 = vrcp.pop %v2642
    %v2695 = vrcp.pop %v2648
    %v2696 = vrcp.pop %v2654
    %v2697 = vrcp.pop %v2660
    %v2698 = vrcp.pop %v2666
    %v2699 = vmul.f32 %v2412, %v2667
    %v2700 = vmul.f32 %v2414, %v2668
    %v2701 = vmul.f32 %v2416, %v2669
    %v2702 = vmul.f32 %v2418, %v2670
    %v2703 = vmul.f32 %v2420, %v2671
    %v2704 = vmul.f32 %v2422, %v2672
    %v2705 = vmul.f32 %v2424, %v2673
    %v2706 = vmul.f32 %v2426, %v2674
    %v2707 = vmul.f32 %v2428, %v2675
    %v2708 = vmul.f32 %v2430, %v2676
    %v2709 = vmul.f32 %v2432, %v2677
    %v2710 = vmul.f32 %v2434, %v2678
    %v2711 = vmul.f32 %v2436, %v2679
    %v2712 = vmul.f32 %v2438, %v2680
    %v2713 = vmul.f32 %v2440, %v2681
    %v2714 = vmul.f32 %v2442, %v2682
    %v2715 = vmul.f32 %v2444, %v2683
    %v2716 = vmul.f32 %v2446, %v2684
    %v2717 = vmul.f32 %v2448, %v2685
    %v2718 = vmul.f32 %v2450, %v2686
    %v2719 = vmul.f32 %v2452, %v2687
    %v2720 = vmul.f32 %v2454, %v2688
    %v2721 = vmul.f32 %v2456, %v2689
    %v2722 = vmul.f32 %v2458, %v2690
    %v2723 = vmul.f32 %v2460, %v2691
    %v2724 = vmul.f32 %v2462, %v2692
    %v2725 = vmul.f32 %v2464, %v2693
    %v2726 = vmul.f32 %v2466, %v2694
    %v2727 = vmul.f32 %v2468, %v2695
    %v2728 = vmul.f32 %v2470, %v2696
    %v2729 = vmul.f32 %v2472, %v2697
    %v2730 = vmul.f32 %v2474, %v2698
    %v2731 = vpack.c.bf16 %v2715, %v2699
    %v2732 = vpack.c.bf16 %v2716, %v2700
    %v2733 = vpack.c.bf16 %v2717, %v2701
    %v2734 = vpack.c.bf16 %v2718, %v2702
    %v2735 = vpack.c.bf16 %v2719, %v2703
    %v2736 = vpack.c.bf16 %v2720, %v2704
    %v2737 = vpack.c.bf16 %v2721, %v2705
    %v2738 = vpack.c.bf16 %v2722, %v2706
    %v2739 = vpack.c.bf16 %v2723, %v2707
    %v2740 = vpack.c.bf16 %v2724, %v2708
    %v2741 = vpack.c.bf16 %v2725, %v2709
    %v2742 = vpack.c.bf16 %v2726, %v2710
    %v2743 = vpack.c.bf16 %v2727, %v2711
    %v2744 = vpack.c.bf16 %v2728, %v2712
    %v2745 = vpack.c.bf16 %v2729, %v2713
    %v2746 = vpack.c.bf16 %v2730, %v2714
    %v2747 = vld [vmem:[%s5] sm:$0xf]
    %v2748 = vld [vmem:[%s5 + $0x4] sm:$0xf]
    %v2749 = vld [vmem:[%s5 + $0x8] sm:$0xf]
    %v2750 = vld [vmem:[%s5 + $0xc] sm:$0xf]
    %v2751 = vld [vmem:[%s5 + $0x10] sm:$0xf]
    %v2752 = vld [vmem:[%s5 + $0x14] sm:$0xf]
    %v2753 = vld [vmem:[%s5 + $0x18] sm:$0xf]
    %v2754 = vld [vmem:[%s5 + $0x1c] sm:$0xf]
    %v2755 = vld [vmem:[%s5 + $0x20] sm:$0xf]
    %v2756 = vld [vmem:[%s5 + $0x24] sm:$0xf]
    %v2757 = vld [vmem:[%s5 + $0x28] sm:$0xf]
    %v2758 = vld [vmem:[%s5 + $0x2c] sm:$0xf]
    %v2759 = vld [vmem:[%s5 + $0x30] sm:$0xf]
    %v2760 = vld [vmem:[%s5 + $0x34] sm:$0xf]
    %v2761 = vld [vmem:[%s5 + $0x38] sm:$0xf]
    %v2762 = vld [vmem:[%s5 + $0x3c] sm:$0xf]
    %v2763 = vld [vmem:[%s5 + $0x40] sm:$0xf]
    %v2764 = vld [vmem:[%s5 + $0x44] sm:$0xf]
    %v2765 = vld [vmem:[%s5 + $0x48] sm:$0xf]
    %v2766 = vld [vmem:[%s5 + $0x4c] sm:$0xf]
    %v2767 = vld [vmem:[%s5 + $0x50] sm:$0xf]
    %v2768 = vld [vmem:[%s5 + $0x54] sm:$0xf]
    %v2769 = vld [vmem:[%s5 + $0x58] sm:$0xf]
    %v2770 = vld [vmem:[%s5 + $0x5c] sm:$0xf]
    %v2771 = vld [vmem:[%s5 + $0x60] sm:$0xf]
    %v2772 = vld [vmem:[%s5 + $0x64] sm:$0xf]
    %v2773 = vld [vmem:[%s5 + $0x68] sm:$0xf]
    %v2774 = vld [vmem:[%s5 + $0x6c] sm:$0xf]
    %v2775 = vld [vmem:[%s5 + $0x70] sm:$0xf]
    %v2776 = vld [vmem:[%s5 + $0x74] sm:$0xf]
    %v2777 = vld [vmem:[%s5 + $0x78] sm:$0xf]
    %v2778 = vld [vmem:[%s5 + $0x7c] sm:$0xf]
    %v2779 = vld [vmem:[%s5 + $0x80] sm:$0xf]
    %v2780 = vld [vmem:[%s5 + $0x84] sm:$0xf]
    %v2781 = vld [vmem:[%s5 + $0x88] sm:$0xf]
    %v2782 = vld [vmem:[%s5 + $0x8c] sm:$0xf]
    %v2783 = vld [vmem:[%s5 + $0x90] sm:$0xf]
    %v2784 = vld [vmem:[%s5 + $0x94] sm:$0xf]
    %v2785 = vld [vmem:[%s5 + $0x98] sm:$0xf]
    %v2786 = vld [vmem:[%s5 + $0x9c] sm:$0xf]
    %v2787 = vld [vmem:[%s5 + $0xa0] sm:$0xf]
    %v2788 = vld [vmem:[%s5 + $0xa4] sm:$0xf]
    %v2789 = vld [vmem:[%s5 + $0xa8] sm:$0xf]
    %v2790 = vld [vmem:[%s5 + $0xac] sm:$0xf]
    %v2791 = vld [vmem:[%s5 + $0xb0] sm:$0xf]
    %v2792 = vld [vmem:[%s5 + $0xb4] sm:$0xf]
    %v2793 = vld [vmem:[%s5 + $0xb8] sm:$0xf]
    %v2794 = vld [vmem:[%s5 + $0xbc] sm:$0xf]
    %v2795 = vld [vmem:[%s5 + $0xc0] sm:$0xf]
    %v2796 = vld [vmem:[%s5 + $0xc4] sm:$0xf]
    %v2797 = vld [vmem:[%s5 + $0xc8] sm:$0xf]
    %v2798 = vld [vmem:[%s5 + $0xcc] sm:$0xf]
    %v2799 = vld [vmem:[%s5 + $0xd0] sm:$0xf]
    %v2800 = vld [vmem:[%s5 + $0xd4] sm:$0xf]
    %v2801 = vld [vmem:[%s5 + $0xd8] sm:$0xf]
    %v2802 = vld [vmem:[%s5 + $0xdc] sm:$0xf]
    %v2803 = vld [vmem:[%s5 + $0xe0] sm:$0xf]
    %v2804 = vld [vmem:[%s5 + $0xe4] sm:$0xf]
    %v2805 = vld [vmem:[%s5 + $0xe8] sm:$0xf]
    %v2806 = vld [vmem:[%s5 + $0xec] sm:$0xf]
    %v2807 = vld [vmem:[%s5 + $0xf0] sm:$0xf]
    %v2808 = vld [vmem:[%s5 + $0xf4] sm:$0xf]
    %v2809 = vld [vmem:[%s5 + $0xf8] sm:$0xf]
    %v2810 = vld [vmem:[%s5 + $0xfc] sm:$0xf]
    %v2811 = vld [vmem:[%s5 + $0x100] sm:$0xf]
    %v2812 = vld [vmem:[%s5 + $0x104] sm:$0xf]
    %v2813 = vld [vmem:[%s5 + $0x108] sm:$0xf]
    %v2814 = vld [vmem:[%s5 + $0x10c] sm:$0xf]
    %v2815 = vld [vmem:[%s5 + $0x110] sm:$0xf]
    %v2816 = vld [vmem:[%s5 + $0x114] sm:$0xf]
    %v2817 = vld [vmem:[%s5 + $0x118] sm:$0xf]
    %v2818 = vld [vmem:[%s5 + $0x11c] sm:$0xf]
    %v2819 = vld [vmem:[%s5 + $0x120] sm:$0xf]
    %v2820 = vld [vmem:[%s5 + $0x124] sm:$0xf]
    %v2821 = vld [vmem:[%s5 + $0x128] sm:$0xf]
    %v2822 = vld [vmem:[%s5 + $0x12c] sm:$0xf]
    %v2823 = vld [vmem:[%s5 + $0x130] sm:$0xf]
    %v2824 = vld [vmem:[%s5 + $0x134] sm:$0xf]
    %v2825 = vld [vmem:[%s5 + $0x138] sm:$0xf]
    %v2826 = vld [vmem:[%s5 + $0x13c] sm:$0xf]
    %v2827 = vld [vmem:[%s5 + $0x140] sm:$0xf]
    %v2828 = vld [vmem:[%s5 + $0x144] sm:$0xf]
    %v2829 = vld [vmem:[%s5 + $0x148] sm:$0xf]
    %v2830 = vld [vmem:[%s5 + $0x14c] sm:$0xf]
    %v2831 = vld [vmem:[%s5 + $0x150] sm:$0xf]
    %v2832 = vld [vmem:[%s5 + $0x154] sm:$0xf]
    %v2833 = vld [vmem:[%s5 + $0x158] sm:$0xf]
    %v2834 = vld [vmem:[%s5 + $0x15c] sm:$0xf]
    %v2835 = vld [vmem:[%s5 + $0x160] sm:$0xf]
    %v2836 = vld [vmem:[%s5 + $0x164] sm:$0xf]
    %v2837 = vld [vmem:[%s5 + $0x168] sm:$0xf]
    %v2838 = vld [vmem:[%s5 + $0x16c] sm:$0xf]
    %v2839 = vld [vmem:[%s5 + $0x170] sm:$0xf]
    %v2840 = vld [vmem:[%s5 + $0x174] sm:$0xf]
    %v2841 = vld [vmem:[%s5 + $0x178] sm:$0xf]
    %v2842 = vld [vmem:[%s5 + $0x17c] sm:$0xf]
    %v2843 = vld [vmem:[%s5 + $0x180] sm:$0xf]
    %v2844 = vld [vmem:[%s5 + $0x184] sm:$0xf]
    %v2845 = vld [vmem:[%s5 + $0x188] sm:$0xf]
    %v2846 = vld [vmem:[%s5 + $0x18c] sm:$0xf]
    %v2847 = vld [vmem:[%s5 + $0x190] sm:$0xf]
    %v2848 = vld [vmem:[%s5 + $0x194] sm:$0xf]
    %v2849 = vld [vmem:[%s5 + $0x198] sm:$0xf]
    %v2850 = vld [vmem:[%s5 + $0x19c] sm:$0xf]
    %v2851 = vld [vmem:[%s5 + $0x1a0] sm:$0xf]
    %v2852 = vld [vmem:[%s5 + $0x1a4] sm:$0xf]
    %v2853 = vld [vmem:[%s5 + $0x1a8] sm:$0xf]
    %v2854 = vld [vmem:[%s5 + $0x1ac] sm:$0xf]
    %v2855 = vld [vmem:[%s5 + $0x1b0] sm:$0xf]
    %v2856 = vld [vmem:[%s5 + $0x1b4] sm:$0xf]
    %v2857 = vld [vmem:[%s5 + $0x1b8] sm:$0xf]
    %v2858 = vld [vmem:[%s5 + $0x1bc] sm:$0xf]
    %v2859 = vld [vmem:[%s5 + $0x1c0] sm:$0xf]
    %v2860 = vld [vmem:[%s5 + $0x1c4] sm:$0xf]
    %v2861 = vld [vmem:[%s5 + $0x1c8] sm:$0xf]
    %v2862 = vld [vmem:[%s5 + $0x1cc] sm:$0xf]
    %v2863 = vld [vmem:[%s5 + $0x1d0] sm:$0xf]
    %v2864 = vld [vmem:[%s5 + $0x1d4] sm:$0xf]
    %v2865 = vld [vmem:[%s5 + $0x1d8] sm:$0xf]
    %v2866 = vld [vmem:[%s5 + $0x1dc] sm:$0xf]
    %v2867 = vld [vmem:[%s5 + $0x1e0] sm:$0xf]
    %v2868 = vld [vmem:[%s5 + $0x1e4] sm:$0xf]
    %v2869 = vld [vmem:[%s5 + $0x1e8] sm:$0xf]
    %v2870 = vld [vmem:[%s5 + $0x1ec] sm:$0xf]
    %v2871 = vld [vmem:[%s5 + $0x1f0] sm:$0xf]
    %v2872 = vld [vmem:[%s5 + $0x1f4] sm:$0xf]
    %v2873 = vld [vmem:[%s5 + $0x1f8] sm:$0xf]
    %v2874 = vld [vmem:[%s5 + $0x1fc] sm:$0xf]
    %v2875 = vld [vmem:[%s5 + $0x200] sm:$0xf]
    %v2876 = vld [vmem:[%s5 + $0x204] sm:$0xf]
    %v2877 = vld [vmem:[%s5 + $0x208] sm:$0xf]
    %v2878 = vld [vmem:[%s5 + $0x20c] sm:$0xf]
    %v2879 = vld [vmem:[%s5 + $0x210] sm:$0xf]
    %v2880 = vld [vmem:[%s5 + $0x214] sm:$0xf]
    %v2881 = vld [vmem:[%s5 + $0x218] sm:$0xf]
    %v2882 = vld [vmem:[%s5 + $0x21c] sm:$0xf]
    %v2883 = vld [vmem:[%s5 + $0x220] sm:$0xf]
    %v2884 = vld [vmem:[%s5 + $0x224] sm:$0xf]
    %v2885 = vld [vmem:[%s5 + $0x228] sm:$0xf]
    %v2886 = vld [vmem:[%s5 + $0x22c] sm:$0xf]
    %v2887 = vld [vmem:[%s5 + $0x230] sm:$0xf]
    %v2888 = vld [vmem:[%s5 + $0x234] sm:$0xf]
    %v2889 = vld [vmem:[%s5 + $0x238] sm:$0xf]
    %v2890 = vld [vmem:[%s5 + $0x23c] sm:$0xf]
    %v2891 = vld [vmem:[%s5 + $0x240] sm:$0xf]
    %v2892 = vld [vmem:[%s5 + $0x244] sm:$0xf]
    %v2893 = vld [vmem:[%s5 + $0x248] sm:$0xf]
    %v2894 = vld [vmem:[%s5 + $0x24c] sm:$0xf]
    %v2895 = vld [vmem:[%s5 + $0x250] sm:$0xf]
    %v2896 = vld [vmem:[%s5 + $0x254] sm:$0xf]
    %v2897 = vld [vmem:[%s5 + $0x258] sm:$0xf]
    %v2898 = vld [vmem:[%s5 + $0x25c] sm:$0xf]
    %v2899 = vld [vmem:[%s5 + $0x260] sm:$0xf]
    %v2900 = vld [vmem:[%s5 + $0x264] sm:$0xf]
    %v2901 = vld [vmem:[%s5 + $0x268] sm:$0xf]
    %v2902 = vld [vmem:[%s5 + $0x26c] sm:$0xf]
    %v2903 = vld [vmem:[%s5 + $0x270] sm:$0xf]
    %v2904 = vld [vmem:[%s5 + $0x274] sm:$0xf]
    %v2905 = vld [vmem:[%s5 + $0x278] sm:$0xf]
    %v2906 = vld [vmem:[%s5 + $0x27c] sm:$0xf]
    %v2907 = vld [vmem:[%s5 + $0x280] sm:$0xf]
    %v2908 = vld [vmem:[%s5 + $0x284] sm:$0xf]
    %v2909 = vld [vmem:[%s5 + $0x288] sm:$0xf]
    %v2910 = vld [vmem:[%s5 + $0x28c] sm:$0xf]
    %v2911 = vld [vmem:[%s5 + $0x290] sm:$0xf]
    %v2912 = vld [vmem:[%s5 + $0x294] sm:$0xf]
    %v2913 = vld [vmem:[%s5 + $0x298] sm:$0xf]
    %v2914 = vld [vmem:[%s5 + $0x29c] sm:$0xf]
    %v2915 = vld [vmem:[%s5 + $0x2a0] sm:$0xf]
    %v2916 = vld [vmem:[%s5 + $0x2a4] sm:$0xf]
    %v2917 = vld [vmem:[%s5 + $0x2a8] sm:$0xf]
    %v2918 = vld [vmem:[%s5 + $0x2ac] sm:$0xf]
    %v2919 = vld [vmem:[%s5 + $0x2b0] sm:$0xf]
    %v2920 = vld [vmem:[%s5 + $0x2b4] sm:$0xf]
    %v2921 = vld [vmem:[%s5 + $0x2b8] sm:$0xf]
    %v2922 = vld [vmem:[%s5 + $0x2bc] sm:$0xf]
    %v2923 = vld [vmem:[%s5 + $0x2c0] sm:$0xf]
    %v2924 = vld [vmem:[%s5 + $0x2c4] sm:$0xf]
    %v2925 = vld [vmem:[%s5 + $0x2c8] sm:$0xf]
    %v2926 = vld [vmem:[%s5 + $0x2cc] sm:$0xf]
    %v2927 = vld [vmem:[%s5 + $0x2d0] sm:$0xf]
    %v2928 = vld [vmem:[%s5 + $0x2d4] sm:$0xf]
    %v2929 = vld [vmem:[%s5 + $0x2d8] sm:$0xf]
    %v2930 = vld [vmem:[%s5 + $0x2dc] sm:$0xf]
    %v2931 = vld [vmem:[%s5 + $0x2e0] sm:$0xf]
    %v2932 = vld [vmem:[%s5 + $0x2e4] sm:$0xf]
    %v2933 = vld [vmem:[%s5 + $0x2e8] sm:$0xf]
    %v2934 = vld [vmem:[%s5 + $0x2ec] sm:$0xf]
    %v2935 = vld [vmem:[%s5 + $0x2f0] sm:$0xf]
    %v2936 = vld [vmem:[%s5 + $0x2f4] sm:$0xf]
    %v2937 = vld [vmem:[%s5 + $0x2f8] sm:$0xf]
    %v2938 = vld [vmem:[%s5 + $0x2fc] sm:$0xf]
    %v2939 = vld [vmem:[%s5 + $0x300] sm:$0xf]
    %v2940 = vld [vmem:[%s5 + $0x304] sm:$0xf]
    %v2941 = vld [vmem:[%s5 + $0x308] sm:$0xf]
    %v2942 = vld [vmem:[%s5 + $0x30c] sm:$0xf]
    %v2943 = vld [vmem:[%s5 + $0x310] sm:$0xf]
    %v2944 = vld [vmem:[%s5 + $0x314] sm:$0xf]
    %v2945 = vld [vmem:[%s5 + $0x318] sm:$0xf]
    %v2946 = vld [vmem:[%s5 + $0x31c] sm:$0xf]
    %v2947 = vld [vmem:[%s5 + $0x320] sm:$0xf]
    %v2948 = vld [vmem:[%s5 + $0x324] sm:$0xf]
    %v2949 = vld [vmem:[%s5 + $0x328] sm:$0xf]
    %v2950 = vld [vmem:[%s5 + $0x32c] sm:$0xf]
    %v2951 = vld [vmem:[%s5 + $0x330] sm:$0xf]
    %v2952 = vld [vmem:[%s5 + $0x334] sm:$0xf]
    %v2953 = vld [vmem:[%s5 + $0x338] sm:$0xf]
    %v2954 = vld [vmem:[%s5 + $0x33c] sm:$0xf]
    %v2955 = vld [vmem:[%s5 + $0x340] sm:$0xf]
    %v2956 = vld [vmem:[%s5 + $0x344] sm:$0xf]
    %v2957 = vld [vmem:[%s5 + $0x348] sm:$0xf]
    %v2958 = vld [vmem:[%s5 + $0x34c] sm:$0xf]
    %v2959 = vld [vmem:[%s5 + $0x350] sm:$0xf]
    %v2960 = vld [vmem:[%s5 + $0x354] sm:$0xf]
    %v2961 = vld [vmem:[%s5 + $0x358] sm:$0xf]
    %v2962 = vld [vmem:[%s5 + $0x35c] sm:$0xf]
    %v2963 = vld [vmem:[%s5 + $0x360] sm:$0xf]
    %v2964 = vld [vmem:[%s5 + $0x364] sm:$0xf]
    %v2965 = vld [vmem:[%s5 + $0x368] sm:$0xf]
    %v2966 = vld [vmem:[%s5 + $0x36c] sm:$0xf]
    %v2967 = vld [vmem:[%s5 + $0x370] sm:$0xf]
    %v2968 = vld [vmem:[%s5 + $0x374] sm:$0xf]
    %v2969 = vld [vmem:[%s5 + $0x378] sm:$0xf]
    %v2970 = vld [vmem:[%s5 + $0x37c] sm:$0xf]
    %v2971 = vld [vmem:[%s5 + $0x380] sm:$0xf]
    %v2972 = vld [vmem:[%s5 + $0x384] sm:$0xf]
    %v2973 = vld [vmem:[%s5 + $0x388] sm:$0xf]
    %v2974 = vld [vmem:[%s5 + $0x38c] sm:$0xf]
    %v2975 = vld [vmem:[%s5 + $0x390] sm:$0xf]
    %v2976 = vld [vmem:[%s5 + $0x394] sm:$0xf]
    %v2977 = vld [vmem:[%s5 + $0x398] sm:$0xf]
    %v2978 = vld [vmem:[%s5 + $0x39c] sm:$0xf]
    %v2979 = vld [vmem:[%s5 + $0x3a0] sm:$0xf]
    %v2980 = vld [vmem:[%s5 + $0x3a4] sm:$0xf]
    %v2981 = vld [vmem:[%s5 + $0x3a8] sm:$0xf]
    %v2982 = vld [vmem:[%s5 + $0x3ac] sm:$0xf]
    %v2983 = vld [vmem:[%s5 + $0x3b0] sm:$0xf]
    %v2984 = vld [vmem:[%s5 + $0x3b4] sm:$0xf]
    %v2985 = vld [vmem:[%s5 + $0x3b8] sm:$0xf]
    %v2986 = vld [vmem:[%s5 + $0x3bc] sm:$0xf]
    %v2987 = vld [vmem:[%s5 + $0x3c0] sm:$0xf]
    %v2988 = vld [vmem:[%s5 + $0x3c4] sm:$0xf]
    %v2989 = vld [vmem:[%s5 + $0x3c8] sm:$0xf]
    %v2990 = vld [vmem:[%s5 + $0x3cc] sm:$0xf]
    %v2991 = vld [vmem:[%s5 + $0x3d0] sm:$0xf]
    %v2992 = vld [vmem:[%s5 + $0x3d4] sm:$0xf]
    %v2993 = vld [vmem:[%s5 + $0x3d8] sm:$0xf]
    %v2994 = vld [vmem:[%s5 + $0x3dc] sm:$0xf]
    %v2995 = vld [vmem:[%s5 + $0x3e0] sm:$0xf]
    %v2996 = vld [vmem:[%s5 + $0x3e4] sm:$0xf]
    %v2997 = vld [vmem:[%s5 + $0x3e8] sm:$0xf]
    %v2998 = vld [vmem:[%s5 + $0x3ec] sm:$0xf]
    %v2999 = vld [vmem:[%s5 + $0x3f0] sm:$0xf]
    %v3000 = vld [vmem:[%s5 + $0x3f4] sm:$0xf]
    %v3001 = vld [vmem:[%s5 + $0x3f8] sm:$0xf]
    %v3002 = vld [vmem:[%s5 + $0x3fc] sm:$0xf]
    %v3259 = vunpack.c.l.b16 %v2747
    %v3260 = vunpack.c.l.b16 %v2748
    %v3261 = vunpack.c.l.b16 %v2749
    %v3262 = vunpack.c.l.b16 %v2750
    %v3263 = vunpack.c.l.b16 %v2751
    %v3264 = vunpack.c.l.b16 %v2752
    %v3265 = vunpack.c.l.b16 %v2753
    %v3266 = vunpack.c.l.b16 %v2754
    %v3267 = vunpack.c.l.b16 %v2755
    %v3268 = vunpack.c.l.b16 %v2756
    %v3269 = vunpack.c.l.b16 %v2757
    %v3270 = vunpack.c.l.b16 %v2758
    %v3271 = vunpack.c.l.b16 %v2759
    %v3272 = vunpack.c.l.b16 %v2760
    %v3273 = vunpack.c.l.b16 %v2761
    %v3274 = vunpack.c.l.b16 %v2762
    %v3275 = vunpack.c.l.b16 %v2763
    %v3276 = vunpack.c.l.b16 %v2764
    %v3277 = vunpack.c.l.b16 %v2765
    %v3278 = vunpack.c.l.b16 %v2766
    %v3279 = vunpack.c.l.b16 %v2767
    %v3280 = vunpack.c.l.b16 %v2768
    %v3281 = vunpack.c.l.b16 %v2769
    %v3282 = vunpack.c.l.b16 %v2770
    %v3283 = vunpack.c.l.b16 %v2771
    %v3284 = vunpack.c.l.b16 %v2772
    %v3285 = vunpack.c.l.b16 %v2773
    %v3286 = vunpack.c.l.b16 %v2774
    %v3287 = vunpack.c.l.b16 %v2775
    %v3288 = vunpack.c.l.b16 %v2776
    %v3289 = vunpack.c.l.b16 %v2777
    %v3290 = vunpack.c.l.b16 %v2778
    %v3291 = vunpack.c.l.b16 %v2779
    %v3292 = vunpack.c.l.b16 %v2780
    %v3293 = vunpack.c.l.b16 %v2781
    %v3294 = vunpack.c.l.b16 %v2782
    %v3295 = vunpack.c.l.b16 %v2783
    %v3296 = vunpack.c.l.b16 %v2784
    %v3297 = vunpack.c.l.b16 %v2785
    %v3298 = vunpack.c.l.b16 %v2786
    %v3299 = vunpack.c.l.b16 %v2787
    %v3300 = vunpack.c.l.b16 %v2788
    %v3301 = vunpack.c.l.b16 %v2789
    %v3302 = vunpack.c.l.b16 %v2790
    %v3303 = vunpack.c.l.b16 %v2791
    %v3304 = vunpack.c.l.b16 %v2792
    %v3305 = vunpack.c.l.b16 %v2793
    %v3306 = vunpack.c.l.b16 %v2794
    %v3307 = vunpack.c.l.b16 %v2795
    %v3308 = vunpack.c.l.b16 %v2796
    %v3309 = vunpack.c.l.b16 %v2797
    %v3310 = vunpack.c.l.b16 %v2798
    %v3311 = vunpack.c.l.b16 %v2799
    %v3312 = vunpack.c.l.b16 %v2800
    %v3313 = vunpack.c.l.b16 %v2801
    %v3314 = vunpack.c.l.b16 %v2802
    %v3315 = vunpack.c.l.b16 %v2803
    %v3316 = vunpack.c.l.b16 %v2804
    %v3317 = vunpack.c.l.b16 %v2805
    %v3318 = vunpack.c.l.b16 %v2806
    %v3319 = vunpack.c.l.b16 %v2807
    %v3320 = vunpack.c.l.b16 %v2808
    %v3321 = vunpack.c.l.b16 %v2809
    %v3322 = vunpack.c.l.b16 %v2810
    %v3323 = vunpack.c.l.b16 %v2811
    %v3324 = vunpack.c.l.b16 %v2812
    %v3325 = vunpack.c.l.b16 %v2813
    %v3326 = vunpack.c.l.b16 %v2814
    %v3327 = vunpack.c.l.b16 %v2815
    %v3328 = vunpack.c.l.b16 %v2816
    %v3329 = vunpack.c.l.b16 %v2817
    %v3330 = vunpack.c.l.b16 %v2818
    %v3331 = vunpack.c.l.b16 %v2819
    %v3332 = vunpack.c.l.b16 %v2820
    %v3333 = vunpack.c.l.b16 %v2821
    %v3334 = vunpack.c.l.b16 %v2822
    %v3335 = vunpack.c.l.b16 %v2823
    %v3336 = vunpack.c.l.b16 %v2824
    %v3337 = vunpack.c.l.b16 %v2825
    %v3338 = vunpack.c.l.b16 %v2826
    %v3339 = vunpack.c.l.b16 %v2827
    %v3340 = vunpack.c.l.b16 %v2828
    %v3341 = vunpack.c.l.b16 %v2829
    %v3342 = vunpack.c.l.b16 %v2830
    %v3343 = vunpack.c.l.b16 %v2831
    %v3344 = vunpack.c.l.b16 %v2832
    %v3345 = vunpack.c.l.b16 %v2833
    %v3346 = vunpack.c.l.b16 %v2834
    %v3347 = vunpack.c.l.b16 %v2835
    %v3348 = vunpack.c.l.b16 %v2836
    %v3349 = vunpack.c.l.b16 %v2837
    %v3350 = vunpack.c.l.b16 %v2838
    %v3351 = vunpack.c.l.b16 %v2839
    %v3352 = vunpack.c.l.b16 %v2840
    %v3353 = vunpack.c.l.b16 %v2841
    %v3354 = vunpack.c.l.b16 %v2842
    %v3355 = vunpack.c.l.b16 %v2843
    %v3356 = vunpack.c.l.b16 %v2844
    %v3357 = vunpack.c.l.b16 %v2845
    %v3358 = vunpack.c.l.b16 %v2846
    %v3359 = vunpack.c.l.b16 %v2847
    %v3360 = vunpack.c.l.b16 %v2848
    %v3361 = vunpack.c.l.b16 %v2849
    %v3362 = vunpack.c.l.b16 %v2850
    %v3363 = vunpack.c.l.b16 %v2851
    %v3364 = vunpack.c.l.b16 %v2852
    %v3365 = vunpack.c.l.b16 %v2853
    %v3366 = vunpack.c.l.b16 %v2854
    %v3367 = vunpack.c.l.b16 %v2855
    %v3368 = vunpack.c.l.b16 %v2856
    %v3369 = vunpack.c.l.b16 %v2857
    %v3370 = vunpack.c.l.b16 %v2858
    %v3371 = vunpack.c.l.b16 %v2859
    %v3372 = vunpack.c.l.b16 %v2860
    %v3373 = vunpack.c.l.b16 %v2861
    %v3374 = vunpack.c.l.b16 %v2862
    %v3375 = vunpack.c.l.b16 %v2863
    %v3376 = vunpack.c.l.b16 %v2864
    %v3377 = vunpack.c.l.b16 %v2865
    %v3378 = vunpack.c.l.b16 %v2866
    %v3379 = vunpack.c.l.b16 %v2867
    %v3380 = vunpack.c.l.b16 %v2868
    %v3381 = vunpack.c.l.b16 %v2869
    %v3382 = vunpack.c.l.b16 %v2870
    %v3383 = vunpack.c.l.b16 %v2871
    %v3384 = vunpack.c.l.b16 %v2872
    %v3385 = vunpack.c.l.b16 %v2873
    %v3386 = vunpack.c.l.b16 %v2874
    %v3387 = vunpack.c.l.b16 %v2875
    %v3388 = vunpack.c.l.b16 %v2876
    %v3389 = vunpack.c.l.b16 %v2877
    %v3390 = vunpack.c.l.b16 %v2878
    %v3391 = vunpack.c.l.b16 %v2879
    %v3392 = vunpack.c.l.b16 %v2880
    %v3393 = vunpack.c.l.b16 %v2881
    %v3394 = vunpack.c.l.b16 %v2882
    %v3395 = vunpack.c.l.b16 %v2883
    %v3396 = vunpack.c.l.b16 %v2884
    %v3397 = vunpack.c.l.b16 %v2885
    %v3398 = vunpack.c.l.b16 %v2886
    %v3399 = vunpack.c.l.b16 %v2887
    %v3400 = vunpack.c.l.b16 %v2888
    %v3401 = vunpack.c.l.b16 %v2889
    %v3402 = vunpack.c.l.b16 %v2890
    %v3403 = vunpack.c.l.b16 %v2891
    %v3404 = vunpack.c.l.b16 %v2892
    %v3405 = vunpack.c.l.b16 %v2893
    %v3406 = vunpack.c.l.b16 %v2894
    %v3407 = vunpack.c.l.b16 %v2895
    %v3408 = vunpack.c.l.b16 %v2896
    %v3409 = vunpack.c.l.b16 %v2897
    %v3410 = vunpack.c.l.b16 %v2898
    %v3411 = vunpack.c.l.b16 %v2899
    %v3412 = vunpack.c.l.b16 %v2900
    %v3413 = vunpack.c.l.b16 %v2901
    %v3414 = vunpack.c.l.b16 %v2902
    %v3415 = vunpack.c.l.b16 %v2903
    %v3416 = vunpack.c.l.b16 %v2904
    %v3417 = vunpack.c.l.b16 %v2905
    %v3418 = vunpack.c.l.b16 %v2906
    %v3419 = vunpack.c.l.b16 %v2907
    %v3420 = vunpack.c.l.b16 %v2908
    %v3421 = vunpack.c.l.b16 %v2909
    %v3422 = vunpack.c.l.b16 %v2910
    %v3423 = vunpack.c.l.b16 %v2911
    %v3424 = vunpack.c.l.b16 %v2912
    %v3425 = vunpack.c.l.b16 %v2913
    %v3426 = vunpack.c.l.b16 %v2914
    %v3427 = vunpack.c.l.b16 %v2915
    %v3428 = vunpack.c.l.b16 %v2916
    %v3429 = vunpack.c.l.b16 %v2917
    %v3430 = vunpack.c.l.b16 %v2918
    %v3431 = vunpack.c.l.b16 %v2919
    %v3432 = vunpack.c.l.b16 %v2920
    %v3433 = vunpack.c.l.b16 %v2921
    %v3434 = vunpack.c.l.b16 %v2922
    %v3435 = vunpack.c.l.b16 %v2923
    %v3436 = vunpack.c.l.b16 %v2924
    %v3437 = vunpack.c.l.b16 %v2925
    %v3438 = vunpack.c.l.b16 %v2926
    %v3439 = vunpack.c.l.b16 %v2927
    %v3440 = vunpack.c.l.b16 %v2928
    %v3441 = vunpack.c.l.b16 %v2929
    %v3442 = vunpack.c.l.b16 %v2930
    %v3443 = vunpack.c.l.b16 %v2931
    %v3444 = vunpack.c.l.b16 %v2932
    %v3445 = vunpack.c.l.b16 %v2933
    %v3446 = vunpack.c.l.b16 %v2934
    %v3447 = vunpack.c.l.b16 %v2935
    %v3448 = vunpack.c.l.b16 %v2936
    %v3449 = vunpack.c.l.b16 %v2937
    %v3450 = vunpack.c.l.b16 %v2938
    %v3451 = vunpack.c.l.b16 %v2939
    %v3452 = vunpack.c.l.b16 %v2940
    %v3453 = vunpack.c.l.b16 %v2941
    %v3454 = vunpack.c.l.b16 %v2942
    %v3455 = vunpack.c.l.b16 %v2943
    %v3456 = vunpack.c.l.b16 %v2944
    %v3457 = vunpack.c.l.b16 %v2945
    %v3458 = vunpack.c.l.b16 %v2946
    %v3459 = vunpack.c.l.b16 %v2947
    %v3460 = vunpack.c.l.b16 %v2948
    %v3461 = vunpack.c.l.b16 %v2949
    %v3462 = vunpack.c.l.b16 %v2950
    %v3463 = vunpack.c.l.b16 %v2951
    %v3464 = vunpack.c.l.b16 %v2952
    %v3465 = vunpack.c.l.b16 %v2953
    %v3466 = vunpack.c.l.b16 %v2954
    %v3467 = vunpack.c.l.b16 %v2955
    %v3468 = vunpack.c.l.b16 %v2956
    %v3469 = vunpack.c.l.b16 %v2957
    %v3470 = vunpack.c.l.b16 %v2958
    %v3471 = vunpack.c.l.b16 %v2959
    %v3472 = vunpack.c.l.b16 %v2960
    %v3473 = vunpack.c.l.b16 %v2961
    %v3474 = vunpack.c.l.b16 %v2962
    %v3475 = vunpack.c.l.b16 %v2963
    %v3476 = vunpack.c.l.b16 %v2964
    %v3477 = vunpack.c.l.b16 %v2965
    %v3478 = vunpack.c.l.b16 %v2966
    %v3479 = vunpack.c.l.b16 %v2967
    %v3480 = vunpack.c.l.b16 %v2968
    %v3481 = vunpack.c.l.b16 %v2969
    %v3482 = vunpack.c.l.b16 %v2970
    %v3483 = vunpack.c.l.b16 %v2971
    %v3484 = vunpack.c.l.b16 %v2972
    %v3485 = vunpack.c.l.b16 %v2973
    %v3486 = vunpack.c.l.b16 %v2974
    %v3487 = vunpack.c.l.b16 %v2975
    %v3488 = vunpack.c.l.b16 %v2976
    %v3489 = vunpack.c.l.b16 %v2977
    %v3490 = vunpack.c.l.b16 %v2978
    %v3491 = vunpack.c.l.b16 %v2979
    %v3492 = vunpack.c.l.b16 %v2980
    %v3493 = vunpack.c.l.b16 %v2981
    %v3494 = vunpack.c.l.b16 %v2982
    %v3495 = vunpack.c.l.b16 %v2983
    %v3496 = vunpack.c.l.b16 %v2984
    %v3497 = vunpack.c.l.b16 %v2985
    %v3498 = vunpack.c.l.b16 %v2986
    %v3499 = vunpack.c.l.b16 %v2987
    %v3500 = vunpack.c.l.b16 %v2988
    %v3501 = vunpack.c.l.b16 %v2989
    %v3502 = vunpack.c.l.b16 %v2990
    %v3503 = vunpack.c.l.b16 %v2991
    %v3504 = vunpack.c.l.b16 %v2992
    %v3505 = vunpack.c.l.b16 %v2993
    %v3506 = vunpack.c.l.b16 %v2994
    %v3507 = vunpack.c.l.b16 %v2995
    %v3508 = vunpack.c.l.b16 %v2996
    %v3509 = vunpack.c.l.b16 %v2997
    %v3510 = vunpack.c.l.b16 %v2998
    %v3511 = vunpack.c.l.b16 %v2999
    %v3512 = vunpack.c.l.b16 %v3000
    %v3513 = vunpack.c.l.b16 %v3001
    %v3514 = vunpack.c.l.b16 %v3002
    %v3515 = vpack.c.b16 %v3260, %v3259
    %v3516 = vpack.c.b16 %v3262, %v3261
    %v3517 = vpack.c.b16 %v3264, %v3263
    %v3518 = vpack.c.b16 %v3266, %v3265
    %v3519 = vpack.c.b16 %v3268, %v3267
    %v3520 = vpack.c.b16 %v3270, %v3269
    %v3521 = vpack.c.b16 %v3272, %v3271
    %v3522 = vpack.c.b16 %v3274, %v3273
    %v3523 = vpack.c.b16 %v3276, %v3275
    %v3524 = vpack.c.b16 %v3278, %v3277
    %v3525 = vpack.c.b16 %v3280, %v3279
    %v3526 = vpack.c.b16 %v3282, %v3281
    %v3527 = vpack.c.b16 %v3284, %v3283
    %v3528 = vpack.c.b16 %v3286, %v3285
    %v3529 = vpack.c.b16 %v3288, %v3287
    %v3530 = vpack.c.b16 %v3290, %v3289
    %v3531 = vpack.c.b16 %v3292, %v3291
    %v3532 = vpack.c.b16 %v3294, %v3293
    %v3533 = vpack.c.b16 %v3296, %v3295
    %v3534 = vpack.c.b16 %v3298, %v3297
    %v3535 = vpack.c.b16 %v3300, %v3299
    %v3536 = vpack.c.b16 %v3302, %v3301
    %v3537 = vpack.c.b16 %v3304, %v3303
    %v3538 = vpack.c.b16 %v3306, %v3305
    %v3539 = vpack.c.b16 %v3308, %v3307
    %v3540 = vpack.c.b16 %v3310, %v3309
    %v3541 = vpack.c.b16 %v3312, %v3311
    %v3542 = vpack.c.b16 %v3314, %v3313
    %v3543 = vpack.c.b16 %v3316, %v3315
    %v3544 = vpack.c.b16 %v3318, %v3317
    %v3545 = vpack.c.b16 %v3320, %v3319
    %v3546 = vpack.c.b16 %v3322, %v3321
    %v3547 = vpack.c.b16 %v3324, %v3323
    %v3548 = vpack.c.b16 %v3326, %v3325
    %v3549 = vpack.c.b16 %v3328, %v3327
    %v3550 = vpack.c.b16 %v3330, %v3329
    %v3551 = vpack.c.b16 %v3332, %v3331
    %v3552 = vpack.c.b16 %v3334, %v3333
    %v3553 = vpack.c.b16 %v3336, %v3335
    %v3554 = vpack.c.b16 %v3338, %v3337
    %v3555 = vpack.c.b16 %v3340, %v3339
    %v3556 = vpack.c.b16 %v3342, %v3341
    %v3557 = vpack.c.b16 %v3344, %v3343
    %v3558 = vpack.c.b16 %v3346, %v3345
    %v3559 = vpack.c.b16 %v3348, %v3347
    %v3560 = vpack.c.b16 %v3350, %v3349
    %v3561 = vpack.c.b16 %v3352, %v3351
    %v3562 = vpack.c.b16 %v3354, %v3353
    %v3563 = vpack.c.b16 %v3356, %v3355
    %v3564 = vpack.c.b16 %v3358, %v3357
    %v3565 = vpack.c.b16 %v3360, %v3359
    %v3566 = vpack.c.b16 %v3362, %v3361
    %v3567 = vpack.c.b16 %v3364, %v3363
    %v3568 = vpack.c.b16 %v3366, %v3365
    %v3569 = vpack.c.b16 %v3368, %v3367
    %v3570 = vpack.c.b16 %v3370, %v3369
    %v3571 = vpack.c.b16 %v3372, %v3371
    %v3572 = vpack.c.b16 %v3374, %v3373
    %v3573 = vpack.c.b16 %v3376, %v3375
    %v3574 = vpack.c.b16 %v3378, %v3377
    %v3575 = vpack.c.b16 %v3380, %v3379
    %v3576 = vpack.c.b16 %v3382, %v3381
    %v3577 = vpack.c.b16 %v3384, %v3383
    %v3578 = vpack.c.b16 %v3386, %v3385
    %v3579 = vpack.c.b16 %v3388, %v3387
    %v3580 = vpack.c.b16 %v3390, %v3389
    %v3581 = vpack.c.b16 %v3392, %v3391
    %v3582 = vpack.c.b16 %v3394, %v3393
    %v3583 = vpack.c.b16 %v3396, %v3395
    %v3584 = vpack.c.b16 %v3398, %v3397
    %v3585 = vpack.c.b16 %v3400, %v3399
    %v3586 = vpack.c.b16 %v3402, %v3401
    %v3587 = vpack.c.b16 %v3404, %v3403
    %v3588 = vpack.c.b16 %v3406, %v3405
    %v3589 = vpack.c.b16 %v3408, %v3407
    %v3590 = vpack.c.b16 %v3410, %v3409
    %v3591 = vpack.c.b16 %v3412, %v3411
    %v3592 = vpack.c.b16 %v3414, %v3413
    %v3593 = vpack.c.b16 %v3416, %v3415
    %v3594 = vpack.c.b16 %v3418, %v3417
    %v3595 = vpack.c.b16 %v3420, %v3419
    %v3596 = vpack.c.b16 %v3422, %v3421
    %v3597 = vpack.c.b16 %v3424, %v3423
    %v3598 = vpack.c.b16 %v3426, %v3425
    %v3599 = vpack.c.b16 %v3428, %v3427
    %v3600 = vpack.c.b16 %v3430, %v3429
    %v3601 = vpack.c.b16 %v3432, %v3431
    %v3602 = vpack.c.b16 %v3434, %v3433
    %v3603 = vpack.c.b16 %v3436, %v3435
    %v3604 = vpack.c.b16 %v3438, %v3437
    %v3605 = vpack.c.b16 %v3440, %v3439
    %v3606 = vpack.c.b16 %v3442, %v3441
    %v3607 = vpack.c.b16 %v3444, %v3443
    %v3608 = vpack.c.b16 %v3446, %v3445
    %v3609 = vpack.c.b16 %v3448, %v3447
    %v3610 = vpack.c.b16 %v3450, %v3449
    %v3611 = vpack.c.b16 %v3452, %v3451
    %v3612 = vpack.c.b16 %v3454, %v3453
    %v3613 = vpack.c.b16 %v3456, %v3455
    %v3614 = vpack.c.b16 %v3458, %v3457
    %v3615 = vpack.c.b16 %v3460, %v3459
    %v3616 = vpack.c.b16 %v3462, %v3461
    %v3617 = vpack.c.b16 %v3464, %v3463
    %v3618 = vpack.c.b16 %v3466, %v3465
    %v3619 = vpack.c.b16 %v3468, %v3467
    %v3620 = vpack.c.b16 %v3470, %v3469
    %v3621 = vpack.c.b16 %v3472, %v3471
    %v3622 = vpack.c.b16 %v3474, %v3473
    %v3623 = vpack.c.b16 %v3476, %v3475
    %v3624 = vpack.c.b16 %v3478, %v3477
    %v3625 = vpack.c.b16 %v3480, %v3479
    %v3626 = vpack.c.b16 %v3482, %v3481
    %v3627 = vpack.c.b16 %v3484, %v3483
    %v3628 = vpack.c.b16 %v3486, %v3485
    %v3629 = vpack.c.b16 %v3488, %v3487
    %v3630 = vpack.c.b16 %v3490, %v3489
    %v3631 = vpack.c.b16 %v3492, %v3491
    %v3632 = vpack.c.b16 %v3494, %v3493
    %v3633 = vpack.c.b16 %v3496, %v3495
    %v3634 = vpack.c.b16 %v3498, %v3497
    %v3635 = vpack.c.b16 %v3500, %v3499
    %v3636 = vpack.c.b16 %v3502, %v3501
    %v3637 = vpack.c.b16 %v3504, %v3503
    %v3638 = vpack.c.b16 %v3506, %v3505
    %v3639 = vpack.c.b16 %v3508, %v3507
    %v3640 = vpack.c.b16 %v3510, %v3509
    %v3641 = vpack.c.b16 %v3512, %v3511
    %v3642 = vpack.c.b16 %v3514, %v3513
    %3771 = vmatpush.bf16.msra.mxu0 %v3522
    %3772 = vmatpush.bf16.msra.mxu0 %v3521
    %3773 = vmatpush.bf16.msra.mxu0 %v3520
    %3774 = vmatpush.bf16.msra.mxu0 %v3519
    %3775 = vmatpush.bf16.msra.mxu0 %v3518
    %3776 = vmatpush.bf16.msra.mxu0 %v3517
    %3777 = vmatpush.bf16.msra.mxu0 %v3516
    %3778 = vmatpush.bf16.msra.mxu0 %v3515
    %3779 = vmatmul.bf16.gmra.mxu0 %v2731
    %v3780 = vpop.f32.mrf.mxu0
    %v3781 = vadd.f32 1e-09, %v3780
    %v3782 = vpop.f32.mrf.mxu0
    %v3783 = vadd.f32 1e-09, %v3782
    %3784 = vdwg.mxu0
    %3785 = vmatpush.bf16.msra.mxu0 %v3530
    %3786 = vmatpush.bf16.msra.mxu0 %v3529
    %3787 = vmatpush.bf16.msra.mxu0 %v3528
    %3788 = vmatpush.bf16.msra.mxu0 %v3527
    %3789 = vmatpush.bf16.msra.mxu0 %v3526
    %3790 = vmatpush.bf16.msra.mxu0 %v3525
    %3791 = vmatpush.bf16.msra.mxu0 %v3524
    %3792 = vmatpush.bf16.msra.mxu0 %v3523
    %3793 = vmatmul.bf16.gmra.mxu0 %v2732
    %v3794 = vpop.f32.mrf.mxu0
    %v3795 = vadd.f32 %v3781, %v3794
    %v3796 = vpop.f32.mrf.mxu0
    %v3797 = vadd.f32 %v3783, %v3796
    %3798 = vdwg.mxu0
    %3799 = vmatpush.bf16.msra.mxu0 %v3538
    %3800 = vmatpush.bf16.msra.mxu0 %v3537
    %3801 = vmatpush.bf16.msra.mxu0 %v3536
    %3802 = vmatpush.bf16.msra.mxu0 %v3535
    %3803 = vmatpush.bf16.msra.mxu0 %v3534
    %3804 = vmatpush.bf16.msra.mxu0 %v3533
    %3805 = vmatpush.bf16.msra.mxu0 %v3532
    %3806 = vmatpush.bf16.msra.mxu0 %v3531
    %3807 = vmatmul.bf16.gmra.mxu0 %v2733
    %v3808 = vpop.f32.mrf.mxu0
    %v3809 = vadd.f32 %v3795, %v3808
    %v3810 = vpop.f32.mrf.mxu0
    %v3811 = vadd.f32 %v3797, %v3810
    %3812 = vdwg.mxu0
    %3813 = vmatpush.bf16.msra.mxu0 %v3546
    %3814 = vmatpush.bf16.msra.mxu0 %v3545
    %3815 = vmatpush.bf16.msra.mxu0 %v3544
    %3816 = vmatpush.bf16.msra.mxu0 %v3543
    %3817 = vmatpush.bf16.msra.mxu0 %v3542
    %3818 = vmatpush.bf16.msra.mxu0 %v3541
    %3819 = vmatpush.bf16.msra.mxu0 %v3540
    %3820 = vmatpush.bf16.msra.mxu0 %v3539
    %3821 = vmatmul.bf16.gmra.mxu0 %v2734
    %v3822 = vpop.f32.mrf.mxu0
    %v3823 = vadd.f32 %v3809, %v3822
    %v3824 = vpop.f32.mrf.mxu0
    %v3825 = vadd.f32 %v3811, %v3824
    %3826 = vdwg.mxu0
    %3827 = vmatpush.bf16.msra.mxu0 %v3554
    %3828 = vmatpush.bf16.msra.mxu0 %v3553
    %3829 = vmatpush.bf16.msra.mxu0 %v3552
    %3830 = vmatpush.bf16.msra.mxu0 %v3551
    %3831 = vmatpush.bf16.msra.mxu0 %v3550
    %3832 = vmatpush.bf16.msra.mxu0 %v3549
    %3833 = vmatpush.bf16.msra.mxu0 %v3548
    %3834 = vmatpush.bf16.msra.mxu0 %v3547
    %3835 = vmatmul.bf16.gmra.mxu0 %v2735
    %v3836 = vpop.f32.mrf.mxu0
    %v3837 = vadd.f32 %v3823, %v3836
    %v3838 = vpop.f32.mrf.mxu0
    %v3839 = vadd.f32 %v3825, %v3838
    %3840 = vdwg.mxu0
    %3841 = vmatpush.bf16.msra.mxu0 %v3562
    %3842 = vmatpush.bf16.msra.mxu0 %v3561
    %3843 = vmatpush.bf16.msra.mxu0 %v3560
    %3844 = vmatpush.bf16.msra.mxu0 %v3559
    %3845 = vmatpush.bf16.msra.mxu0 %v3558
    %3846 = vmatpush.bf16.msra.mxu0 %v3557
    %3847 = vmatpush.bf16.msra.mxu0 %v3556
    %3848 = vmatpush.bf16.msra.mxu0 %v3555
    %3849 = vmatmul.bf16.gmra.mxu0 %v2736
    %v3850 = vpop.f32.mrf.mxu0
    %v3851 = vadd.f32 %v3837, %v3850
    %v3852 = vpop.f32.mrf.mxu0
    %v3853 = vadd.f32 %v3839, %v3852
    %3854 = vdwg.mxu0
    %3855 = vmatpush.bf16.msra.mxu0 %v3570
    %3856 = vmatpush.bf16.msra.mxu0 %v3569
    %3857 = vmatpush.bf16.msra.mxu0 %v3568
    %3858 = vmatpush.bf16.msra.mxu0 %v3567
    %3859 = vmatpush.bf16.msra.mxu0 %v3566
    %3860 = vmatpush.bf16.msra.mxu0 %v3565
    %3861 = vmatpush.bf16.msra.mxu0 %v3564
    %3862 = vmatpush.bf16.msra.mxu0 %v3563
    %3863 = vmatmul.bf16.gmra.mxu0 %v2737
    %v3864 = vpop.f32.mrf.mxu0
    %v3865 = vadd.f32 %v3851, %v3864
    %v3866 = vpop.f32.mrf.mxu0
    %v3867 = vadd.f32 %v3853, %v3866
    %3868 = vdwg.mxu0
    %3869 = vmatpush.bf16.msra.mxu0 %v3578
    %3870 = vmatpush.bf16.msra.mxu0 %v3577
    %3871 = vmatpush.bf16.msra.mxu0 %v3576
    %3872 = vmatpush.bf16.msra.mxu0 %v3575
    %3873 = vmatpush.bf16.msra.mxu0 %v3574
    %3874 = vmatpush.bf16.msra.mxu0 %v3573
    %3875 = vmatpush.bf16.msra.mxu0 %v3572
    %3876 = vmatpush.bf16.msra.mxu0 %v3571
    %3877 = vmatmul.bf16.gmra.mxu0 %v2738
    %v3878 = vpop.f32.mrf.mxu0
    %v3879 = vadd.f32 %v3865, %v3878
    %v3880 = vpop.f32.mrf.mxu0
    %v3881 = vadd.f32 %v3867, %v3880
    %3882 = vdwg.mxu0
    %3883 = vmatpush.bf16.msra.mxu0 %v3586
    %3884 = vmatpush.bf16.msra.mxu0 %v3585
    %3885 = vmatpush.bf16.msra.mxu0 %v3584
    %3886 = vmatpush.bf16.msra.mxu0 %v3583
    %3887 = vmatpush.bf16.msra.mxu0 %v3582
    %3888 = vmatpush.bf16.msra.mxu0 %v3581
    %3889 = vmatpush.bf16.msra.mxu0 %v3580
    %3890 = vmatpush.bf16.msra.mxu0 %v3579
    %3891 = vmatmul.bf16.gmra.mxu0 %v2739
    %v3892 = vpop.f32.mrf.mxu0
    %v3893 = vadd.f32 %v3879, %v3892
    %v3894 = vpop.f32.mrf.mxu0
    %v3895 = vadd.f32 %v3881, %v3894
    %3896 = vdwg.mxu0
    %3897 = vmatpush.bf16.msra.mxu0 %v3594
    %3898 = vmatpush.bf16.msra.mxu0 %v3593
    %3899 = vmatpush.bf16.msra.mxu0 %v3592
    %3900 = vmatpush.bf16.msra.mxu0 %v3591
    %3901 = vmatpush.bf16.msra.mxu0 %v3590
    %3902 = vmatpush.bf16.msra.mxu0 %v3589
    %3903 = vmatpush.bf16.msra.mxu0 %v3588
    %3904 = vmatpush.bf16.msra.mxu0 %v3587
    %3905 = vmatmul.bf16.gmra.mxu0 %v2740
    %v3906 = vpop.f32.mrf.mxu0
    %v3907 = vadd.f32 %v3893, %v3906
    %v3908 = vpop.f32.mrf.mxu0
    %v3909 = vadd.f32 %v3895, %v3908
    %3910 = vdwg.mxu0
    %3911 = vmatpush.bf16.msra.mxu0 %v3602
    %3912 = vmatpush.bf16.msra.mxu0 %v3601
    %3913 = vmatpush.bf16.msra.mxu0 %v3600
    %3914 = vmatpush.bf16.msra.mxu0 %v3599
    %3915 = vmatpush.bf16.msra.mxu0 %v3598
    %3916 = vmatpush.bf16.msra.mxu0 %v3597
    %3917 = vmatpush.bf16.msra.mxu0 %v3596
    %3918 = vmatpush.bf16.msra.mxu0 %v3595
    %3919 = vmatmul.bf16.gmra.mxu0 %v2741
    %v3920 = vpop.f32.mrf.mxu0
    %v3921 = vadd.f32 %v3907, %v3920
    %v3922 = vpop.f32.mrf.mxu0
    %v3923 = vadd.f32 %v3909, %v3922
    %3924 = vdwg.mxu0
    %3925 = vmatpush.bf16.msra.mxu0 %v3610
    %3926 = vmatpush.bf16.msra.mxu0 %v3609
    %3927 = vmatpush.bf16.msra.mxu0 %v3608
    %3928 = vmatpush.bf16.msra.mxu0 %v3607
    %3929 = vmatpush.bf16.msra.mxu0 %v3606
    %3930 = vmatpush.bf16.msra.mxu0 %v3605
    %3931 = vmatpush.bf16.msra.mxu0 %v3604
    %3932 = vmatpush.bf16.msra.mxu0 %v3603
    %3933 = vmatmul.bf16.gmra.mxu0 %v2742
    %v3934 = vpop.f32.mrf.mxu0
    %v3935 = vadd.f32 %v3921, %v3934
    %v3936 = vpop.f32.mrf.mxu0
    %v3937 = vadd.f32 %v3923, %v3936
    %3938 = vdwg.mxu0
    %3939 = vmatpush.bf16.msra.mxu0 %v3618
    %3940 = vmatpush.bf16.msra.mxu0 %v3617
    %3941 = vmatpush.bf16.msra.mxu0 %v3616
    %3942 = vmatpush.bf16.msra.mxu0 %v3615
    %3943 = vmatpush.bf16.msra.mxu0 %v3614
    %3944 = vmatpush.bf16.msra.mxu0 %v3613
    %3945 = vmatpush.bf16.msra.mxu0 %v3612
    %3946 = vmatpush.bf16.msra.mxu0 %v3611
    %3947 = vmatmul.bf16.gmra.mxu0 %v2743
    %v3948 = vpop.f32.mrf.mxu0
    %v3949 = vadd.f32 %v3935, %v3948
    %v3950 = vpop.f32.mrf.mxu0
    %v3951 = vadd.f32 %v3937, %v3950
    %3952 = vdwg.mxu0
    %3953 = vmatpush.bf16.msra.mxu0 %v3626
    %3954 = vmatpush.bf16.msra.mxu0 %v3625
    %3955 = vmatpush.bf16.msra.mxu0 %v3624
    %3956 = vmatpush.bf16.msra.mxu0 %v3623
    %3957 = vmatpush.bf16.msra.mxu0 %v3622
    %3958 = vmatpush.bf16.msra.mxu0 %v3621
    %3959 = vmatpush.bf16.msra.mxu0 %v3620
    %3960 = vmatpush.bf16.msra.mxu0 %v3619
    %3961 = vmatmul.bf16.gmra.mxu0 %v2744
    %v3962 = vpop.f32.mrf.mxu0
    %v3963 = vadd.f32 %v3949, %v3962
    %v3964 = vpop.f32.mrf.mxu0
    %v3965 = vadd.f32 %v3951, %v3964
    %3966 = vdwg.mxu0
    %3967 = vmatpush.bf16.msra.mxu0 %v3634
    %3968 = vmatpush.bf16.msra.mxu0 %v3633
    %3969 = vmatpush.bf16.msra.mxu0 %v3632
    %3970 = vmatpush.bf16.msra.mxu0 %v3631
    %3971 = vmatpush.bf16.msra.mxu0 %v3630
    %3972 = vmatpush.bf16.msra.mxu0 %v3629
    %3973 = vmatpush.bf16.msra.mxu0 %v3628
    %3974 = vmatpush.bf16.msra.mxu0 %v3627
    %3975 = vmatmul.bf16.gmra.mxu0 %v2745
    %v3976 = vpop.f32.mrf.mxu0
    %v3977 = vadd.f32 %v3963, %v3976
    %v3978 = vpop.f32.mrf.mxu0
    %v3979 = vadd.f32 %v3965, %v3978
    %3980 = vdwg.mxu0
    %3981 = vmatpush.bf16.msra.mxu0 %v3642
    %3982 = vmatpush.bf16.msra.mxu0 %v3641
    %3983 = vmatpush.bf16.msra.mxu0 %v3640
    %3984 = vmatpush.bf16.msra.mxu0 %v3639
    %3985 = vmatpush.bf16.msra.mxu0 %v3638
    %3986 = vmatpush.bf16.msra.mxu0 %v3637
    %3987 = vmatpush.bf16.msra.mxu0 %v3636
    %3988 = vmatpush.bf16.msra.mxu0 %v3635
    %3989 = vmatmul.bf16.gmra.mxu0 %v2746
    %v3990 = vpop.f32.mrf.mxu0
    %v3991 = vadd.f32 %v3977, %v3990
    %v3992 = vpop.f32.mrf.mxu0
    %v3993 = vadd.f32 %v3979, %v3992
    %3994 = vdwg.mxu0
    %v3995 = vrcp.pop %v3991
    %v3996 = vrcp.pop %v3993
    %v3997 = vld [vmem:[#allocation5] sm:$0xff]
    %v3998 = vld [vmem:[#allocation5 + $0x8] sm:$0xff]
    %v3999 = vld [vmem:[#allocation5 + $0x10] sm:$0xff]
    %v4000 = vld [vmem:[#allocation5 + $0x18] sm:$0xff]
    %v4001 = vld [vmem:[#allocation5 + $0x20] sm:$0xff]
    %v4002 = vld [vmem:[#allocation5 + $0x28] sm:$0xff]
    %v4003 = vld [vmem:[#allocation5 + $0x30] sm:$0xff]
    %v4004 = vld [vmem:[#allocation5 + $0x38] sm:$0xff]
    %v4005 = vld [vmem:[#allocation5 + $0x40] sm:$0xff]
    %v4006 = vld [vmem:[#allocation5 + $0x48] sm:$0xff]
    %v4007 = vld [vmem:[#allocation5 + $0x50] sm:$0xff]
    %v4008 = vld [vmem:[#allocation5 + $0x58] sm:$0xff]
    %v4009 = vld [vmem:[#allocation5 + $0x60] sm:$0xff]
    %v4010 = vld [vmem:[#allocation5 + $0x68] sm:$0xff]
    %v4011 = vld [vmem:[#allocation5 + $0x70] sm:$0xff]
    %v4012 = vld [vmem:[#allocation5 + $0x78] sm:$0xff]
    %v4013 = vld [vmem:[#allocation5 + $0x80] sm:$0xff]
    %v4014 = vld [vmem:[#allocation5 + $0x88] sm:$0xff]
    %v4015 = vld [vmem:[#allocation5 + $0x90] sm:$0xff]
    %v4016 = vld [vmem:[#allocation5 + $0x98] sm:$0xff]
    %v4017 = vld [vmem:[#allocation5 + $0xa0] sm:$0xff]
    %v4018 = vld [vmem:[#allocation5 + $0xa8] sm:$0xff]
    %v4019 = vld [vmem:[#allocation5 + $0xb0] sm:$0xff]
    %v4020 = vld [vmem:[#allocation5 + $0xb8] sm:$0xff]
    %v4021 = vld [vmem:[#allocation5 + $0xc0] sm:$0xff]
    %v4022 = vld [vmem:[#allocation5 + $0xc8] sm:$0xff]
    %v4023 = vld [vmem:[#allocation5 + $0xd0] sm:$0xff]
    %v4024 = vld [vmem:[#allocation5 + $0xd8] sm:$0xff]
    %v4025 = vld [vmem:[#allocation5 + $0xe0] sm:$0xff]
    %v4026 = vld [vmem:[#allocation5 + $0xe8] sm:$0xff]
    %v4027 = vld [vmem:[#allocation5 + $0xf0] sm:$0xff]
    %v4028 = vld [vmem:[#allocation5 + $0xf8] sm:$0xff]
    %v4029 = vld [vmem:[#allocation5 + $0x100] sm:$0xff]
    %v4030 = vld [vmem:[#allocation5 + $0x108] sm:$0xff]
    %v4031 = vld [vmem:[#allocation5 + $0x110] sm:$0xff]
    %v4032 = vld [vmem:[#allocation5 + $0x118] sm:$0xff]
    %v4033 = vld [vmem:[#allocation5 + $0x120] sm:$0xff]
    %v4034 = vld [vmem:[#allocation5 + $0x128] sm:$0xff]
    %v4035 = vld [vmem:[#allocation5 + $0x130] sm:$0xff]
    %v4036 = vld [vmem:[#allocation5 + $0x138] sm:$0xff]
    %v4037 = vld [vmem:[#allocation5 + $0x140] sm:$0xff]
    %v4038 = vld [vmem:[#allocation5 + $0x148] sm:$0xff]
    %v4039 = vld [vmem:[#allocation5 + $0x150] sm:$0xff]
    %v4040 = vld [vmem:[#allocation5 + $0x158] sm:$0xff]
    %v4041 = vld [vmem:[#allocation5 + $0x160] sm:$0xff]
    %v4042 = vld [vmem:[#allocation5 + $0x168] sm:$0xff]
    %v4043 = vld [vmem:[#allocation5 + $0x170] sm:$0xff]
    %v4044 = vld [vmem:[#allocation5 + $0x178] sm:$0xff]
    %v4045 = vld [vmem:[#allocation5 + $0x180] sm:$0xff]
    %v4046 = vld [vmem:[#allocation5 + $0x188] sm:$0xff]
    %v4047 = vld [vmem:[#allocation5 + $0x190] sm:$0xff]
    %v4048 = vld [vmem:[#allocation5 + $0x198] sm:$0xff]
    %v4049 = vld [vmem:[#allocation5 + $0x1a0] sm:$0xff]
    %v4050 = vld [vmem:[#allocation5 + $0x1a8] sm:$0xff]
    %v4051 = vld [vmem:[#allocation5 + $0x1b0] sm:$0xff]
    %v4052 = vld [vmem:[#allocation5 + $0x1b8] sm:$0xff]
    %v4053 = vld [vmem:[#allocation5 + $0x1c0] sm:$0xff]
    %v4054 = vld [vmem:[#allocation5 + $0x1c8] sm:$0xff]
    %v4055 = vld [vmem:[#allocation5 + $0x1d0] sm:$0xff]
    %v4056 = vld [vmem:[#allocation5 + $0x1d8] sm:$0xff]
    %v4057 = vld [vmem:[#allocation5 + $0x1e0] sm:$0xff]
    %v4058 = vld [vmem:[#allocation5 + $0x1e8] sm:$0xff]
    %v4059 = vld [vmem:[#allocation5 + $0x1f0] sm:$0xff]
    %v4060 = vld [vmem:[#allocation5 + $0x1f8] sm:$0xff]
    %v4061 = vld [vmem:[#allocation5 + $0x200] sm:$0xff]
    %v4062 = vld [vmem:[#allocation5 + $0x208] sm:$0xff]
    %v4063 = vld [vmem:[#allocation5 + $0x210] sm:$0xff]
    %v4064 = vld [vmem:[#allocation5 + $0x218] sm:$0xff]
    %v4065 = vld [vmem:[#allocation5 + $0x220] sm:$0xff]
    %v4066 = vld [vmem:[#allocation5 + $0x228] sm:$0xff]
    %v4067 = vld [vmem:[#allocation5 + $0x230] sm:$0xff]
    %v4068 = vld [vmem:[#allocation5 + $0x238] sm:$0xff]
    %v4069 = vld [vmem:[#allocation5 + $0x240] sm:$0xff]
    %v4070 = vld [vmem:[#allocation5 + $0x248] sm:$0xff]
    %v4071 = vld [vmem:[#allocation5 + $0x250] sm:$0xff]
    %v4072 = vld [vmem:[#allocation5 + $0x258] sm:$0xff]
    %v4073 = vld [vmem:[#allocation5 + $0x260] sm:$0xff]
    %v4074 = vld [vmem:[#allocation5 + $0x268] sm:$0xff]
    %v4075 = vld [vmem:[#allocation5 + $0x270] sm:$0xff]
    %v4076 = vld [vmem:[#allocation5 + $0x278] sm:$0xff]
    %v4077 = vld [vmem:[#allocation5 + $0x280] sm:$0xff]
    %v4078 = vld [vmem:[#allocation5 + $0x288] sm:$0xff]
    %v4079 = vld [vmem:[#allocation5 + $0x290] sm:$0xff]
    %v4080 = vld [vmem:[#allocation5 + $0x298] sm:$0xff]
    %v4081 = vld [vmem:[#allocation5 + $0x2a0] sm:$0xff]
    %v4082 = vld [vmem:[#allocation5 + $0x2a8] sm:$0xff]
    %v4083 = vld [vmem:[#allocation5 + $0x2b0] sm:$0xff]
    %v4084 = vld [vmem:[#allocation5 + $0x2b8] sm:$0xff]
    %v4085 = vld [vmem:[#allocation5 + $0x2c0] sm:$0xff]
    %v4086 = vld [vmem:[#allocation5 + $0x2c8] sm:$0xff]
    %v4087 = vld [vmem:[#allocation5 + $0x2d0] sm:$0xff]
    %v4088 = vld [vmem:[#allocation5 + $0x2d8] sm:$0xff]
    %v4089 = vld [vmem:[#allocation5 + $0x2e0] sm:$0xff]
    %v4090 = vld [vmem:[#allocation5 + $0x2e8] sm:$0xff]
    %v4091 = vld [vmem:[#allocation5 + $0x2f0] sm:$0xff]
    %v4092 = vld [vmem:[#allocation5 + $0x2f8] sm:$0xff]
    %v4093 = vld [vmem:[#allocation5 + $0x300] sm:$0xff]
    %v4094 = vld [vmem:[#allocation5 + $0x308] sm:$0xff]
    %v4095 = vld [vmem:[#allocation5 + $0x310] sm:$0xff]
    %v4096 = vld [vmem:[#allocation5 + $0x318] sm:$0xff]
    %v4097 = vld [vmem:[#allocation5 + $0x320] sm:$0xff]
    %v4098 = vld [vmem:[#allocation5 + $0x328] sm:$0xff]
    %v4099 = vld [vmem:[#allocation5 + $0x330] sm:$0xff]
    %v4100 = vld [vmem:[#allocation5 + $0x338] sm:$0xff]
    %v4101 = vld [vmem:[#allocation5 + $0x340] sm:$0xff]
    %v4102 = vld [vmem:[#allocation5 + $0x348] sm:$0xff]
    %v4103 = vld [vmem:[#allocation5 + $0x350] sm:$0xff]
    %v4104 = vld [vmem:[#allocation5 + $0x358] sm:$0xff]
    %v4105 = vld [vmem:[#allocation5 + $0x360] sm:$0xff]
    %v4106 = vld [vmem:[#allocation5 + $0x368] sm:$0xff]
    %v4107 = vld [vmem:[#allocation5 + $0x370] sm:$0xff]
    %v4108 = vld [vmem:[#allocation5 + $0x378] sm:$0xff]
    %v4109 = vld [vmem:[#allocation5 + $0x380] sm:$0xff]
    %v4110 = vld [vmem:[#allocation5 + $0x388] sm:$0xff]
    %v4111 = vld [vmem:[#allocation5 + $0x390] sm:$0xff]
    %v4112 = vld [vmem:[#allocation5 + $0x398] sm:$0xff]
    %v4113 = vld [vmem:[#allocation5 + $0x3a0] sm:$0xff]
    %v4114 = vld [vmem:[#allocation5 + $0x3a8] sm:$0xff]
    %v4115 = vld [vmem:[#allocation5 + $0x3b0] sm:$0xff]
    %v4116 = vld [vmem:[#allocation5 + $0x3b8] sm:$0xff]
    %v4117 = vld [vmem:[#allocation5 + $0x3c0] sm:$0xff]
    %v4118 = vld [vmem:[#allocation5 + $0x3c8] sm:$0xff]
    %v4119 = vld [vmem:[#allocation5 + $0x3d0] sm:$0xff]
    %v4120 = vld [vmem:[#allocation5 + $0x3d8] sm:$0xff]
    %v4121 = vld [vmem:[#allocation5 + $0x3e0] sm:$0xff]
    %v4122 = vld [vmem:[#allocation5 + $0x3e8] sm:$0xff]
    %v4123 = vld [vmem:[#allocation5 + $0x3f0] sm:$0xff]
    %v4124 = vld [vmem:[#allocation5 + $0x3f8] sm:$0xff]
    %v4125 = vld [vmem:[#allocation5 + $0x400] sm:$0xff]
    %v4126 = vld [vmem:[#allocation5 + $0x408] sm:$0xff]
    %v4127 = vld [vmem:[#allocation5 + $0x410] sm:$0xff]
    %v4128 = vld [vmem:[#allocation5 + $0x418] sm:$0xff]
    %v4129 = vld [vmem:[#allocation5 + $0x420] sm:$0xff]
    %v4130 = vld [vmem:[#allocation5 + $0x428] sm:$0xff]
    %v4131 = vld [vmem:[#allocation5 + $0x430] sm:$0xff]
    %v4132 = vld [vmem:[#allocation5 + $0x438] sm:$0xff]
    %v4133 = vld [vmem:[#allocation5 + $0x440] sm:$0xff]
    %v4134 = vld [vmem:[#allocation5 + $0x448] sm:$0xff]
    %v4135 = vld [vmem:[#allocation5 + $0x450] sm:$0xff]
    %v4136 = vld [vmem:[#allocation5 + $0x458] sm:$0xff]
    %v4137 = vld [vmem:[#allocation5 + $0x460] sm:$0xff]
    %v4138 = vld [vmem:[#allocation5 + $0x468] sm:$0xff]
    %v4139 = vld [vmem:[#allocation5 + $0x470] sm:$0xff]
    %v4140 = vld [vmem:[#allocation5 + $0x478] sm:$0xff]
    %v4141 = vld [vmem:[#allocation5 + $0x480] sm:$0xff]
    %v4142 = vld [vmem:[#allocation5 + $0x488] sm:$0xff]
    %v4143 = vld [vmem:[#allocation5 + $0x490] sm:$0xff]
    %v4144 = vld [vmem:[#allocation5 + $0x498] sm:$0xff]
    %v4145 = vld [vmem:[#allocation5 + $0x4a0] sm:$0xff]
    %v4146 = vld [vmem:[#allocation5 + $0x4a8] sm:$0xff]
    %v4147 = vld [vmem:[#allocation5 + $0x4b0] sm:$0xff]
    %v4148 = vld [vmem:[#allocation5 + $0x4b8] sm:$0xff]
    %v4149 = vld [vmem:[#allocation5 + $0x4c0] sm:$0xff]
    %v4150 = vld [vmem:[#allocation5 + $0x4c8] sm:$0xff]
    %v4151 = vld [vmem:[#allocation5 + $0x4d0] sm:$0xff]
    %v4152 = vld [vmem:[#allocation5 + $0x4d8] sm:$0xff]
    %v4153 = vld [vmem:[#allocation5 + $0x4e0] sm:$0xff]
    %v4154 = vld [vmem:[#allocation5 + $0x4e8] sm:$0xff]
    %v4155 = vld [vmem:[#allocation5 + $0x4f0] sm:$0xff]
    %v4156 = vld [vmem:[#allocation5 + $0x4f8] sm:$0xff]
    %v4157 = vld [vmem:[#allocation5 + $0x500] sm:$0xff]
    %v4158 = vld [vmem:[#allocation5 + $0x508] sm:$0xff]
    %v4159 = vld [vmem:[#allocation5 + $0x510] sm:$0xff]
    %v4160 = vld [vmem:[#allocation5 + $0x518] sm:$0xff]
    %v4161 = vld [vmem:[#allocation5 + $0x520] sm:$0xff]
    %v4162 = vld [vmem:[#allocation5 + $0x528] sm:$0xff]
    %v4163 = vld [vmem:[#allocation5 + $0x530] sm:$0xff]
    %v4164 = vld [vmem:[#allocation5 + $0x538] sm:$0xff]
    %v4165 = vld [vmem:[#allocation5 + $0x540] sm:$0xff]
    %v4166 = vld [vmem:[#allocation5 + $0x548] sm:$0xff]
    %v4167 = vld [vmem:[#allocation5 + $0x550] sm:$0xff]
    %v4168 = vld [vmem:[#allocation5 + $0x558] sm:$0xff]
    %v4169 = vld [vmem:[#allocation5 + $0x560] sm:$0xff]
    %v4170 = vld [vmem:[#allocation5 + $0x568] sm:$0xff]
    %v4171 = vld [vmem:[#allocation5 + $0x570] sm:$0xff]
    %v4172 = vld [vmem:[#allocation5 + $0x578] sm:$0xff]
    %v4173 = vld [vmem:[#allocation5 + $0x580] sm:$0xff]
    %v4174 = vld [vmem:[#allocation5 + $0x588] sm:$0xff]
    %v4175 = vld [vmem:[#allocation5 + $0x590] sm:$0xff]
    %v4176 = vld [vmem:[#allocation5 + $0x598] sm:$0xff]
    %v4177 = vld [vmem:[#allocation5 + $0x5a0] sm:$0xff]
    %v4178 = vld [vmem:[#allocation5 + $0x5a8] sm:$0xff]
    %v4179 = vld [vmem:[#allocation5 + $0x5b0] sm:$0xff]
    %v4180 = vld [vmem:[#allocation5 + $0x5b8] sm:$0xff]
    %v4181 = vld [vmem:[#allocation5 + $0x5c0] sm:$0xff]
    %v4182 = vld [vmem:[#allocation5 + $0x5c8] sm:$0xff]
    %v4183 = vld [vmem:[#allocation5 + $0x5d0] sm:$0xff]
    %v4184 = vld [vmem:[#allocation5 + $0x5d8] sm:$0xff]
    %v4185 = vld [vmem:[#allocation5 + $0x5e0] sm:$0xff]
    %v4186 = vld [vmem:[#allocation5 + $0x5e8] sm:$0xff]
    %v4187 = vld [vmem:[#allocation5 + $0x5f0] sm:$0xff]
    %v4188 = vld [vmem:[#allocation5 + $0x5f8] sm:$0xff]
    %v4189 = vld [vmem:[#allocation5 + $0x600] sm:$0xff]
    %v4190 = vld [vmem:[#allocation5 + $0x608] sm:$0xff]
    %v4191 = vld [vmem:[#allocation5 + $0x610] sm:$0xff]
    %v4192 = vld [vmem:[#allocation5 + $0x618] sm:$0xff]
    %v4193 = vld [vmem:[#allocation5 + $0x620] sm:$0xff]
    %v4194 = vld [vmem:[#allocation5 + $0x628] sm:$0xff]
    %v4195 = vld [vmem:[#allocation5 + $0x630] sm:$0xff]
    %v4196 = vld [vmem:[#allocation5 + $0x638] sm:$0xff]
    %v4197 = vld [vmem:[#allocation5 + $0x640] sm:$0xff]
    %v4198 = vld [vmem:[#allocation5 + $0x648] sm:$0xff]
    %v4199 = vld [vmem:[#allocation5 + $0x650] sm:$0xff]
    %v4200 = vld [vmem:[#allocation5 + $0x658] sm:$0xff]
    %v4201 = vld [vmem:[#allocation5 + $0x660] sm:$0xff]
    %v4202 = vld [vmem:[#allocation5 + $0x668] sm:$0xff]
    %v4203 = vld [vmem:[#allocation5 + $0x670] sm:$0xff]
    %v4204 = vld [vmem:[#allocation5 + $0x678] sm:$0xff]
    %v4205 = vld [vmem:[#allocation5 + $0x680] sm:$0xff]
    %v4206 = vld [vmem:[#allocation5 + $0x688] sm:$0xff]
    %v4207 = vld [vmem:[#allocation5 + $0x690] sm:$0xff]
    %v4208 = vld [vmem:[#allocation5 + $0x698] sm:$0xff]
    %v4209 = vld [vmem:[#allocation5 + $0x6a0] sm:$0xff]
    %v4210 = vld [vmem:[#allocation5 + $0x6a8] sm:$0xff]
    %v4211 = vld [vmem:[#allocation5 + $0x6b0] sm:$0xff]
    %v4212 = vld [vmem:[#allocation5 + $0x6b8] sm:$0xff]
    %v4213 = vld [vmem:[#allocation5 + $0x6c0] sm:$0xff]
    %v4214 = vld [vmem:[#allocation5 + $0x6c8] sm:$0xff]
    %v4215 = vld [vmem:[#allocation5 + $0x6d0] sm:$0xff]
    %v4216 = vld [vmem:[#allocation5 + $0x6d8] sm:$0xff]
    %v4217 = vld [vmem:[#allocation5 + $0x6e0] sm:$0xff]
    %v4218 = vld [vmem:[#allocation5 + $0x6e8] sm:$0xff]
    %v4219 = vld [vmem:[#allocation5 + $0x6f0] sm:$0xff]
    %v4220 = vld [vmem:[#allocation5 + $0x6f8] sm:$0xff]
    %v4221 = vld [vmem:[#allocation5 + $0x700] sm:$0xff]
    %v4222 = vld [vmem:[#allocation5 + $0x708] sm:$0xff]
    %v4223 = vld [vmem:[#allocation5 + $0x710] sm:$0xff]
    %v4224 = vld [vmem:[#allocation5 + $0x718] sm:$0xff]
    %v4225 = vld [vmem:[#allocation5 + $0x720] sm:$0xff]
    %v4226 = vld [vmem:[#allocation5 + $0x728] sm:$0xff]
    %v4227 = vld [vmem:[#allocation5 + $0x730] sm:$0xff]
    %v4228 = vld [vmem:[#allocation5 + $0x738] sm:$0xff]
    %v4229 = vld [vmem:[#allocation5 + $0x740] sm:$0xff]
    %v4230 = vld [vmem:[#allocation5 + $0x748] sm:$0xff]
    %v4231 = vld [vmem:[#allocation5 + $0x750] sm:$0xff]
    %v4232 = vld [vmem:[#allocation5 + $0x758] sm:$0xff]
    %v4233 = vld [vmem:[#allocation5 + $0x760] sm:$0xff]
    %v4234 = vld [vmem:[#allocation5 + $0x768] sm:$0xff]
    %v4235 = vld [vmem:[#allocation5 + $0x770] sm:$0xff]
    %v4236 = vld [vmem:[#allocation5 + $0x778] sm:$0xff]
    %v4237 = vld [vmem:[#allocation5 + $0x780] sm:$0xff]
    %v4238 = vld [vmem:[#allocation5 + $0x788] sm:$0xff]
    %v4239 = vld [vmem:[#allocation5 + $0x790] sm:$0xff]
    %v4240 = vld [vmem:[#allocation5 + $0x798] sm:$0xff]
    %v4241 = vld [vmem:[#allocation5 + $0x7a0] sm:$0xff]
    %v4242 = vld [vmem:[#allocation5 + $0x7a8] sm:$0xff]
    %v4243 = vld [vmem:[#allocation5 + $0x7b0] sm:$0xff]
    %v4244 = vld [vmem:[#allocation5 + $0x7b8] sm:$0xff]
    %v4245 = vld [vmem:[#allocation5 + $0x7c0] sm:$0xff]
    %v4246 = vld [vmem:[#allocation5 + $0x7c8] sm:$0xff]
    %v4247 = vld [vmem:[#allocation5 + $0x7d0] sm:$0xff]
    %v4248 = vld [vmem:[#allocation5 + $0x7d8] sm:$0xff]
    %v4249 = vld [vmem:[#allocation5 + $0x7e0] sm:$0xff]
    %v4250 = vld [vmem:[#allocation5 + $0x7e8] sm:$0xff]
    %v4251 = vld [vmem:[#allocation5 + $0x7f0] sm:$0xff]
    %v4252 = vld [vmem:[#allocation5 + $0x7f8] sm:$0xff]
    %v4509 = vunpack.c.l.b16 %v3997
    %v4510 = vunpack.c.h.b16 %v3997
    %v4511 = vunpack.c.l.b16 %v3998
    %v4512 = vunpack.c.h.b16 %v3998
    %v4513 = vunpack.c.l.b16 %v3999
    %v4514 = vunpack.c.h.b16 %v3999
    %v4515 = vunpack.c.l.b16 %v4000
    %v4516 = vunpack.c.h.b16 %v4000
    %v4517 = vunpack.c.l.b16 %v4001
    %v4518 = vunpack.c.h.b16 %v4001
    %v4519 = vunpack.c.l.b16 %v4002
    %v4520 = vunpack.c.h.b16 %v4002
    %v4521 = vunpack.c.l.b16 %v4003
    %v4522 = vunpack.c.h.b16 %v4003
    %v4523 = vunpack.c.l.b16 %v4004
    %v4524 = vunpack.c.h.b16 %v4004
    %v4525 = vunpack.c.l.b16 %v4005
    %v4526 = vunpack.c.h.b16 %v4005
    %v4527 = vunpack.c.l.b16 %v4006
    %v4528 = vunpack.c.h.b16 %v4006
    %v4529 = vunpack.c.l.b16 %v4007
    %v4530 = vunpack.c.h.b16 %v4007
    %v4531 = vunpack.c.l.b16 %v4008
    %v4532 = vunpack.c.h.b16 %v4008
    %v4533 = vunpack.c.l.b16 %v4009
    %v4534 = vunpack.c.h.b16 %v4009
    %v4535 = vunpack.c.l.b16 %v4010
    %v4536 = vunpack.c.h.b16 %v4010
    %v4537 = vunpack.c.l.b16 %v4011
    %v4538 = vunpack.c.h.b16 %v4011
    %v4539 = vunpack.c.l.b16 %v4012
    %v4540 = vunpack.c.h.b16 %v4012
    %v4541 = vunpack.c.l.b16 %v4013
    %v4542 = vunpack.c.h.b16 %v4013
    %v4543 = vunpack.c.l.b16 %v4014
    %v4544 = vunpack.c.h.b16 %v4014
    %v4545 = vunpack.c.l.b16 %v4015
    %v4546 = vunpack.c.h.b16 %v4015
    %v4547 = vunpack.c.l.b16 %v4016
    %v4548 = vunpack.c.h.b16 %v4016
    %v4549 = vunpack.c.l.b16 %v4017
    %v4550 = vunpack.c.h.b16 %v4017
    %v4551 = vunpack.c.l.b16 %v4018
    %v4552 = vunpack.c.h.b16 %v4018
    %v4553 = vunpack.c.l.b16 %v4019
    %v4554 = vunpack.c.h.b16 %v4019
    %v4555 = vunpack.c.l.b16 %v4020
    %v4556 = vunpack.c.h.b16 %v4020
    %v4557 = vunpack.c.l.b16 %v4021
    %v4558 = vunpack.c.h.b16 %v4021
    %v4559 = vunpack.c.l.b16 %v4022
    %v4560 = vunpack.c.h.b16 %v4022
    %v4561 = vunpack.c.l.b16 %v4023
    %v4562 = vunpack.c.h.b16 %v4023
    %v4563 = vunpack.c.l.b16 %v4024
    %v4564 = vunpack.c.h.b16 %v4024
    %v4565 = vunpack.c.l.b16 %v4025
    %v4566 = vunpack.c.h.b16 %v4025
    %v4567 = vunpack.c.l.b16 %v4026
    %v4568 = vunpack.c.h.b16 %v4026
    %v4569 = vunpack.c.l.b16 %v4027
    %v4570 = vunpack.c.h.b16 %v4027
    %v4571 = vunpack.c.l.b16 %v4028
    %v4572 = vunpack.c.h.b16 %v4028
    %v4573 = vunpack.c.l.b16 %v4029
    %v4574 = vunpack.c.h.b16 %v4029
    %v4575 = vunpack.c.l.b16 %v4030
    %v4576 = vunpack.c.h.b16 %v4030
    %v4577 = vunpack.c.l.b16 %v4031
    %v4578 = vunpack.c.h.b16 %v4031
    %v4579 = vunpack.c.l.b16 %v4032
    %v4580 = vunpack.c.h.b16 %v4032
    %v4581 = vunpack.c.l.b16 %v4033
    %v4582 = vunpack.c.h.b16 %v4033
    %v4583 = vunpack.c.l.b16 %v4034
    %v4584 = vunpack.c.h.b16 %v4034
    %v4585 = vunpack.c.l.b16 %v4035
    %v4586 = vunpack.c.h.b16 %v4035
    %v4587 = vunpack.c.l.b16 %v4036
    %v4588 = vunpack.c.h.b16 %v4036
    %v4589 = vunpack.c.l.b16 %v4037
    %v4590 = vunpack.c.h.b16 %v4037
    %v4591 = vunpack.c.l.b16 %v4038
    %v4592 = vunpack.c.h.b16 %v4038
    %v4593 = vunpack.c.l.b16 %v4039
    %v4594 = vunpack.c.h.b16 %v4039
    %v4595 = vunpack.c.l.b16 %v4040
    %v4596 = vunpack.c.h.b16 %v4040
    %v4597 = vunpack.c.l.b16 %v4041
    %v4598 = vunpack.c.h.b16 %v4041
    %v4599 = vunpack.c.l.b16 %v4042
    %v4600 = vunpack.c.h.b16 %v4042
    %v4601 = vunpack.c.l.b16 %v4043
    %v4602 = vunpack.c.h.b16 %v4043
    %v4603 = vunpack.c.l.b16 %v4044
    %v4604 = vunpack.c.h.b16 %v4044
    %v4605 = vunpack.c.l.b16 %v4045
    %v4606 = vunpack.c.h.b16 %v4045
    %v4607 = vunpack.c.l.b16 %v4046
    %v4608 = vunpack.c.h.b16 %v4046
    %v4609 = vunpack.c.l.b16 %v4047
    %v4610 = vunpack.c.h.b16 %v4047
    %v4611 = vunpack.c.l.b16 %v4048
    %v4612 = vunpack.c.h.b16 %v4048
    %v4613 = vunpack.c.l.b16 %v4049
    %v4614 = vunpack.c.h.b16 %v4049
    %v4615 = vunpack.c.l.b16 %v4050
    %v4616 = vunpack.c.h.b16 %v4050
    %v4617 = vunpack.c.l.b16 %v4051
    %v4618 = vunpack.c.h.b16 %v4051
    %v4619 = vunpack.c.l.b16 %v4052
    %v4620 = vunpack.c.h.b16 %v4052
    %v4621 = vunpack.c.l.b16 %v4053
    %v4622 = vunpack.c.h.b16 %v4053
    %v4623 = vunpack.c.l.b16 %v4054
    %v4624 = vunpack.c.h.b16 %v4054
    %v4625 = vunpack.c.l.b16 %v4055
    %v4626 = vunpack.c.h.b16 %v4055
    %v4627 = vunpack.c.l.b16 %v4056
    %v4628 = vunpack.c.h.b16 %v4056
    %v4629 = vunpack.c.l.b16 %v4057
    %v4630 = vunpack.c.h.b16 %v4057
    %v4631 = vunpack.c.l.b16 %v4058
    %v4632 = vunpack.c.h.b16 %v4058
    %v4633 = vunpack.c.l.b16 %v4059
    %v4634 = vunpack.c.h.b16 %v4059
    %v4635 = vunpack.c.l.b16 %v4060
    %v4636 = vunpack.c.h.b16 %v4060
    %v4637 = vunpack.c.l.b16 %v4061
    %v4638 = vunpack.c.h.b16 %v4061
    %v4639 = vunpack.c.l.b16 %v4062
    %v4640 = vunpack.c.h.b16 %v4062
    %v4641 = vunpack.c.l.b16 %v4063
    %v4642 = vunpack.c.h.b16 %v4063
    %v4643 = vunpack.c.l.b16 %v4064
    %v4644 = vunpack.c.h.b16 %v4064
    %v4645 = vunpack.c.l.b16 %v4065
    %v4646 = vunpack.c.h.b16 %v4065
    %v4647 = vunpack.c.l.b16 %v4066
    %v4648 = vunpack.c.h.b16 %v4066
    %v4649 = vunpack.c.l.b16 %v4067
    %v4650 = vunpack.c.h.b16 %v4067
    %v4651 = vunpack.c.l.b16 %v4068
    %v4652 = vunpack.c.h.b16 %v4068
    %v4653 = vunpack.c.l.b16 %v4069
    %v4654 = vunpack.c.h.b16 %v4069
    %v4655 = vunpack.c.l.b16 %v4070
    %v4656 = vunpack.c.h.b16 %v4070
    %v4657 = vunpack.c.l.b16 %v4071
    %v4658 = vunpack.c.h.b16 %v4071
    %v4659 = vunpack.c.l.b16 %v4072
    %v4660 = vunpack.c.h.b16 %v4072
    %v4661 = vunpack.c.l.b16 %v4073
    %v4662 = vunpack.c.h.b16 %v4073
    %v4663 = vunpack.c.l.b16 %v4074
    %v4664 = vunpack.c.h.b16 %v4074
    %v4665 = vunpack.c.l.b16 %v4075
    %v4666 = vunpack.c.h.b16 %v4075
    %v4667 = vunpack.c.l.b16 %v4076
    %v4668 = vunpack.c.h.b16 %v4076
    %v4669 = vunpack.c.l.b16 %v4077
    %v4670 = vunpack.c.h.b16 %v4077
    %v4671 = vunpack.c.l.b16 %v4078
    %v4672 = vunpack.c.h.b16 %v4078
    %v4673 = vunpack.c.l.b16 %v4079
    %v4674 = vunpack.c.h.b16 %v4079
    %v4675 = vunpack.c.l.b16 %v4080
    %v4676 = vunpack.c.h.b16 %v4080
    %v4677 = vunpack.c.l.b16 %v4081
    %v4678 = vunpack.c.h.b16 %v4081
    %v4679 = vunpack.c.l.b16 %v4082
    %v4680 = vunpack.c.h.b16 %v4082
    %v4681 = vunpack.c.l.b16 %v4083
    %v4682 = vunpack.c.h.b16 %v4083
    %v4683 = vunpack.c.l.b16 %v4084
    %v4684 = vunpack.c.h.b16 %v4084
    %v4685 = vunpack.c.l.b16 %v4085
    %v4686 = vunpack.c.h.b16 %v4085
    %v4687 = vunpack.c.l.b16 %v4086
    %v4688 = vunpack.c.h.b16 %v4086
    %v4689 = vunpack.c.l.b16 %v4087
    %v4690 = vunpack.c.h.b16 %v4087
    %v4691 = vunpack.c.l.b16 %v4088
    %v4692 = vunpack.c.h.b16 %v4088
    %v4693 = vunpack.c.l.b16 %v4089
    %v4694 = vunpack.c.h.b16 %v4089
    %v4695 = vunpack.c.l.b16 %v4090
    %v4696 = vunpack.c.h.b16 %v4090
    %v4697 = vunpack.c.l.b16 %v4091
    %v4698 = vunpack.c.h.b16 %v4091
    %v4699 = vunpack.c.l.b16 %v4092
    %v4700 = vunpack.c.h.b16 %v4092
    %v4701 = vunpack.c.l.b16 %v4093
    %v4702 = vunpack.c.h.b16 %v4093
    %v4703 = vunpack.c.l.b16 %v4094
    %v4704 = vunpack.c.h.b16 %v4094
    %v4705 = vunpack.c.l.b16 %v4095
    %v4706 = vunpack.c.h.b16 %v4095
    %v4707 = vunpack.c.l.b16 %v4096
    %v4708 = vunpack.c.h.b16 %v4096
    %v4709 = vunpack.c.l.b16 %v4097
    %v4710 = vunpack.c.h.b16 %v4097
    %v4711 = vunpack.c.l.b16 %v4098
    %v4712 = vunpack.c.h.b16 %v4098
    %v4713 = vunpack.c.l.b16 %v4099
    %v4714 = vunpack.c.h.b16 %v4099
    %v4715 = vunpack.c.l.b16 %v4100
    %v4716 = vunpack.c.h.b16 %v4100
    %v4717 = vunpack.c.l.b16 %v4101
    %v4718 = vunpack.c.h.b16 %v4101
    %v4719 = vunpack.c.l.b16 %v4102
    %v4720 = vunpack.c.h.b16 %v4102
    %v4721 = vunpack.c.l.b16 %v4103
    %v4722 = vunpack.c.h.b16 %v4103
    %v4723 = vunpack.c.l.b16 %v4104
    %v4724 = vunpack.c.h.b16 %v4104
    %v4725 = vunpack.c.l.b16 %v4105
    %v4726 = vunpack.c.h.b16 %v4105
    %v4727 = vunpack.c.l.b16 %v4106
    %v4728 = vunpack.c.h.b16 %v4106
    %v4729 = vunpack.c.l.b16 %v4107
    %v4730 = vunpack.c.h.b16 %v4107
    %v4731 = vunpack.c.l.b16 %v4108
    %v4732 = vunpack.c.h.b16 %v4108
    %v4733 = vunpack.c.l.b16 %v4109
    %v4734 = vunpack.c.h.b16 %v4109
    %v4735 = vunpack.c.l.b16 %v4110
    %v4736 = vunpack.c.h.b16 %v4110
    %v4737 = vunpack.c.l.b16 %v4111
    %v4738 = vunpack.c.h.b16 %v4111
    %v4739 = vunpack.c.l.b16 %v4112
    %v4740 = vunpack.c.h.b16 %v4112
    %v4741 = vunpack.c.l.b16 %v4113
    %v4742 = vunpack.c.h.b16 %v4113
    %v4743 = vunpack.c.l.b16 %v4114
    %v4744 = vunpack.c.h.b16 %v4114
    %v4745 = vunpack.c.l.b16 %v4115
    %v4746 = vunpack.c.h.b16 %v4115
    %v4747 = vunpack.c.l.b16 %v4116
    %v4748 = vunpack.c.h.b16 %v4116
    %v4749 = vunpack.c.l.b16 %v4117
    %v4750 = vunpack.c.h.b16 %v4117
    %v4751 = vunpack.c.l.b16 %v4118
    %v4752 = vunpack.c.h.b16 %v4118
    %v4753 = vunpack.c.l.b16 %v4119
    %v4754 = vunpack.c.h.b16 %v4119
    %v4755 = vunpack.c.l.b16 %v4120
    %v4756 = vunpack.c.h.b16 %v4120
    %v4757 = vunpack.c.l.b16 %v4121
    %v4758 = vunpack.c.h.b16 %v4121
    %v4759 = vunpack.c.l.b16 %v4122
    %v4760 = vunpack.c.h.b16 %v4122
    %v4761 = vunpack.c.l.b16 %v4123
    %v4762 = vunpack.c.h.b16 %v4123
    %v4763 = vunpack.c.l.b16 %v4124
    %v4764 = vunpack.c.h.b16 %v4124
    %v4765 = vunpack.c.l.b16 %v4125
    %v4766 = vunpack.c.h.b16 %v4125
    %v4767 = vunpack.c.l.b16 %v4126
    %v4768 = vunpack.c.h.b16 %v4126
    %v4769 = vunpack.c.l.b16 %v4127
    %v4770 = vunpack.c.h.b16 %v4127
    %v4771 = vunpack.c.l.b16 %v4128
    %v4772 = vunpack.c.h.b16 %v4128
    %v4773 = vunpack.c.l.b16 %v4129
    %v4774 = vunpack.c.h.b16 %v4129
    %v4775 = vunpack.c.l.b16 %v4130
    %v4776 = vunpack.c.h.b16 %v4130
    %v4777 = vunpack.c.l.b16 %v4131
    %v4778 = vunpack.c.h.b16 %v4131
    %v4779 = vunpack.c.l.b16 %v4132
    %v4780 = vunpack.c.h.b16 %v4132
    %v4781 = vunpack.c.l.b16 %v4133
    %v4782 = vunpack.c.h.b16 %v4133
    %v4783 = vunpack.c.l.b16 %v4134
    %v4784 = vunpack.c.h.b16 %v4134
    %v4785 = vunpack.c.l.b16 %v4135
    %v4786 = vunpack.c.h.b16 %v4135
    %v4787 = vunpack.c.l.b16 %v4136
    %v4788 = vunpack.c.h.b16 %v4136
    %v4789 = vunpack.c.l.b16 %v4137
    %v4790 = vunpack.c.h.b16 %v4137
    %v4791 = vunpack.c.l.b16 %v4138
    %v4792 = vunpack.c.h.b16 %v4138
    %v4793 = vunpack.c.l.b16 %v4139
    %v4794 = vunpack.c.h.b16 %v4139
    %v4795 = vunpack.c.l.b16 %v4140
    %v4796 = vunpack.c.h.b16 %v4140
    %v4797 = vunpack.c.l.b16 %v4141
    %v4798 = vunpack.c.h.b16 %v4141
    %v4799 = vunpack.c.l.b16 %v4142
    %v4800 = vunpack.c.h.b16 %v4142
    %v4801 = vunpack.c.l.b16 %v4143
    %v4802 = vunpack.c.h.b16 %v4143
    %v4803 = vunpack.c.l.b16 %v4144
    %v4804 = vunpack.c.h.b16 %v4144
    %v4805 = vunpack.c.l.b16 %v4145
    %v4806 = vunpack.c.h.b16 %v4145
    %v4807 = vunpack.c.l.b16 %v4146
    %v4808 = vunpack.c.h.b16 %v4146
    %v4809 = vunpack.c.l.b16 %v4147
    %v4810 = vunpack.c.h.b16 %v4147
    %v4811 = vunpack.c.l.b16 %v4148
    %v4812 = vunpack.c.h.b16 %v4148
    %v4813 = vunpack.c.l.b16 %v4149
    %v4814 = vunpack.c.h.b16 %v4149
    %v4815 = vunpack.c.l.b16 %v4150
    %v4816 = vunpack.c.h.b16 %v4150
    %v4817 = vunpack.c.l.b16 %v4151
    %v4818 = vunpack.c.h.b16 %v4151
    %v4819 = vunpack.c.l.b16 %v4152
    %v4820 = vunpack.c.h.b16 %v4152
    %v4821 = vunpack.c.l.b16 %v4153
    %v4822 = vunpack.c.h.b16 %v4153
    %v4823 = vunpack.c.l.b16 %v4154
    %v4824 = vunpack.c.h.b16 %v4154
    %v4825 = vunpack.c.l.b16 %v4155
    %v4826 = vunpack.c.h.b16 %v4155
    %v4827 = vunpack.c.l.b16 %v4156
    %v4828 = vunpack.c.h.b16 %v4156
    %v4829 = vunpack.c.l.b16 %v4157
    %v4830 = vunpack.c.h.b16 %v4157
    %v4831 = vunpack.c.l.b16 %v4158
    %v4832 = vunpack.c.h.b16 %v4158
    %v4833 = vunpack.c.l.b16 %v4159
    %v4834 = vunpack.c.h.b16 %v4159
    %v4835 = vunpack.c.l.b16 %v4160
    %v4836 = vunpack.c.h.b16 %v4160
    %v4837 = vunpack.c.l.b16 %v4161
    %v4838 = vunpack.c.h.b16 %v4161
    %v4839 = vunpack.c.l.b16 %v4162
    %v4840 = vunpack.c.h.b16 %v4162
    %v4841 = vunpack.c.l.b16 %v4163
    %v4842 = vunpack.c.h.b16 %v4163
    %v4843 = vunpack.c.l.b16 %v4164
    %v4844 = vunpack.c.h.b16 %v4164
    %v4845 = vunpack.c.l.b16 %v4165
    %v4846 = vunpack.c.h.b16 %v4165
    %v4847 = vunpack.c.l.b16 %v4166
    %v4848 = vunpack.c.h.b16 %v4166
    %v4849 = vunpack.c.l.b16 %v4167
    %v4850 = vunpack.c.h.b16 %v4167
    %v4851 = vunpack.c.l.b16 %v4168
    %v4852 = vunpack.c.h.b16 %v4168
    %v4853 = vunpack.c.l.b16 %v4169
    %v4854 = vunpack.c.h.b16 %v4169
    %v4855 = vunpack.c.l.b16 %v4170
    %v4856 = vunpack.c.h.b16 %v4170
    %v4857 = vunpack.c.l.b16 %v4171
    %v4858 = vunpack.c.h.b16 %v4171
    %v4859 = vunpack.c.l.b16 %v4172
    %v4860 = vunpack.c.h.b16 %v4172
    %v4861 = vunpack.c.l.b16 %v4173
    %v4862 = vunpack.c.h.b16 %v4173
    %v4863 = vunpack.c.l.b16 %v4174
    %v4864 = vunpack.c.h.b16 %v4174
    %v4865 = vunpack.c.l.b16 %v4175
    %v4866 = vunpack.c.h.b16 %v4175
    %v4867 = vunpack.c.l.b16 %v4176
    %v4868 = vunpack.c.h.b16 %v4176
    %v4869 = vunpack.c.l.b16 %v4177
    %v4870 = vunpack.c.h.b16 %v4177
    %v4871 = vunpack.c.l.b16 %v4178
    %v4872 = vunpack.c.h.b16 %v4178
    %v4873 = vunpack.c.l.b16 %v4179
    %v4874 = vunpack.c.h.b16 %v4179
    %v4875 = vunpack.c.l.b16 %v4180
    %v4876 = vunpack.c.h.b16 %v4180
    %v4877 = vunpack.c.l.b16 %v4181
    %v4878 = vunpack.c.h.b16 %v4181
    %v4879 = vunpack.c.l.b16 %v4182
    %v4880 = vunpack.c.h.b16 %v4182
    %v4881 = vunpack.c.l.b16 %v4183
    %v4882 = vunpack.c.h.b16 %v4183
    %v4883 = vunpack.c.l.b16 %v4184
    %v4884 = vunpack.c.h.b16 %v4184
    %v4885 = vunpack.c.l.b16 %v4185
    %v4886 = vunpack.c.h.b16 %v4185
    %v4887 = vunpack.c.l.b16 %v4186
    %v4888 = vunpack.c.h.b16 %v4186
    %v4889 = vunpack.c.l.b16 %v4187
    %v4890 = vunpack.c.h.b16 %v4187
    %v4891 = vunpack.c.l.b16 %v4188
    %v4892 = vunpack.c.h.b16 %v4188
    %v4893 = vunpack.c.l.b16 %v4189
    %v4894 = vunpack.c.h.b16 %v4189
    %v4895 = vunpack.c.l.b16 %v4190
    %v4896 = vunpack.c.h.b16 %v4190
    %v4897 = vunpack.c.l.b16 %v4191
    %v4898 = vunpack.c.h.b16 %v4191
    %v4899 = vunpack.c.l.b16 %v4192
    %v4900 = vunpack.c.h.b16 %v4192
    %v4901 = vunpack.c.l.b16 %v4193
    %v4902 = vunpack.c.h.b16 %v4193
    %v4903 = vunpack.c.l.b16 %v4194
    %v4904 = vunpack.c.h.b16 %v4194
    %v4905 = vunpack.c.l.b16 %v4195
    %v4906 = vunpack.c.h.b16 %v4195
    %v4907 = vunpack.c.l.b16 %v4196
    %v4908 = vunpack.c.h.b16 %v4196
    %v4909 = vunpack.c.l.b16 %v4197
    %v4910 = vunpack.c.h.b16 %v4197
    %v4911 = vunpack.c.l.b16 %v4198
    %v4912 = vunpack.c.h.b16 %v4198
    %v4913 = vunpack.c.l.b16 %v4199
    %v4914 = vunpack.c.h.b16 %v4199
    %v4915 = vunpack.c.l.b16 %v4200
    %v4916 = vunpack.c.h.b16 %v4200
    %v4917 = vunpack.c.l.b16 %v4201
    %v4918 = vunpack.c.h.b16 %v4201
    %v4919 = vunpack.c.l.b16 %v4202
    %v4920 = vunpack.c.h.b16 %v4202
    %v4921 = vunpack.c.l.b16 %v4203
    %v4922 = vunpack.c.h.b16 %v4203
    %v4923 = vunpack.c.l.b16 %v4204
    %v4924 = vunpack.c.h.b16 %v4204
    %v4925 = vunpack.c.l.b16 %v4205
    %v4926 = vunpack.c.h.b16 %v4205
    %v4927 = vunpack.c.l.b16 %v4206
    %v4928 = vunpack.c.h.b16 %v4206
    %v4929 = vunpack.c.l.b16 %v4207
    %v4930 = vunpack.c.h.b16 %v4207
    %v4931 = vunpack.c.l.b16 %v4208
    %v4932 = vunpack.c.h.b16 %v4208
    %v4933 = vunpack.c.l.b16 %v4209
    %v4934 = vunpack.c.h.b16 %v4209
    %v4935 = vunpack.c.l.b16 %v4210
    %v4936 = vunpack.c.h.b16 %v4210
    %v4937 = vunpack.c.l.b16 %v4211
    %v4938 = vunpack.c.h.b16 %v4211
    %v4939 = vunpack.c.l.b16 %v4212
    %v4940 = vunpack.c.h.b16 %v4212
    %v4941 = vunpack.c.l.b16 %v4213
    %v4942 = vunpack.c.h.b16 %v4213
    %v4943 = vunpack.c.l.b16 %v4214
    %v4944 = vunpack.c.h.b16 %v4214
    %v4945 = vunpack.c.l.b16 %v4215
    %v4946 = vunpack.c.h.b16 %v4215
    %v4947 = vunpack.c.l.b16 %v4216
    %v4948 = vunpack.c.h.b16 %v4216
    %v4949 = vunpack.c.l.b16 %v4217
    %v4950 = vunpack.c.h.b16 %v4217
    %v4951 = vunpack.c.l.b16 %v4218
    %v4952 = vunpack.c.h.b16 %v4218
    %v4953 = vunpack.c.l.b16 %v4219
    %v4954 = vunpack.c.h.b16 %v4219
    %v4955 = vunpack.c.l.b16 %v4220
    %v4956 = vunpack.c.h.b16 %v4220
    %v4957 = vunpack.c.l.b16 %v4221
    %v4958 = vunpack.c.h.b16 %v4221
    %v4959 = vunpack.c.l.b16 %v4222
    %v4960 = vunpack.c.h.b16 %v4222
    %v4961 = vunpack.c.l.b16 %v4223
    %v4962 = vunpack.c.h.b16 %v4223
    %v4963 = vunpack.c.l.b16 %v4224
    %v4964 = vunpack.c.h.b16 %v4224
    %v4965 = vunpack.c.l.b16 %v4225
    %v4966 = vunpack.c.h.b16 %v4225
    %v4967 = vunpack.c.l.b16 %v4226
    %v4968 = vunpack.c.h.b16 %v4226
    %v4969 = vunpack.c.l.b16 %v4227
    %v4970 = vunpack.c.h.b16 %v4227
    %v4971 = vunpack.c.l.b16 %v4228
    %v4972 = vunpack.c.h.b16 %v4228
    %v4973 = vunpack.c.l.b16 %v4229
    %v4974 = vunpack.c.h.b16 %v4229
    %v4975 = vunpack.c.l.b16 %v4230
    %v4976 = vunpack.c.h.b16 %v4230
    %v4977 = vunpack.c.l.b16 %v4231
    %v4978 = vunpack.c.h.b16 %v4231
    %v4979 = vunpack.c.l.b16 %v4232
    %v4980 = vunpack.c.h.b16 %v4232
    %v4981 = vunpack.c.l.b16 %v4233
    %v4982 = vunpack.c.h.b16 %v4233
    %v4983 = vunpack.c.l.b16 %v4234
    %v4984 = vunpack.c.h.b16 %v4234
    %v4985 = vunpack.c.l.b16 %v4235
    %v4986 = vunpack.c.h.b16 %v4235
    %v4987 = vunpack.c.l.b16 %v4236
    %v4988 = vunpack.c.h.b16 %v4236
    %v4989 = vunpack.c.l.b16 %v4237
    %v4990 = vunpack.c.h.b16 %v4237
    %v4991 = vunpack.c.l.b16 %v4238
    %v4992 = vunpack.c.h.b16 %v4238
    %v4993 = vunpack.c.l.b16 %v4239
    %v4994 = vunpack.c.h.b16 %v4239
    %v4995 = vunpack.c.l.b16 %v4240
    %v4996 = vunpack.c.h.b16 %v4240
    %v4997 = vunpack.c.l.b16 %v4241
    %v4998 = vunpack.c.h.b16 %v4241
    %v4999 = vunpack.c.l.b16 %v4242
    %v5000 = vunpack.c.h.b16 %v4242
    %v5001 = vunpack.c.l.b16 %v4243
    %v5002 = vunpack.c.h.b16 %v4243
    %v5003 = vunpack.c.l.b16 %v4244
    %v5004 = vunpack.c.h.b16 %v4244
    %v5005 = vunpack.c.l.b16 %v4245
    %v5006 = vunpack.c.h.b16 %v4245
    %v5007 = vunpack.c.l.b16 %v4246
    %v5008 = vunpack.c.h.b16 %v4246
    %v5009 = vunpack.c.l.b16 %v4247
    %v5010 = vunpack.c.h.b16 %v4247
    %v5011 = vunpack.c.l.b16 %v4248
    %v5012 = vunpack.c.h.b16 %v4248
    %v5013 = vunpack.c.l.b16 %v4249
    %v5014 = vunpack.c.h.b16 %v4249
    %v5015 = vunpack.c.l.b16 %v4250
    %v5016 = vunpack.c.h.b16 %v4250
    %v5017 = vunpack.c.l.b16 %v4251
    %v5018 = vunpack.c.h.b16 %v4251
    %v5019 = vunpack.c.l.b16 %v4252
    %v5020 = vunpack.c.h.b16 %v4252
    %v5021 = vpack.c.b16 %v4511, %v4509
    %v5022 = vpack.c.b16 %v4512, %v4510
    %v5023 = vpack.c.b16 %v4515, %v4513
    %v5024 = vpack.c.b16 %v4516, %v4514
    %v5025 = vpack.c.b16 %v4519, %v4517
    %v5026 = vpack.c.b16 %v4520, %v4518
    %v5027 = vpack.c.b16 %v4523, %v4521
    %v5028 = vpack.c.b16 %v4524, %v4522
    %v5029 = vpack.c.b16 %v4527, %v4525
    %v5030 = vpack.c.b16 %v4528, %v4526
    %v5031 = vpack.c.b16 %v4531, %v4529
    %v5032 = vpack.c.b16 %v4532, %v4530
    %v5033 = vpack.c.b16 %v4535, %v4533
    %v5034 = vpack.c.b16 %v4536, %v4534
    %v5035 = vpack.c.b16 %v4539, %v4537
    %v5036 = vpack.c.b16 %v4540, %v4538
    %v5037 = vpack.c.b16 %v4543, %v4541
    %v5038 = vpack.c.b16 %v4544, %v4542
    %v5039 = vpack.c.b16 %v4547, %v4545
    %v5040 = vpack.c.b16 %v4548, %v4546
    %v5041 = vpack.c.b16 %v4551, %v4549
    %v5042 = vpack.c.b16 %v4552, %v4550
    %v5043 = vpack.c.b16 %v4555, %v4553
    %v5044 = vpack.c.b16 %v4556, %v4554
    %v5045 = vpack.c.b16 %v4559, %v4557
    %v5046 = vpack.c.b16 %v4560, %v4558
    %v5047 = vpack.c.b16 %v4563, %v4561
    %v5048 = vpack.c.b16 %v4564, %v4562
    %v5049 = vpack.c.b16 %v4567, %v4565
    %v5050 = vpack.c.b16 %v4568, %v4566
    %v5051 = vpack.c.b16 %v4571, %v4569
    %v5052 = vpack.c.b16 %v4572, %v4570
    %v5053 = vpack.c.b16 %v4575, %v4573
    %v5054 = vpack.c.b16 %v4576, %v4574
    %v5055 = vpack.c.b16 %v4579, %v4577
    %v5056 = vpack.c.b16 %v4580, %v4578
    %v5057 = vpack.c.b16 %v4583, %v4581
    %v5058 = vpack.c.b16 %v4584, %v4582
    %v5059 = vpack.c.b16 %v4587, %v4585
    %v5060 = vpack.c.b16 %v4588, %v4586
    %v5061 = vpack.c.b16 %v4591, %v4589
    %v5062 = vpack.c.b16 %v4592, %v4590
    %v5063 = vpack.c.b16 %v4595, %v4593
    %v5064 = vpack.c.b16 %v4596, %v4594
    %v5065 = vpack.c.b16 %v4599, %v4597
    %v5066 = vpack.c.b16 %v4600, %v4598
    %v5067 = vpack.c.b16 %v4603, %v4601
    %v5068 = vpack.c.b16 %v4604, %v4602
    %v5069 = vpack.c.b16 %v4607, %v4605
    %v5070 = vpack.c.b16 %v4608, %v4606
    %v5071 = vpack.c.b16 %v4611, %v4609
    %v5072 = vpack.c.b16 %v4612, %v4610
    %v5073 = vpack.c.b16 %v4615, %v4613
    %v5074 = vpack.c.b16 %v4616, %v4614
    %v5075 = vpack.c.b16 %v4619, %v4617
    %v5076 = vpack.c.b16 %v4620, %v4618
    %v5077 = vpack.c.b16 %v4623, %v4621
    %v5078 = vpack.c.b16 %v4624, %v4622
    %v5079 = vpack.c.b16 %v4627, %v4625
    %v5080 = vpack.c.b16 %v4628, %v4626
    %v5081 = vpack.c.b16 %v4631, %v4629
    %v5082 = vpack.c.b16 %v4632, %v4630
    %v5083 = vpack.c.b16 %v4635, %v4633
    %v5084 = vpack.c.b16 %v4636, %v4634
    %v5085 = vpack.c.b16 %v4639, %v4637
    %v5086 = vpack.c.b16 %v4640, %v4638
    %v5087 = vpack.c.b16 %v4643, %v4641
    %v5088 = vpack.c.b16 %v4644, %v4642
    %v5089 = vpack.c.b16 %v4647, %v4645
    %v5090 = vpack.c.b16 %v4648, %v4646
    %v5091 = vpack.c.b16 %v4651, %v4649
    %v5092 = vpack.c.b16 %v4652, %v4650
    %v5093 = vpack.c.b16 %v4655, %v4653
    %v5094 = vpack.c.b16 %v4656, %v4654
    %v5095 = vpack.c.b16 %v4659, %v4657
    %v5096 = vpack.c.b16 %v4660, %v4658
    %v5097 = vpack.c.b16 %v4663, %v4661
    %v5098 = vpack.c.b16 %v4664, %v4662
    %v5099 = vpack.c.b16 %v4667, %v4665
    %v5100 = vpack.c.b16 %v4668, %v4666
    %v5101 = vpack.c.b16 %v4671, %v4669
    %v5102 = vpack.c.b16 %v4672, %v4670
    %v5103 = vpack.c.b16 %v4675, %v4673
    %v5104 = vpack.c.b16 %v4676, %v4674
    %v5105 = vpack.c.b16 %v4679, %v4677
    %v5106 = vpack.c.b16 %v4680, %v4678
    %v5107 = vpack.c.b16 %v4683, %v4681
    %v5108 = vpack.c.b16 %v4684, %v4682
    %v5109 = vpack.c.b16 %v4687, %v4685
    %v5110 = vpack.c.b16 %v4688, %v4686
    %v5111 = vpack.c.b16 %v4691, %v4689
    %v5112 = vpack.c.b16 %v4692, %v4690
    %v5113 = vpack.c.b16 %v4695, %v4693
    %v5114 = vpack.c.b16 %v4696, %v4694
    %v5115 = vpack.c.b16 %v4699, %v4697
    %v5116 = vpack.c.b16 %v4700, %v4698
    %v5117 = vpack.c.b16 %v4703, %v4701
    %v5118 = vpack.c.b16 %v4704, %v4702
    %v5119 = vpack.c.b16 %v4707, %v4705
    %v5120 = vpack.c.b16 %v4708, %v4706
    %v5121 = vpack.c.b16 %v4711, %v4709
    %v5122 = vpack.c.b16 %v4712, %v4710
    %v5123 = vpack.c.b16 %v4715, %v4713
    %v5124 = vpack.c.b16 %v4716, %v4714
    %v5125 = vpack.c.b16 %v4719, %v4717
    %v5126 = vpack.c.b16 %v4720, %v4718
    %v5127 = vpack.c.b16 %v4723, %v4721
    %v5128 = vpack.c.b16 %v4724, %v4722
    %v5129 = vpack.c.b16 %v4727, %v4725
    %v5130 = vpack.c.b16 %v4728, %v4726
    %v5131 = vpack.c.b16 %v4731, %v4729
    %v5132 = vpack.c.b16 %v4732, %v4730
    %v5133 = vpack.c.b16 %v4735, %v4733
    %v5134 = vpack.c.b16 %v4736, %v4734
    %v5135 = vpack.c.b16 %v4739, %v4737
    %v5136 = vpack.c.b16 %v4740, %v4738
    %v5137 = vpack.c.b16 %v4743, %v4741
    %v5138 = vpack.c.b16 %v4744, %v4742
    %v5139 = vpack.c.b16 %v4747, %v4745
    %v5140 = vpack.c.b16 %v4748, %v4746
    %v5141 = vpack.c.b16 %v4751, %v4749
    %v5142 = vpack.c.b16 %v4752, %v4750
    %v5143 = vpack.c.b16 %v4755, %v4753
    %v5144 = vpack.c.b16 %v4756, %v4754
    %v5145 = vpack.c.b16 %v4759, %v4757
    %v5146 = vpack.c.b16 %v4760, %v4758
    %v5147 = vpack.c.b16 %v4763, %v4761
    %v5148 = vpack.c.b16 %v4764, %v4762
    %v5149 = vpack.c.b16 %v4767, %v4765
    %v5150 = vpack.c.b16 %v4768, %v4766
    %v5151 = vpack.c.b16 %v4771, %v4769
    %v5152 = vpack.c.b16 %v4772, %v4770
    %v5153 = vpack.c.b16 %v4775, %v4773
    %v5154 = vpack.c.b16 %v4776, %v4774
    %v5155 = vpack.c.b16 %v4779, %v4777
    %v5156 = vpack.c.b16 %v4780, %v4778
    %v5157 = vpack.c.b16 %v4783, %v4781
    %v5158 = vpack.c.b16 %v4784, %v4782
    %v5159 = vpack.c.b16 %v4787, %v4785
    %v5160 = vpack.c.b16 %v4788, %v4786
    %v5161 = vpack.c.b16 %v4791, %v4789
    %v5162 = vpack.c.b16 %v4792, %v4790
    %v5163 = vpack.c.b16 %v4795, %v4793
    %v5164 = vpack.c.b16 %v4796, %v4794
    %v5165 = vpack.c.b16 %v4799, %v4797
    %v5166 = vpack.c.b16 %v4800, %v4798
    %v5167 = vpack.c.b16 %v4803, %v4801
    %v5168 = vpack.c.b16 %v4804, %v4802
    %v5169 = vpack.c.b16 %v4807, %v4805
    %v5170 = vpack.c.b16 %v4808, %v4806
    %v5171 = vpack.c.b16 %v4811, %v4809
    %v5172 = vpack.c.b16 %v4812, %v4810
    %v5173 = vpack.c.b16 %v4815, %v4813
    %v5174 = vpack.c.b16 %v4816, %v4814
    %v5175 = vpack.c.b16 %v4819, %v4817
    %v5176 = vpack.c.b16 %v4820, %v4818
    %v5177 = vpack.c.b16 %v4823, %v4821
    %v5178 = vpack.c.b16 %v4824, %v4822
    %v5179 = vpack.c.b16 %v4827, %v4825
    %v5180 = vpack.c.b16 %v4828, %v4826
    %v5181 = vpack.c.b16 %v4831, %v4829
    %v5182 = vpack.c.b16 %v4832, %v4830
    %v5183 = vpack.c.b16 %v4835, %v4833
    %v5184 = vpack.c.b16 %v4836, %v4834
    %v5185 = vpack.c.b16 %v4839, %v4837
    %v5186 = vpack.c.b16 %v4840, %v4838
    %v5187 = vpack.c.b16 %v4843, %v4841
    %v5188 = vpack.c.b16 %v4844, %v4842
    %v5189 = vpack.c.b16 %v4847, %v4845
    %v5190 = vpack.c.b16 %v4848, %v4846
    %v5191 = vpack.c.b16 %v4851, %v4849
    %v5192 = vpack.c.b16 %v4852, %v4850
    %v5193 = vpack.c.b16 %v4855, %v4853
    %v5194 = vpack.c.b16 %v4856, %v4854
    %v5195 = vpack.c.b16 %v4859, %v4857
    %v5196 = vpack.c.b16 %v4860, %v4858
    %v5197 = vpack.c.b16 %v4863, %v4861
    %v5198 = vpack.c.b16 %v4864, %v4862
    %v5199 = vpack.c.b16 %v4867, %v4865
    %v5200 = vpack.c.b16 %v4868, %v4866
    %v5201 = vpack.c.b16 %v4871, %v4869
    %v5202 = vpack.c.b16 %v4872, %v4870
    %v5203 = vpack.c.b16 %v4875, %v4873
    %v5204 = vpack.c.b16 %v4876, %v4874
    %v5205 = vpack.c.b16 %v4879, %v4877
    %v5206 = vpack.c.b16 %v4880, %v4878
    %v5207 = vpack.c.b16 %v4883, %v4881
    %v5208 = vpack.c.b16 %v4884, %v4882
    %v5209 = vpack.c.b16 %v4887, %v4885
    %v5210 = vpack.c.b16 %v4888, %v4886
    %v5211 = vpack.c.b16 %v4891, %v4889
    %v5212 = vpack.c.b16 %v4892, %v4890
    %v5213 = vpack.c.b16 %v4895, %v4893
    %v5214 = vpack.c.b16 %v4896, %v4894
    %v5215 = vpack.c.b16 %v4899, %v4897
    %v5216 = vpack.c.b16 %v4900, %v4898
    %v5217 = vpack.c.b16 %v4903, %v4901
    %v5218 = vpack.c.b16 %v4904, %v4902
    %v5219 = vpack.c.b16 %v4907, %v4905
    %v5220 = vpack.c.b16 %v4908, %v4906
    %v5221 = vpack.c.b16 %v4911, %v4909
    %v5222 = vpack.c.b16 %v4912, %v4910
    %v5223 = vpack.c.b16 %v4915, %v4913
    %v5224 = vpack.c.b16 %v4916, %v4914
    %v5225 = vpack.c.b16 %v4919, %v4917
    %v5226 = vpack.c.b16 %v4920, %v4918
    %v5227 = vpack.c.b16 %v4923, %v4921
    %v5228 = vpack.c.b16 %v4924, %v4922
    %v5229 = vpack.c.b16 %v4927, %v4925
    %v5230 = vpack.c.b16 %v4928, %v4926
    %v5231 = vpack.c.b16 %v4931, %v4929
    %v5232 = vpack.c.b16 %v4932, %v4930
    %v5233 = vpack.c.b16 %v4935, %v4933
    %v5234 = vpack.c.b16 %v4936, %v4934
    %v5235 = vpack.c.b16 %v4939, %v4937
    %v5236 = vpack.c.b16 %v4940, %v4938
    %v5237 = vpack.c.b16 %v4943, %v4941
    %v5238 = vpack.c.b16 %v4944, %v4942
    %v5239 = vpack.c.b16 %v4947, %v4945
    %v5240 = vpack.c.b16 %v4948, %v4946
    %v5241 = vpack.c.b16 %v4951, %v4949
    %v5242 = vpack.c.b16 %v4952, %v4950
    %v5243 = vpack.c.b16 %v4955, %v4953
    %v5244 = vpack.c.b16 %v4956, %v4954
    %v5245 = vpack.c.b16 %v4959, %v4957
    %v5246 = vpack.c.b16 %v4960, %v4958
    %v5247 = vpack.c.b16 %v4963, %v4961
    %v5248 = vpack.c.b16 %v4964, %v4962
    %v5249 = vpack.c.b16 %v4967, %v4965
    %v5250 = vpack.c.b16 %v4968, %v4966
    %v5251 = vpack.c.b16 %v4971, %v4969
    %v5252 = vpack.c.b16 %v4972, %v4970
    %v5253 = vpack.c.b16 %v4975, %v4973
    %v5254 = vpack.c.b16 %v4976, %v4974
    %v5255 = vpack.c.b16 %v4979, %v4977
    %v5256 = vpack.c.b16 %v4980, %v4978
    %v5257 = vpack.c.b16 %v4983, %v4981
    %v5258 = vpack.c.b16 %v4984, %v4982
    %v5259 = vpack.c.b16 %v4987, %v4985
    %v5260 = vpack.c.b16 %v4988, %v4986
    %v5261 = vpack.c.b16 %v4991, %v4989
    %v5262 = vpack.c.b16 %v4992, %v4990
    %v5263 = vpack.c.b16 %v4995, %v4993
    %v5264 = vpack.c.b16 %v4996, %v4994
    %v5265 = vpack.c.b16 %v4999, %v4997
    %v5266 = vpack.c.b16 %v5000, %v4998
    %v5267 = vpack.c.b16 %v5003, %v5001
    %v5268 = vpack.c.b16 %v5004, %v5002
    %v5269 = vpack.c.b16 %v5007, %v5005
    %v5270 = vpack.c.b16 %v5008, %v5006
    %v5271 = vpack.c.b16 %v5011, %v5009
    %v5272 = vpack.c.b16 %v5012, %v5010
    %v5273 = vpack.c.b16 %v5015, %v5013
    %v5274 = vpack.c.b16 %v5016, %v5014
    %v5275 = vpack.c.b16 %v5019, %v5017
    %v5276 = vpack.c.b16 %v5020, %v5018
    %5533 = vmatpush.bf16.msra.mxu0 %v5035
    %5534 = vmatpush.bf16.msra.mxu0 %v5033
    %5535 = vmatpush.bf16.msra.mxu0 %v5031
    %5536 = vmatpush.bf16.msra.mxu0 %v5029
    %5537 = vmatpush.bf16.msra.mxu0 %v5027
    %5538 = vmatpush.bf16.msra.mxu0 %v5025
    %5539 = vmatpush.bf16.msra.mxu0 %v5023
    %5540 = vmatpush.bf16.msra.mxu0 %v5021
    %5541 = vmatmul.bf16.gmra.mxu0 %v2731
    %v5542 = vpop.f32.mrf.mxu0
    %v5543 = vadd.f32 0.0, %v5542
    %v5544 = vpop.f32.mrf.mxu0
    %v5545 = vadd.f32 0.0, %v5544
    %5546 = vdwg.mxu0
    %5547 = vmatpush.bf16.msra.mxu0 %v5051
    %5548 = vmatpush.bf16.msra.mxu0 %v5049
    %5549 = vmatpush.bf16.msra.mxu0 %v5047
    %5550 = vmatpush.bf16.msra.mxu0 %v5045
    %5551 = vmatpush.bf16.msra.mxu0 %v5043
    %5552 = vmatpush.bf16.msra.mxu0 %v5041
    %5553 = vmatpush.bf16.msra.mxu0 %v5039
    %5554 = vmatpush.bf16.msra.mxu0 %v5037
    %5555 = vmatmul.bf16.gmra.mxu0 %v2732
    %v5556 = vpop.f32.mrf.mxu0
    %v5557 = vadd.f32 %v5543, %v5556
    %v5558 = vpop.f32.mrf.mxu0
    %v5559 = vadd.f32 %v5545, %v5558
    %5560 = vdwg.mxu0
    %5561 = vmatpush.bf16.msra.mxu0 %v5067
    %5562 = vmatpush.bf16.msra.mxu0 %v5065
    %5563 = vmatpush.bf16.msra.mxu0 %v5063
    %5564 = vmatpush.bf16.msra.mxu0 %v5061
    %5565 = vmatpush.bf16.msra.mxu0 %v5059
    %5566 = vmatpush.bf16.msra.mxu0 %v5057
    %5567 = vmatpush.bf16.msra.mxu0 %v5055
    %5568 = vmatpush.bf16.msra.mxu0 %v5053
    %5569 = vmatmul.bf16.gmra.mxu0 %v2733
    %v5570 = vpop.f32.mrf.mxu0
    %v5571 = vadd.f32 %v5557, %v5570
    %v5572 = vpop.f32.mrf.mxu0
    %v5573 = vadd.f32 %v5559, %v5572
    %5574 = vdwg.mxu0
    %5575 = vmatpush.bf16.msra.mxu0 %v5083
    %5576 = vmatpush.bf16.msra.mxu0 %v5081
    %5577 = vmatpush.bf16.msra.mxu0 %v5079
    %5578 = vmatpush.bf16.msra.mxu0 %v5077
    %5579 = vmatpush.bf16.msra.mxu0 %v5075
    %5580 = vmatpush.bf16.msra.mxu0 %v5073
    %5581 = vmatpush.bf16.msra.mxu0 %v5071
    %5582 = vmatpush.bf16.msra.mxu0 %v5069
    %5583 = vmatmul.bf16.gmra.mxu0 %v2734
    %v5584 = vpop.f32.mrf.mxu0
    %v5585 = vadd.f32 %v5571, %v5584
    %v5586 = vpop.f32.mrf.mxu0
    %v5587 = vadd.f32 %v5573, %v5586
    %5588 = vdwg.mxu0
    %5589 = vmatpush.bf16.msra.mxu0 %v5099
    %5590 = vmatpush.bf16.msra.mxu0 %v5097
    %5591 = vmatpush.bf16.msra.mxu0 %v5095
    %5592 = vmatpush.bf16.msra.mxu0 %v5093
    %5593 = vmatpush.bf16.msra.mxu0 %v5091
    %5594 = vmatpush.bf16.msra.mxu0 %v5089
    %5595 = vmatpush.bf16.msra.mxu0 %v5087
    %5596 = vmatpush.bf16.msra.mxu0 %v5085
    %5597 = vmatmul.bf16.gmra.mxu0 %v2735
    %v5598 = vpop.f32.mrf.mxu0
    %v5599 = vadd.f32 %v5585, %v5598
    %v5600 = vpop.f32.mrf.mxu0
    %v5601 = vadd.f32 %v5587, %v5600
    %5602 = vdwg.mxu0
    %5603 = vmatpush.bf16.msra.mxu0 %v5115
    %5604 = vmatpush.bf16.msra.mxu0 %v5113
    %5605 = vmatpush.bf16.msra.mxu0 %v5111
    %5606 = vmatpush.bf16.msra.mxu0 %v5109
    %5607 = vmatpush.bf16.msra.mxu0 %v5107
    %5608 = vmatpush.bf16.msra.mxu0 %v5105
    %5609 = vmatpush.bf16.msra.mxu0 %v5103
    %5610 = vmatpush.bf16.msra.mxu0 %v5101
    %5611 = vmatmul.bf16.gmra.mxu0 %v2736
    %v5612 = vpop.f32.mrf.mxu0
    %v5613 = vadd.f32 %v5599, %v5612
    %v5614 = vpop.f32.mrf.mxu0
    %v5615 = vadd.f32 %v5601, %v5614
    %5616 = vdwg.mxu0
    %5617 = vmatpush.bf16.msra.mxu0 %v5131
    %5618 = vmatpush.bf16.msra.mxu0 %v5129
    %5619 = vmatpush.bf16.msra.mxu0 %v5127
    %5620 = vmatpush.bf16.msra.mxu0 %v5125
    %5621 = vmatpush.bf16.msra.mxu0 %v5123
    %5622 = vmatpush.bf16.msra.mxu0 %v5121
    %5623 = vmatpush.bf16.msra.mxu0 %v5119
    %5624 = vmatpush.bf16.msra.mxu0 %v5117
    %5625 = vmatmul.bf16.gmra.mxu0 %v2737
    %v5626 = vpop.f32.mrf.mxu0
    %v5627 = vadd.f32 %v5613, %v5626
    %v5628 = vpop.f32.mrf.mxu0
    %v5629 = vadd.f32 %v5615, %v5628
    %5630 = vdwg.mxu0
    %5631 = vmatpush.bf16.msra.mxu0 %v5147
    %5632 = vmatpush.bf16.msra.mxu0 %v5145
    %5633 = vmatpush.bf16.msra.mxu0 %v5143
    %5634 = vmatpush.bf16.msra.mxu0 %v5141
    %5635 = vmatpush.bf16.msra.mxu0 %v5139
    %5636 = vmatpush.bf16.msra.mxu0 %v5137
    %5637 = vmatpush.bf16.msra.mxu0 %v5135
    %5638 = vmatpush.bf16.msra.mxu0 %v5133
    %5639 = vmatmul.bf16.gmra.mxu0 %v2738
    %v5640 = vpop.f32.mrf.mxu0
    %v5641 = vadd.f32 %v5627, %v5640
    %v5642 = vpop.f32.mrf.mxu0
    %v5643 = vadd.f32 %v5629, %v5642
    %5644 = vdwg.mxu0
    %5645 = vmatpush.bf16.msra.mxu0 %v5163
    %5646 = vmatpush.bf16.msra.mxu0 %v5161
    %5647 = vmatpush.bf16.msra.mxu0 %v5159
    %5648 = vmatpush.bf16.msra.mxu0 %v5157
    %5649 = vmatpush.bf16.msra.mxu0 %v5155
    %5650 = vmatpush.bf16.msra.mxu0 %v5153
    %5651 = vmatpush.bf16.msra.mxu0 %v5151
    %5652 = vmatpush.bf16.msra.mxu0 %v5149
    %5653 = vmatmul.bf16.gmra.mxu0 %v2739
    %v5654 = vpop.f32.mrf.mxu0
    %v5655 = vadd.f32 %v5641, %v5654
    %v5656 = vpop.f32.mrf.mxu0
    %v5657 = vadd.f32 %v5643, %v5656
    %5658 = vdwg.mxu0
    %5659 = vmatpush.bf16.msra.mxu0 %v5179
    %5660 = vmatpush.bf16.msra.mxu0 %v5177
    %5661 = vmatpush.bf16.msra.mxu0 %v5175
    %5662 = vmatpush.bf16.msra.mxu0 %v5173
    %5663 = vmatpush.bf16.msra.mxu0 %v5171
    %5664 = vmatpush.bf16.msra.mxu0 %v5169
    %5665 = vmatpush.bf16.msra.mxu0 %v5167
    %5666 = vmatpush.bf16.msra.mxu0 %v5165
    %5667 = vmatmul.bf16.gmra.mxu0 %v2740
    %v5668 = vpop.f32.mrf.mxu0
    %v5669 = vadd.f32 %v5655, %v5668
    %v5670 = vpop.f32.mrf.mxu0
    %v5671 = vadd.f32 %v5657, %v5670
    %5672 = vdwg.mxu0
    %5673 = vmatpush.bf16.msra.mxu0 %v5195
    %5674 = vmatpush.bf16.msra.mxu0 %v5193
    %5675 = vmatpush.bf16.msra.mxu0 %v5191
    %5676 = vmatpush.bf16.msra.mxu0 %v5189
    %5677 = vmatpush.bf16.msra.mxu0 %v5187
    %5678 = vmatpush.bf16.msra.mxu0 %v5185
    %5679 = vmatpush.bf16.msra.mxu0 %v5183
    %5680 = vmatpush.bf16.msra.mxu0 %v5181
    %5681 = vmatmul.bf16.gmra.mxu0 %v2741
    %v5682 = vpop.f32.mrf.mxu0
    %v5683 = vadd.f32 %v5669, %v5682
    %v5684 = vpop.f32.mrf.mxu0
    %v5685 = vadd.f32 %v5671, %v5684
    %5686 = vdwg.mxu0
    %5687 = vmatpush.bf16.msra.mxu0 %v5211
    %5688 = vmatpush.bf16.msra.mxu0 %v5209
    %5689 = vmatpush.bf16.msra.mxu0 %v5207
    %5690 = vmatpush.bf16.msra.mxu0 %v5205
    %5691 = vmatpush.bf16.msra.mxu0 %v5203
    %5692 = vmatpush.bf16.msra.mxu0 %v5201
    %5693 = vmatpush.bf16.msra.mxu0 %v5199
    %5694 = vmatpush.bf16.msra.mxu0 %v5197
    %5695 = vmatmul.bf16.gmra.mxu0 %v2742
    %v5696 = vpop.f32.mrf.mxu0
    %v5697 = vadd.f32 %v5683, %v5696
    %v5698 = vpop.f32.mrf.mxu0
    %v5699 = vadd.f32 %v5685, %v5698
    %5700 = vdwg.mxu0
    %5701 = vmatpush.bf16.msra.mxu0 %v5227
    %5702 = vmatpush.bf16.msra.mxu0 %v5225
    %5703 = vmatpush.bf16.msra.mxu0 %v5223
    %5704 = vmatpush.bf16.msra.mxu0 %v5221
    %5705 = vmatpush.bf16.msra.mxu0 %v5219
    %5706 = vmatpush.bf16.msra.mxu0 %v5217
    %5707 = vmatpush.bf16.msra.mxu0 %v5215
    %5708 = vmatpush.bf16.msra.mxu0 %v5213
    %5709 = vmatmul.bf16.gmra.mxu0 %v2743
    %v5710 = vpop.f32.mrf.mxu0
    %v5711 = vadd.f32 %v5697, %v5710
    %v5712 = vpop.f32.mrf.mxu0
    %v5713 = vadd.f32 %v5699, %v5712
    %5714 = vdwg.mxu0
    %5715 = vmatpush.bf16.msra.mxu0 %v5243
    %5716 = vmatpush.bf16.msra.mxu0 %v5241
    %5717 = vmatpush.bf16.msra.mxu0 %v5239
    %5718 = vmatpush.bf16.msra.mxu0 %v5237
    %5719 = vmatpush.bf16.msra.mxu0 %v5235
    %5720 = vmatpush.bf16.msra.mxu0 %v5233
    %5721 = vmatpush.bf16.msra.mxu0 %v5231
    %5722 = vmatpush.bf16.msra.mxu0 %v5229
    %5723 = vmatmul.bf16.gmra.mxu0 %v2744
    %v5724 = vpop.f32.mrf.mxu0
    %v5725 = vadd.f32 %v5711, %v5724
    %v5726 = vpop.f32.mrf.mxu0
    %v5727 = vadd.f32 %v5713, %v5726
    %5728 = vdwg.mxu0
    %5729 = vmatpush.bf16.msra.mxu0 %v5259
    %5730 = vmatpush.bf16.msra.mxu0 %v5257
    %5731 = vmatpush.bf16.msra.mxu0 %v5255
    %5732 = vmatpush.bf16.msra.mxu0 %v5253
    %5733 = vmatpush.bf16.msra.mxu0 %v5251
    %5734 = vmatpush.bf16.msra.mxu0 %v5249
    %5735 = vmatpush.bf16.msra.mxu0 %v5247
    %5736 = vmatpush.bf16.msra.mxu0 %v5245
    %5737 = vmatmul.bf16.gmra.mxu0 %v2745
    %v5738 = vpop.f32.mrf.mxu0
    %v5739 = vadd.f32 %v5725, %v5738
    %v5740 = vpop.f32.mrf.mxu0
    %v5741 = vadd.f32 %v5727, %v5740
    %5742 = vdwg.mxu0
    %5743 = vmatpush.bf16.msra.mxu0 %v5275
    %5744 = vmatpush.bf16.msra.mxu0 %v5273
    %5745 = vmatpush.bf16.msra.mxu0 %v5271
    %5746 = vmatpush.bf16.msra.mxu0 %v5269
    %5747 = vmatpush.bf16.msra.mxu0 %v5267
    %5748 = vmatpush.bf16.msra.mxu0 %v5265
    %5749 = vmatpush.bf16.msra.mxu0 %v5263
    %5750 = vmatpush.bf16.msra.mxu0 %v5261
    %5751 = vmatmul.bf16.gmra.mxu0 %v2746
    %v5752 = vpop.f32.mrf.mxu0
    %v5753 = vadd.f32 %v5739, %v5752
    %v5754 = vpop.f32.mrf.mxu0
    %v5755 = vadd.f32 %v5741, %v5754
    %5756 = vdwg.mxu0
    %5757 = vmatpush.bf16.msra.mxu0 %v5036
    %5758 = vmatpush.bf16.msra.mxu0 %v5034
    %5759 = vmatpush.bf16.msra.mxu0 %v5032
    %5760 = vmatpush.bf16.msra.mxu0 %v5030
    %5761 = vmatpush.bf16.msra.mxu0 %v5028
    %5762 = vmatpush.bf16.msra.mxu0 %v5026
    %5763 = vmatpush.bf16.msra.mxu0 %v5024
    %5764 = vmatpush.bf16.msra.mxu0 %v5022
    %5765 = vmatmul.bf16.gmra.mxu0 %v2731
    %v5766 = vpop.f32.mrf.mxu0
    %v5767 = vadd.f32 0.0, %v5766
    %v5768 = vpop.f32.mrf.mxu0
    %v5769 = vadd.f32 0.0, %v5768
    %5770 = vdwg.mxu0
    %5771 = vmatpush.bf16.msra.mxu0 %v5052
    %5772 = vmatpush.bf16.msra.mxu0 %v5050
    %5773 = vmatpush.bf16.msra.mxu0 %v5048
    %5774 = vmatpush.bf16.msra.mxu0 %v5046
    %5775 = vmatpush.bf16.msra.mxu0 %v5044
    %5776 = vmatpush.bf16.msra.mxu0 %v5042
    %5777 = vmatpush.bf16.msra.mxu0 %v5040
    %5778 = vmatpush.bf16.msra.mxu0 %v5038
    %5779 = vmatmul.bf16.gmra.mxu0 %v2732
    %v5780 = vpop.f32.mrf.mxu0
    %v5781 = vadd.f32 %v5767, %v5780
    %v5782 = vpop.f32.mrf.mxu0
    %v5783 = vadd.f32 %v5769, %v5782
    %5784 = vdwg.mxu0
    %5785 = vmatpush.bf16.msra.mxu0 %v5068
    %5786 = vmatpush.bf16.msra.mxu0 %v5066
    %5787 = vmatpush.bf16.msra.mxu0 %v5064
    %5788 = vmatpush.bf16.msra.mxu0 %v5062
    %5789 = vmatpush.bf16.msra.mxu0 %v5060
    %5790 = vmatpush.bf16.msra.mxu0 %v5058
    %5791 = vmatpush.bf16.msra.mxu0 %v5056
    %5792 = vmatpush.bf16.msra.mxu0 %v5054
    %5793 = vmatmul.bf16.gmra.mxu0 %v2733
    %v5794 = vpop.f32.mrf.mxu0
    %v5795 = vadd.f32 %v5781, %v5794
    %v5796 = vpop.f32.mrf.mxu0
    %v5797 = vadd.f32 %v5783, %v5796
    %5798 = vdwg.mxu0
    %5799 = vmatpush.bf16.msra.mxu0 %v5084
    %5800 = vmatpush.bf16.msra.mxu0 %v5082
    %5801 = vmatpush.bf16.msra.mxu0 %v5080
    %5802 = vmatpush.bf16.msra.mxu0 %v5078
    %5803 = vmatpush.bf16.msra.mxu0 %v5076
    %5804 = vmatpush.bf16.msra.mxu0 %v5074
    %5805 = vmatpush.bf16.msra.mxu0 %v5072
    %5806 = vmatpush.bf16.msra.mxu0 %v5070
    %5807 = vmatmul.bf16.gmra.mxu0 %v2734
    %v5808 = vpop.f32.mrf.mxu0
    %v5809 = vadd.f32 %v5795, %v5808
    %v5810 = vpop.f32.mrf.mxu0
    %v5811 = vadd.f32 %v5797, %v5810
    %5812 = vdwg.mxu0
    %5813 = vmatpush.bf16.msra.mxu0 %v5100
    %5814 = vmatpush.bf16.msra.mxu0 %v5098
    %5815 = vmatpush.bf16.msra.mxu0 %v5096
    %5816 = vmatpush.bf16.msra.mxu0 %v5094
    %5817 = vmatpush.bf16.msra.mxu0 %v5092
    %5818 = vmatpush.bf16.msra.mxu0 %v5090
    %5819 = vmatpush.bf16.msra.mxu0 %v5088
    %5820 = vmatpush.bf16.msra.mxu0 %v5086
    %5821 = vmatmul.bf16.gmra.mxu0 %v2735
    %v5822 = vpop.f32.mrf.mxu0
    %v5823 = vadd.f32 %v5809, %v5822
    %v5824 = vpop.f32.mrf.mxu0
    %v5825 = vadd.f32 %v5811, %v5824
    %5826 = vdwg.mxu0
    %5827 = vmatpush.bf16.msra.mxu0 %v5116
    %5828 = vmatpush.bf16.msra.mxu0 %v5114
    %5829 = vmatpush.bf16.msra.mxu0 %v5112
    %5830 = vmatpush.bf16.msra.mxu0 %v5110
    %5831 = vmatpush.bf16.msra.mxu0 %v5108
    %5832 = vmatpush.bf16.msra.mxu0 %v5106
    %5833 = vmatpush.bf16.msra.mxu0 %v5104
    %5834 = vmatpush.bf16.msra.mxu0 %v5102
    %5835 = vmatmul.bf16.gmra.mxu0 %v2736
    %v5836 = vpop.f32.mrf.mxu0
    %v5837 = vadd.f32 %v5823, %v5836
    %v5838 = vpop.f32.mrf.mxu0
    %v5839 = vadd.f32 %v5825, %v5838
    %5840 = vdwg.mxu0
    %5841 = vmatpush.bf16.msra.mxu0 %v5132
    %5842 = vmatpush.bf16.msra.mxu0 %v5130
    %5843 = vmatpush.bf16.msra.mxu0 %v5128
    %5844 = vmatpush.bf16.msra.mxu0 %v5126
    %5845 = vmatpush.bf16.msra.mxu0 %v5124
    %5846 = vmatpush.bf16.msra.mxu0 %v5122
    %5847 = vmatpush.bf16.msra.mxu0 %v5120
    %5848 = vmatpush.bf16.msra.mxu0 %v5118
    %5849 = vmatmul.bf16.gmra.mxu0 %v2737
    %v5850 = vpop.f32.mrf.mxu0
    %v5851 = vadd.f32 %v5837, %v5850
    %v5852 = vpop.f32.mrf.mxu0
    %v5853 = vadd.f32 %v5839, %v5852
    %5854 = vdwg.mxu0
    %5855 = vmatpush.bf16.msra.mxu0 %v5148
    %5856 = vmatpush.bf16.msra.mxu0 %v5146
    %5857 = vmatpush.bf16.msra.mxu0 %v5144
    %5858 = vmatpush.bf16.msra.mxu0 %v5142
    %5859 = vmatpush.bf16.msra.mxu0 %v5140
    %5860 = vmatpush.bf16.msra.mxu0 %v5138
    %5861 = vmatpush.bf16.msra.mxu0 %v5136
    %5862 = vmatpush.bf16.msra.mxu0 %v5134
    %5863 = vmatmul.bf16.gmra.mxu0 %v2738
    %v5864 = vpop.f32.mrf.mxu0
    %v5865 = vadd.f32 %v5851, %v5864
    %v5866 = vpop.f32.mrf.mxu0
    %v5867 = vadd.f32 %v5853, %v5866
    %5868 = vdwg.mxu0
    %5869 = vmatpush.bf16.msra.mxu0 %v5164
    %5870 = vmatpush.bf16.msra.mxu0 %v5162
    %5871 = vmatpush.bf16.msra.mxu0 %v5160
    %5872 = vmatpush.bf16.msra.mxu0 %v5158
    %5873 = vmatpush.bf16.msra.mxu0 %v5156
    %5874 = vmatpush.bf16.msra.mxu0 %v5154
    %5875 = vmatpush.bf16.msra.mxu0 %v5152
    %5876 = vmatpush.bf16.msra.mxu0 %v5150
    %5877 = vmatmul.bf16.gmra.mxu0 %v2739
    %v5878 = vpop.f32.mrf.mxu0
    %v5879 = vadd.f32 %v5865, %v5878
    %v5880 = vpop.f32.mrf.mxu0
    %v5881 = vadd.f32 %v5867, %v5880
    %5882 = vdwg.mxu0
    %5883 = vmatpush.bf16.msra.mxu0 %v5180
    %5884 = vmatpush.bf16.msra.mxu0 %v5178
    %5885 = vmatpush.bf16.msra.mxu0 %v5176
    %5886 = vmatpush.bf16.msra.mxu0 %v5174
    %5887 = vmatpush.bf16.msra.mxu0 %v5172
    %5888 = vmatpush.bf16.msra.mxu0 %v5170
    %5889 = vmatpush.bf16.msra.mxu0 %v5168
    %5890 = vmatpush.bf16.msra.mxu0 %v5166
    %5891 = vmatmul.bf16.gmra.mxu0 %v2740
    %v5892 = vpop.f32.mrf.mxu0
    %v5893 = vadd.f32 %v5879, %v5892
    %v5894 = vpop.f32.mrf.mxu0
    %v5895 = vadd.f32 %v5881, %v5894
    %5896 = vdwg.mxu0
    %5897 = vmatpush.bf16.msra.mxu0 %v5196
    %5898 = vmatpush.bf16.msra.mxu0 %v5194
    %5899 = vmatpush.bf16.msra.mxu0 %v5192
    %5900 = vmatpush.bf16.msra.mxu0 %v5190
    %5901 = vmatpush.bf16.msra.mxu0 %v5188
    %5902 = vmatpush.bf16.msra.mxu0 %v5186
    %5903 = vmatpush.bf16.msra.mxu0 %v5184
    %5904 = vmatpush.bf16.msra.mxu0 %v5182
    %5905 = vmatmul.bf16.gmra.mxu0 %v2741
    %v5906 = vpop.f32.mrf.mxu0
    %v5907 = vadd.f32 %v5893, %v5906
    %v5908 = vpop.f32.mrf.mxu0
    %v5909 = vadd.f32 %v5895, %v5908
    %5910 = vdwg.mxu0
    %5911 = vmatpush.bf16.msra.mxu0 %v5212
    %5912 = vmatpush.bf16.msra.mxu0 %v5210
    %5913 = vmatpush.bf16.msra.mxu0 %v5208
    %5914 = vmatpush.bf16.msra.mxu0 %v5206
    %5915 = vmatpush.bf16.msra.mxu0 %v5204
    %5916 = vmatpush.bf16.msra.mxu0 %v5202
    %5917 = vmatpush.bf16.msra.mxu0 %v5200
    %5918 = vmatpush.bf16.msra.mxu0 %v5198
    %5919 = vmatmul.bf16.gmra.mxu0 %v2742
    %v5920 = vpop.f32.mrf.mxu0
    %v5921 = vadd.f32 %v5907, %v5920
    %v5922 = vpop.f32.mrf.mxu0
    %v5923 = vadd.f32 %v5909, %v5922
    %5924 = vdwg.mxu0
    %5925 = vmatpush.bf16.msra.mxu0 %v5228
    %5926 = vmatpush.bf16.msra.mxu0 %v5226
    %5927 = vmatpush.bf16.msra.mxu0 %v5224
    %5928 = vmatpush.bf16.msra.mxu0 %v5222
    %5929 = vmatpush.bf16.msra.mxu0 %v5220
    %5930 = vmatpush.bf16.msra.mxu0 %v5218
    %5931 = vmatpush.bf16.msra.mxu0 %v5216
    %5932 = vmatpush.bf16.msra.mxu0 %v5214
    %5933 = vmatmul.bf16.gmra.mxu0 %v2743
    %v5934 = vpop.f32.mrf.mxu0
    %v5935 = vadd.f32 %v5921, %v5934
    %v5936 = vpop.f32.mrf.mxu0
    %v5937 = vadd.f32 %v5923, %v5936
    %5938 = vdwg.mxu0
    %5939 = vmatpush.bf16.msra.mxu0 %v5244
    %5940 = vmatpush.bf16.msra.mxu0 %v5242
    %5941 = vmatpush.bf16.msra.mxu0 %v5240
    %5942 = vmatpush.bf16.msra.mxu0 %v5238
    %5943 = vmatpush.bf16.msra.mxu0 %v5236
    %5944 = vmatpush.bf16.msra.mxu0 %v5234
    %5945 = vmatpush.bf16.msra.mxu0 %v5232
    %5946 = vmatpush.bf16.msra.mxu0 %v5230
    %5947 = vmatmul.bf16.gmra.mxu0 %v2744
    %v5948 = vpop.f32.mrf.mxu0
    %v5949 = vadd.f32 %v5935, %v5948
    %v5950 = vpop.f32.mrf.mxu0
    %v5951 = vadd.f32 %v5937, %v5950
    %5952 = vdwg.mxu0
    %5953 = vmatpush.bf16.msra.mxu0 %v5260
    %5954 = vmatpush.bf16.msra.mxu0 %v5258
    %5955 = vmatpush.bf16.msra.mxu0 %v5256
    %5956 = vmatpush.bf16.msra.mxu0 %v5254
    %5957 = vmatpush.bf16.msra.mxu0 %v5252
    %5958 = vmatpush.bf16.msra.mxu0 %v5250
    %5959 = vmatpush.bf16.msra.mxu0 %v5248
    %5960 = vmatpush.bf16.msra.mxu0 %v5246
    %5961 = vmatmul.bf16.gmra.mxu0 %v2745
    %v5962 = vpop.f32.mrf.mxu0
    %v5963 = vadd.f32 %v5949, %v5962
    %v5964 = vpop.f32.mrf.mxu0
    %v5965 = vadd.f32 %v5951, %v5964
    %5966 = vdwg.mxu0
    %5967 = vmatpush.bf16.msra.mxu0 %v5276
    %5968 = vmatpush.bf16.msra.mxu0 %v5274
    %5969 = vmatpush.bf16.msra.mxu0 %v5272
    %5970 = vmatpush.bf16.msra.mxu0 %v5270
    %5971 = vmatpush.bf16.msra.mxu0 %v5268
    %5972 = vmatpush.bf16.msra.mxu0 %v5266
    %5973 = vmatpush.bf16.msra.mxu0 %v5264
    %5974 = vmatpush.bf16.msra.mxu0 %v5262
    %5975 = vmatmul.bf16.gmra.mxu0 %v2746
    %v5976 = vpop.f32.mrf.mxu0
    %v5977 = vadd.f32 %v5963, %v5976
    %v5978 = vpop.f32.mrf.mxu0
    %v5979 = vadd.f32 %v5965, %v5978
    %5980 = vdwg.mxu0
    %v5981 = vld [vmem:[%s6] sm:$0xff]
    %v5982 = vld [vmem:[%s6 + $0x8] sm:$0xff]
    %v5983 = vld [vmem:[%s6 + $0x10] sm:$0xff]
    %v5984 = vld [vmem:[%s6 + $0x18] sm:$0xff]
    %v5985 = vld [vmem:[%s6 + $0x20] sm:$0xff]
    %v5986 = vld [vmem:[%s6 + $0x28] sm:$0xff]
    %v5987 = vld [vmem:[%s6 + $0x30] sm:$0xff]
    %v5988 = vld [vmem:[%s6 + $0x38] sm:$0xff]
    %vm5989 = vcmask 261120
    %v5991 = vsel %vm5989, %v3995, 0
    %v5994 = vsel %vm5989, %v3996, 0
    %5996 = vmatpush.msra.mxu0 0.0
    %5997 = vmatpush.msra.mxu0 0.0
    %5998 = vmatpush.msra.mxu0 0.0
    %5999 = vmatpush.msra.mxu0 0.0
    %6000 = vmatpush.msra.mxu0 0.0
    %6001 = vmatpush.msra.mxu0 0.0
    %6002 = vmatpush.msra.mxu0 0.0
    %6003 = vmatpush.msra.mxu0 0.0
    %6004 = vmatpush.msra.mxu0 0.0
    %6005 = vmatpush.msra.mxu0 0.0
    %6006 = vmatpush.msra.mxu0 0.0
    %6007 = vmatpush.msra.mxu0 0.0
    %6008 = vmatpush.msra.mxu0 %v5987
    %6009 = vmatpush.msra.mxu0 %v5985
    %6010 = vmatpush.msra.mxu0 %v5983
    %6011 = vmatpush.msra.mxu0 %v5981
    %6012 = vmatmul.f32.gmra.mxu0 %v5991
    %v6013 = vpop.f32.mrf.mxu0
    %v6014 = vadd.f32 0.0, %v6013
    %6015 = vmatmul.f32.gmra.mxu0 %v5994
    %v6016 = vpop.f32.mrf.mxu0
    %v6017 = vadd.f32 0.0, %v6016
    %6018 = vdwg.mxu0
    %6019 = vmatpush.msra.mxu0 0.0
    %6020 = vmatpush.msra.mxu0 0.0
    %6021 = vmatpush.msra.mxu0 0.0
    %6022 = vmatpush.msra.mxu0 0.0
    %6023 = vmatpush.msra.mxu0 0.0
    %6024 = vmatpush.msra.mxu0 0.0
    %6025 = vmatpush.msra.mxu0 0.0
    %6026 = vmatpush.msra.mxu0 0.0
    %6027 = vmatpush.msra.mxu0 0.0
    %6028 = vmatpush.msra.mxu0 0.0
    %6029 = vmatpush.msra.mxu0 0.0
    %6030 = vmatpush.msra.mxu0 0.0
    %6031 = vmatpush.msra.mxu0 %v5988
    %6032 = vmatpush.msra.mxu0 %v5986
    %6033 = vmatpush.msra.mxu0 %v5984
    %6034 = vmatpush.msra.mxu0 %v5982
    %6035 = vmatmul.f32.gmra.mxu0 %v5991
    %v6036 = vpop.f32.mrf.mxu0
    %v6037 = vadd.f32 0.0, %v6036
    %6038 = vmatmul.f32.gmra.mxu0 %v5994
    %v6039 = vpop.f32.mrf.mxu0
    %v6040 = vadd.f32 0.0, %v6039
    %6041 = vdwg.mxu0
    %v6042 = vmul.f32 %v5753, %v6014
    %v6043 = vmul.f32 %v5977, %v6037
    %v6044 = vmul.f32 %v5755, %v6017
    %v6045 = vmul.f32 %v5979, %v6040
    %v6046 = vld [vmem:[%s8] sm:$0x3]
    %v6048 = vperm.slane %v6046, 0
    %v6049 = vperm.slane %v6046, 1
    %v6052 = vadd.f32 %v6042, %v6048
    %v6053 = vadd.f32 %v6043, %v6049
    %v6054 = vadd.f32 %v6044, %v6048
    %v6055 = vadd.f32 %v6045, %v6049
    %v6056 = vpack.c.bf16 %v6054, %v6052
    %v6057 = vpack.c.bf16 %v6055, %v6053
    %v6058 = vld [vmem:[%s9] sm:$0xf]
    %v6059 = vld [vmem:[%s9 + $0x4] sm:$0xf]
    %v6060 = vld [vmem:[%s9 + $0x8] sm:$0xf]
    %v6061 = vld [vmem:[%s9 + $0xc] sm:$0xf]
    %v6062 = vld [vmem:[%s9 + $0x10] sm:$0xf]
    %v6063 = vld [vmem:[%s9 + $0x14] sm:$0xf]
    %v6064 = vld [vmem:[%s9 + $0x18] sm:$0xf]
    %v6065 = vld [vmem:[%s9 + $0x1c] sm:$0xf]
    %v6066 = vld [vmem:[%s9 + $0x20] sm:$0xf]
    %v6067 = vld [vmem:[%s9 + $0x24] sm:$0xf]
    %v6068 = vld [vmem:[%s9 + $0x28] sm:$0xf]
    %v6069 = vld [vmem:[%s9 + $0x2c] sm:$0xf]
    %v6070 = vld [vmem:[%s9 + $0x30] sm:$0xf]
    %v6071 = vld [vmem:[%s9 + $0x34] sm:$0xf]
    %v6072 = vld [vmem:[%s9 + $0x38] sm:$0xf]
    %v6073 = vld [vmem:[%s9 + $0x3c] sm:$0xf]
    %v6074 = vld [vmem:[%s9 + $0x40] sm:$0xf]
    %v6075 = vld [vmem:[%s9 + $0x44] sm:$0xf]
    %v6076 = vld [vmem:[%s9 + $0x48] sm:$0xf]
    %v6077 = vld [vmem:[%s9 + $0x4c] sm:$0xf]
    %v6078 = vld [vmem:[%s9 + $0x50] sm:$0xf]
    %v6079 = vld [vmem:[%s9 + $0x54] sm:$0xf]
    %v6080 = vld [vmem:[%s9 + $0x58] sm:$0xf]
    %v6081 = vld [vmem:[%s9 + $0x5c] sm:$0xf]
    %v6082 = vld [vmem:[%s9 + $0x60] sm:$0xf]
    %v6083 = vld [vmem:[%s9 + $0x64] sm:$0xf]
    %v6084 = vld [vmem:[%s9 + $0x68] sm:$0xf]
    %v6085 = vld [vmem:[%s9 + $0x6c] sm:$0xf]
    %v6086 = vld [vmem:[%s9 + $0x70] sm:$0xf]
    %v6087 = vld [vmem:[%s9 + $0x74] sm:$0xf]
    %v6088 = vld [vmem:[%s9 + $0x78] sm:$0xf]
    %v6089 = vld [vmem:[%s9 + $0x7c] sm:$0xf]
    %v6090 = vld [vmem:[%s10] sm:$0x1]
    %v6092 = vperm.slane %v6090, 0
    %v6126 = vunpack.c.l.b16 %v6058
    %v6127 = vunpack.c.l.b16 %v6059
    %v6128 = vunpack.c.l.b16 %v6060
    %v6129 = vunpack.c.l.b16 %v6061
    %v6130 = vunpack.c.l.b16 %v6062
    %v6131 = vunpack.c.l.b16 %v6063
    %v6132 = vunpack.c.l.b16 %v6064
    %v6133 = vunpack.c.l.b16 %v6065
    %v6134 = vunpack.c.l.b16 %v6066
    %v6135 = vunpack.c.l.b16 %v6067
    %v6136 = vunpack.c.l.b16 %v6068
    %v6137 = vunpack.c.l.b16 %v6069
    %v6138 = vunpack.c.l.b16 %v6070
    %v6139 = vunpack.c.l.b16 %v6071
    %v6140 = vunpack.c.l.b16 %v6072
    %v6141 = vunpack.c.l.b16 %v6073
    %v6142 = vunpack.c.l.b16 %v6074
    %v6143 = vunpack.c.l.b16 %v6075
    %v6144 = vunpack.c.l.b16 %v6076
    %v6145 = vunpack.c.l.b16 %v6077
    %v6146 = vunpack.c.l.b16 %v6078
    %v6147 = vunpack.c.l.b16 %v6079
    %v6148 = vunpack.c.l.b16 %v6080
    %v6149 = vunpack.c.l.b16 %v6081
    %v6150 = vunpack.c.l.b16 %v6082
    %v6151 = vunpack.c.l.b16 %v6083
    %v6152 = vunpack.c.l.b16 %v6084
    %v6153 = vunpack.c.l.b16 %v6085
    %v6154 = vunpack.c.l.b16 %v6086
    %v6155 = vunpack.c.l.b16 %v6087
    %v6156 = vunpack.c.l.b16 %v6088
    %v6157 = vunpack.c.l.b16 %v6089
    %v6158 = vpack.c.b16 %v6127, %v6126
    %v6159 = vpack.c.b16 %v6129, %v6128
    %v6160 = vpack.c.b16 %v6131, %v6130
    %v6161 = vpack.c.b16 %v6133, %v6132
    %v6162 = vpack.c.b16 %v6135, %v6134
    %v6163 = vpack.c.b16 %v6137, %v6136
    %v6164 = vpack.c.b16 %v6139, %v6138
    %v6165 = vpack.c.b16 %v6141, %v6140
    %v6166 = vpack.c.b16 %v6143, %v6142
    %v6167 = vpack.c.b16 %v6145, %v6144
    %v6168 = vpack.c.b16 %v6147, %v6146
    %v6169 = vpack.c.b16 %v6149, %v6148
    %v6170 = vpack.c.b16 %v6151, %v6150
    %v6171 = vpack.c.b16 %v6153, %v6152
    %v6172 = vpack.c.b16 %v6155, %v6154
    %v6173 = vpack.c.b16 %v6157, %v6156
    %6190 = vmatpush.bf16.msra.mxu0 %v6165
    %6191 = vmatpush.bf16.msra.mxu0 %v6164
    %6192 = vmatpush.bf16.msra.mxu0 %v6163
    %6193 = vmatpush.bf16.msra.mxu0 %v6162
    %6194 = vmatpush.bf16.msra.mxu0 %v6161
    %6195 = vmatpush.bf16.msra.mxu0 %v6160
    %6196 = vmatpush.bf16.msra.mxu0 %v6159
    %6197 = vmatpush.bf16.msra.mxu0 %v6158
    %6198 = vmatmul.bf16.gmra.mxu0 %v6056
    %v6199 = vpop.f32.mrf.mxu0
    %v6200 = vadd.f32 %v6092, %v6199
    %v6201 = vpop.f32.mrf.mxu0
    %v6202 = vadd.f32 %v6092, %v6201
    %6203 = vdwg.mxu0
    %6204 = vmatpush.bf16.msra.mxu0 %v6173
    %6205 = vmatpush.bf16.msra.mxu0 %v6172
    %6206 = vmatpush.bf16.msra.mxu0 %v6171
    %6207 = vmatpush.bf16.msra.mxu0 %v6170
    %6208 = vmatpush.bf16.msra.mxu0 %v6169
    %6209 = vmatpush.bf16.msra.mxu0 %v6168
    %6210 = vmatpush.bf16.msra.mxu0 %v6167
    %6211 = vmatpush.bf16.msra.mxu0 %v6166
    %6212 = vmatmul.bf16.gmra.mxu0 %v6057
    %v6213 = vpop.f32.mrf.mxu0
    %v6214 = vadd.f32 %v6200, %v6213
    %v6215 = vpop.f32.mrf.mxu0
    %v6216 = vadd.f32 %v6202, %v6215
    %6217 = vdwg.mxu0
    %6218 = vst.msk [vmem:[#allocation7] sm:$0xff] %vm133, %v6214
    %6219 = vst.msk [vmem:[#allocation7 + $0x8] sm:$0xff] %vm133, %v6216
    // Predicated region
    $region54: #{tpu_custom_call.1} parent=1 // pred_check
      _
    $region55: #{tpu_custom_call.1} parent=1 // pred_check_branch
      %6221 = sbr.rel (0) target = $region57
    $region56: #{tpu_custom_call.1} parent=1 // pred_region
      %6223 = vsyncadd [#allocation4], 0
      %s6224 = sshll.u32 [#allocation7], 4
      %s6225 = int_to_ptr.vmem [resolvable:$true] %s6224
      %s6226 = sshll.u32 %s11, 4
      %s6227 = int_to_ptr.hbm [resolvable:$true] %s6226
      %6232 = dma.vmem_to_hbm [thread:$0]  %s6225, 256, %s6227, [#allocation4], 128, 128, 8
    $region57: #{tpu_custom_call.1} parent=1 // pred_fallthru
      _
    // Predicated region
    $region58: #{tpu_custom_call.1} parent=1 // pred_check
      _
    $region59: #{tpu_custom_call.1} parent=1 // pred_check_branch
      %6234 = sbr.rel (0) target = $region61
    $region60: #{tpu_custom_call.1} parent=1 // pred_region
      %6236 = dma.done [#allocation4], 256
    $region61: #{tpu_custom_call.1} parent=1 // pred_fallthru
      _
    %6237 = vsyncpa [#allocation3], 1
    %6238 = vsyncpa [#allocation6], 1
    %6239 = vsyncpa [#allocation4], 1

</llo_original>
